<compile_context>
chip_gen: v5e
topology: v5e:2x2
jax: 0.10.0
libtpu: 0.0.40
codegen_flags: <defaults>
</compile_context>

<pallas_src>
import jax
import jax.numpy as jnp
from jax.experimental import pallas as pl
from jax.experimental.pallas import tpu as pltpu

# MXU operand dtype for all conv / FC matmuls (accumulation stays float32).
_MXU_DTYPE = jnp.bfloat16


def _ceil8(n):
    return ((n + 7) // 8) * 8


def _fold_bn(bias, gamma, beta, mean, var, eps):
    # eval-mode BN applied to (conv_out + bias):
    #   y = scale * conv_out + (beta + (bias - mean) * scale)
    scale = gamma / jnp.sqrt(var + eps)
    shift = beta + (bias - mean) * scale
    return (scale.reshape(1, -1).astype(jnp.float32),
            shift.reshape(1, -1).astype(jnp.float32))


def full_model_index_forward(p, t_in, t_gt, *, eps=1e-5, max_bblk=8):
    """loss = mse_loss(M5(t_in), t_gt), fully fused into one Pallas kernel."""
    B, c_in, L = t_in.shape
    if c_in != 1:
        raise ValueError("M5 first conv expects n_input == 1")
    if L % 16 != 0:
        raise ValueError("input length must be a multiple of the conv1 stride (16)")

    n_out = p["fc_w"].shape[1]
    C1, C2, C3, C4 = (p["w1"].shape[0], p["w2"].shape[0],
                      p["w3"].shape[0], p["w4"].shape[0])
    K1 = p["w1"].shape[2]                 # 80
    stride = 16
    taps = K1 // stride                   # 5

    # static stage lengths
    L1 = (L - K1) // stride + 1           # conv1 out
    P1 = L1 // 4                          # pool1
    L2 = P1 - 2                           # conv2 out
    P2 = L2 // 4                          # pool2
    L3 = P2 - 2                           # conv3 out
    P3 = L3 // 4                          # pool3
    L4 = P3 - 2                           # conv4 out
    P4 = L4 // 4                          # pool4
    if min(L1, P1, L2, P2, L3, P3, L4, P4) < 1:
        raise ValueError("input too short for M5's conv/pool chain")
    if L1 % 4 != 0:
        raise ValueError("conv1 output length must be a multiple of 4 for the "
                         "batch-stacked pooling layout")

    # ---- batch block per grid step (largest divisor of B that is <= max_bblk)
    bblk = 1
    for d in range(min(max_bblk, B), 0, -1):
        if B % d == 0:
            bblk = d
            break
    num_steps = B // bblk

    # ---- host-side layout: conv1 im2col (B*L1, 80), targets (steps, bblk, n_out)
    frames = t_in.reshape(B, L // stride, stride)
    xs = jnp.concatenate([frames[:, j:j + L1, :] for j in range(taps)], axis=-1)
    xs = xs.reshape(B * L1, K1).astype(_MXU_DTYPE)
    gt = t_gt.reshape(num_steps, bblk, n_out).astype(jnp.float32)

    # ---- weights: channel-last matmul layouts, conv bias folded into BN -------
    w1 = jnp.transpose(p["w1"].reshape(C1, K1)).astype(_MXU_DTYPE)   # (80, C1)
    w2 = jnp.transpose(p["w2"], (2, 1, 0)).astype(_MXU_DTYPE)        # (3, C1, C2)
    w3 = jnp.transpose(p["w3"], (2, 1, 0)).astype(_MXU_DTYPE)        # (3, C2, C3)
    w4 = jnp.transpose(p["w4"], (2, 1, 0)).astype(_MXU_DTYPE)        # (3, C3, C4)
    sc1, sh1 = _fold_bn(p["b1"], p["g1"], p["be1"], p["m1"], p["v1"], eps)
    sc2, sh2 = _fold_bn(p["b2"], p["g2"], p["be2"], p["m2"], p["v2"], eps)
    sc3, sh3 = _fold_bn(p["b3"], p["g3"], p["be3"], p["m3"], p["v3"], eps)
    sc4, sh4 = _fold_bn(p["b4"], p["g4"], p["be4"], p["m4"], p["v4"], eps)
    fcw = p["fc_w"].astype(_MXU_DTYPE)                               # (C4, n_out)
    fcb = p["fc_b"].reshape(1, n_out).astype(jnp.float32)

    inv_denom = 1.0 / float(B * n_out)   # MSE mean over all B*1*n_out elements

    # -----------------------------------------------------------------------
    # Kernel: bblk batch elements per grid step
    # -----------------------------------------------------------------------
    def kernel(x_ref, gt_ref,
               w1_ref, sc1_ref, sh1_ref,
               w2_ref, sc2_ref, sh2_ref,
               w3_ref, sc3_ref, sh3_ref,
               w4_ref, sc4_ref, sh4_ref,
               fcw_ref, fcb_ref,
               loss_ref,
               c1_ref, p1_ref, c2_ref, p2_ref, c3_ref, p3_ref, c4_ref, f_ref):
        f32 = jnp.float32

        # ---- conv1 (k=80, s=16) as ONE matmul over the whole batch block -----
        z1 = jnp.dot(x_ref[...], w1_ref[...], preferred_element_type=f32)
        c1_ref[...] = jnp.maximum(z1 * sc1_ref[...] + sh1_ref[...], 0.0)

        # ---- pool1: 4 sublane-strided reads + max (no one-hot matmul) --------
        m = c1_ref[pl.ds(0, bblk * P1, stride=4), :]
        for k in range(1, 4):
            m = jnp.maximum(m, c1_ref[pl.ds(k, bblk * P1, stride=4), :])
        p1_ref[...] = m

        # broadcasts hoisted out of the per-element loop
        sc2b = jnp.broadcast_to(sc2_ref[...], (L2, C2))
        sh2b = jnp.broadcast_to(sh2_ref[...], (L2, C2))
        sc3b = jnp.broadcast_to(sc3_ref[...], (L3, C3))
        sh3b = jnp.broadcast_to(sh3_ref[...], (L3, C3))
        sc4b = jnp.broadcast_to(sc4_ref[...], (L4, C4))
        sh4b = jnp.broadcast_to(sh4_ref[...], (L4, C4))

        def conv3tap(src_ref, base, lo, w_ref, scb, shb):
            # valid k=3 conv: 3 shifted ref-sliced windows + folded BN + ReLU
            z = jnp.dot(src_ref[pl.ds(base, lo), :].astype(_MXU_DTYPE), w_ref[0],
                        preferred_element_type=f32)
            for j in range(1, 3):
                z = z + jnp.dot(src_ref[pl.ds(base + j, lo), :].astype(_MXU_DTYPE),
                                w_ref[j], preferred_element_type=f32)
            return jnp.maximum(z * scb + shb, 0.0)

        def pool4x(src_ref, pout):
            # MaxPool1d(4) (floor) via 4 strided reads of the staged activation
            m = src_ref[pl.ds(0, pout, stride=4), :]
            for k in range(1, 4):
                m = jnp.maximum(m, src_ref[pl.ds(k, pout, stride=4), :])
            return m

        # ---- conv2..4 + pools per batch element (tiny tail stages) -----------
        for b in range(bblk):
            h2 = conv3tap(p1_ref, b * P1, L2, w2_ref, sc2b, sh2b)    # (L2, C2)
            c2_ref[0:L2, :] = h2
            p2_ref[0:P2, :] = pool4x(c2_ref, P2)

            h3 = conv3tap(p2_ref, 0, L3, w3_ref, sc3b, sh3b)         # (L3, C3)
            c3_ref[0:L3, :] = h3
            p3_ref[0:P3, :] = pool4x(c3_ref, P3)

            h4 = conv3tap(p3_ref, 0, L4, w4_ref, sc4b, sh4b)         # (L4, C4)
            c4_ref[0:L4, :] = h4
            # global average pool over the remaining frames -> one feature row
            f_ref[pl.ds(b, 1), :] = jnp.mean(pool4x(c4_ref, P4), axis=0,
                                             keepdims=True)

        # ---- FC + log_softmax + MSE, once over the stacked (bblk, C4) feats ---
        logits = jnp.dot(f_ref[0:bblk, :].astype(_MXU_DTYPE), fcw_ref[...],
                         preferred_element_type=f32) + fcb_ref[...]
        mx = jnp.max(logits, axis=-1, keepdims=True)
        lse = jnp.log(jnp.sum(jnp.exp(logits - mx), axis=-1, keepdims=True)) + mx
        logp = logits - lse                                           # (bblk, n_out)
        d = logp - gt_ref[0]
        loss_ref[0, 0] = jnp.sum(d * d) * f32(inv_denom)

    # -----------------------------------------------------------------------
    # Specs, scratch, cost estimate
    # -----------------------------------------------------------------------
    def _const(a):
        return pl.BlockSpec(a.shape, lambda i, nd=a.ndim: (0,) * nd)

    in_specs = [
        pl.BlockSpec((bblk * L1, K1), lambda i: (i, 0)),       # im2col'd waveform
        pl.BlockSpec((1, bblk, n_out), lambda i: (i, 0, 0)),   # targets
        _const(w1), _const(sc1), _const(sh1),
        _const(w2), _const(sc2), _const(sh2),
        _const(w3), _const(sc3), _const(sh3),
        _const(w4), _const(sc4), _const(sh4),
        _const(fcw), _const(fcb),
    ]

    scratch_shapes = [
        pltpu.VMEM((bblk * L1, C1), jnp.float32),     # conv1 out (pre-pool)
        pltpu.VMEM((bblk * P1, C1), jnp.float32),     # pool1 out
        pltpu.VMEM((_ceil8(L2), C2), jnp.float32),    # conv2 out staging
        pltpu.VMEM((_ceil8(P2), C2), jnp.float32),    # pool2 out staging
        pltpu.VMEM((_ceil8(L3), C3), jnp.float32),    # conv3 out staging
        pltpu.VMEM((_ceil8(P3), C3), jnp.float32),    # pool3 out staging
        pltpu.VMEM((_ceil8(L4), C4), jnp.float32),    # conv4 out staging
        pltpu.VMEM((_ceil8(bblk), C4), jnp.float32),  # pooled features
    ]

    flops = 2 * B * (L1 * K1 * C1 + L2 * 3 * C1 * C2 + L3 * 3 * C2 * C3
                     + L4 * 3 * C3 * C4 + C4 * n_out)
    bytes_accessed = (int(xs.size) * xs.dtype.itemsize
                      + int(gt.size) * 4
                      + sum(int(a.size) * a.dtype.itemsize
                            for a in (w1, w2, w3, w4, fcw))
                      + num_steps * 4)
    cost = pl.CostEstimate(flops=int(flops),
                           transcendentals=int(B * (n_out + 1)),
                           bytes_accessed=int(bytes_accessed))

    partials = pl.pallas_call(
        kernel,
        out_shape=jax.ShapeDtypeStruct((num_steps, 1), jnp.float32),
        grid=(num_steps,),
        in_specs=in_specs,
        out_specs=pl.BlockSpec((1, 1), lambda i: (i, 0),
                               memory_space=pltpu.MemorySpace.SMEM),
        scratch_shapes=scratch_shapes,
        compiler_params=pltpu.CompilerParams(
            dimension_semantics=("parallel",)),
        cost_estimate=cost,
    )(xs, gt, w1, sc1, sh1, w2, sc2, sh2, w3, sc3, sh3, w4, sc4, sh4, fcw, fcb)

    return jnp.sum(partials)


# ---------------------------------------------------------------------------
# Deterministic parameter init (torch-style uniform fan-in for conv/linear,
# BN: gamma=1, beta=0, running_mean=0, running_var=1)
# ---------------------------------------------------------------------------

def init_params(key, n_input=1, n_channel=32, n_output=35):
    def conv_init(k, c_out, c_in, ksz):
        bound = 1.0 / jnp.sqrt(jnp.float32(c_in * ksz))
        kw, kb = jax.random.split(k)
        w = jax.random.uniform(kw, (c_out, c_in, ksz), jnp.float32, -bound, bound)
        b = jax.random.uniform(kb, (c_out,), jnp.float32, -bound, bound)
        return w, b

    def bn_init(c):
        return (jnp.ones((c,), jnp.float32), jnp.zeros((c,), jnp.float32),
                jnp.zeros((c,), jnp.float32), jnp.ones((c,), jnp.float32))

    keys = jax.random.split(key, 6)
    p = {}
    p["w1"], p["b1"] = conv_init(keys[0], n_channel, n_input, 80)
    p["g1"], p["be1"], p["m1"], p["v1"] = bn_init(n_channel)
    p["w2"], p["b2"] = conv_init(keys[1], n_channel, n_channel, 3)
    p["g2"], p["be2"], p["m2"], p["v2"] = bn_init(n_channel)
    p["w3"], p["b3"] = conv_init(keys[2], 2 * n_channel, n_channel, 3)
    p["g3"], p["be3"], p["m3"], p["v3"] = bn_init(2 * n_channel)
    p["w4"], p["b4"] = conv_init(keys[3], 2 * n_channel, 2 * n_channel, 3)
    p["g4"], p["be4"], p["m4"], p["v4"] = bn_init(2 * n_channel)
    fbound = 1.0 / jnp.sqrt(jnp.float32(2 * n_channel))
    p["fc_w"] = jax.random.uniform(keys[4], (2 * n_channel, n_output), jnp.float32,
                                   -fbound, fbound)      # (in, out) = torch weight.T
    p["fc_b"] = jax.random.uniform(keys[5], (n_output,), jnp.float32, -fbound, fbound)
    return p


# ---------------------------------------------------------------------------

if __name__ == "__main__":
    key = jax.random.PRNGKey(0)
    k_param, k_in, k_gt = jax.random.split(key, 3)

    B, C_IN, L, N_OUT = 2, 1, 8000, 35        # natural M5 waveform length (8 kHz)
    params = init_params(k_param, n_input=C_IN, n_channel=32, n_output=N_OUT)

    t_in = jax.random.normal(k_in, (B, C_IN, L), jnp.float32)     # NCW, like torch conv1d
    t_gt = jax.random.normal(k_gt, (B, 1, N_OUT), jnp.float32)    # same shape as M5 output

    loss = jax.jit(full_model_index_forward)(params, t_in, t_gt)
    jax.block_until_ready(loss)
    assert loss.shape == () and bool(jnp.isfinite(loss))
    print("KERNEL_OK")
</pallas_src>

<mosaic_0001>
module attributes {stable_mosaic.version = 11 : i64} {
  func.func @kernel(%arg0: i32, %arg1: memref<992x80xbf16, #tpu.memory_space<vmem>>, %arg2: memref<1x2x35xf32, #tpu.memory_space<vmem>>, %arg3: memref<80x32xbf16, #tpu.memory_space<vmem>>, %arg4: memref<1x32xf32, #tpu.memory_space<vmem>>, %arg5: memref<1x32xf32, #tpu.memory_space<vmem>>, %arg6: memref<3x32x32xbf16, #tpu.memory_space<vmem>>, %arg7: memref<1x32xf32, #tpu.memory_space<vmem>>, %arg8: memref<1x32xf32, #tpu.memory_space<vmem>>, %arg9: memref<3x32x64xbf16, #tpu.memory_space<vmem>>, %arg10: memref<1x64xf32, #tpu.memory_space<vmem>>, %arg11: memref<1x64xf32, #tpu.memory_space<vmem>>, %arg12: memref<3x64x64xbf16, #tpu.memory_space<vmem>>, %arg13: memref<1x64xf32, #tpu.memory_space<vmem>>, %arg14: memref<1x64xf32, #tpu.memory_space<vmem>>, %arg15: memref<64x35xbf16, #tpu.memory_space<vmem>>, %arg16: memref<1x35xf32, #tpu.memory_space<vmem>>, %arg17: memref<1x1xf32, #tpu.memory_space<smem>>, %arg18: memref<992x32xf32, #tpu.memory_space<vmem>>, %arg19: memref<248x32xf32, #tpu.memory_space<vmem>>, %arg20: memref<128x32xf32, #tpu.memory_space<vmem>>, %arg21: memref<32x32xf32, #tpu.memory_space<vmem>>, %arg22: memref<32x64xf32, #tpu.memory_space<vmem>>, %arg23: memref<8x64xf32, #tpu.memory_space<vmem>>, %arg24: memref<8x64xf32, #tpu.memory_space<vmem>>, %arg25: memref<8x64xf32, #tpu.memory_space<vmem>>) attributes {dimension_semantics = [#tpu.dimension_semantics<parallel>], iteration_bounds = array<i64: 1>, scalar_prefetch = 0 : i64, scratch_operands = 8 : i64, tpu.core_type = #tpu.core_type<tc>, window_params = [{transform_indices = @transform_0, window_bounds = array<i64: 992, 80>}, {transform_indices = @transform_1, window_bounds = array<i64: 1, 2, 35>}, {pipeline_mode = #tpu.pipeline_mode<synchronous>, transform_indices = @transform_2, window_bounds = array<i64: 80, 32>}, {pipeline_mode = #tpu.pipeline_mode<synchronous>, transform_indices = @transform_3, window_bounds = array<i64: 1, 32>}, {pipeline_mode = #tpu.pipeline_mode<synchronous>, transform_indices = @transform_4, window_bounds = array<i64: 1, 32>}, {pipeline_mode = #tpu.pipeline_mode<synchronous>, transform_indices = @transform_5, window_bounds = array<i64: 3, 32, 32>}, {pipeline_mode = #tpu.pipeline_mode<synchronous>, transform_indices = @transform_6, window_bounds = array<i64: 1, 32>}, {pipeline_mode = #tpu.pipeline_mode<synchronous>, transform_indices = @transform_7, window_bounds = array<i64: 1, 32>}, {pipeline_mode = #tpu.pipeline_mode<synchronous>, transform_indices = @transform_8, window_bounds = array<i64: 3, 32, 64>}, {pipeline_mode = #tpu.pipeline_mode<synchronous>, transform_indices = @transform_9, window_bounds = array<i64: 1, 64>}, {pipeline_mode = #tpu.pipeline_mode<synchronous>, transform_indices = @transform_10, window_bounds = array<i64: 1, 64>}, {pipeline_mode = #tpu.pipeline_mode<synchronous>, transform_indices = @transform_11, window_bounds = array<i64: 3, 64, 64>}, {pipeline_mode = #tpu.pipeline_mode<synchronous>, transform_indices = @transform_12, window_bounds = array<i64: 1, 64>}, {pipeline_mode = #tpu.pipeline_mode<synchronous>, transform_indices = @transform_13, window_bounds = array<i64: 1, 64>}, {pipeline_mode = #tpu.pipeline_mode<synchronous>, transform_indices = @transform_14, window_bounds = array<i64: 64, 35>}, {pipeline_mode = #tpu.pipeline_mode<synchronous>, transform_indices = @transform_15, window_bounds = array<i64: 1, 35>}, {transform_indices = @transform_16, window_bounds = array<i64: 1, 1>}]} {
    %c0 = arith.constant 0 : index
    %c0_0 = arith.constant 0 : index
    %0 = vector.load %arg1[%c0, %c0_0] : memref<992x80xbf16, #tpu.memory_space<vmem>>, vector<992x80xbf16>
    %c0_1 = arith.constant 0 : index
    %c0_2 = arith.constant 0 : index
    %1 = vector.load %arg3[%c0_1, %c0_2] : memref<80x32xbf16, #tpu.memory_space<vmem>>, vector<80x32xbf16>
    %cst = arith.constant dense<0.000000e+00> : vector<992x32xf32>
    %2 = tpu.matmul %0, %1, %cst {dimension_numbers = #tpu.dot_dimension_numbers<[1], [0], [0], [1], [0, 0, 1, 1], [], []>} : vector<992x80xbf16>, vector<80x32xbf16>, vector<992x32xf32> -> vector<992x32xf32>
    %c0_3 = arith.constant 0 : index
    %c0_4 = arith.constant 0 : index
    %3 = vector.load %arg4[%c0_3, %c0_4] : memref<1x32xf32, #tpu.memory_space<vmem>>, vector<1x32xf32>
    %4 = vector.broadcast %3 : vector<1x32xf32> to vector<992x32xf32>
    %5 = arith.mulf %2, %4 : vector<992x32xf32>
    %c0_5 = arith.constant 0 : index
    %c0_6 = arith.constant 0 : index
    %6 = vector.load %arg5[%c0_5, %c0_6] : memref<1x32xf32, #tpu.memory_space<vmem>>, vector<1x32xf32>
    %7 = vector.broadcast %6 : vector<1x32xf32> to vector<992x32xf32>
    %8 = arith.addf %5, %7 : vector<992x32xf32>
    %cst_7 = arith.constant 0.000000e+00 : f32
    %9 = vector.broadcast %cst_7 : f32 to vector<992x32xf32>
    %10 = arith.maximumf %8, %9 : vector<992x32xf32>
    %c0_8 = arith.constant 0 : index
    %c0_9 = arith.constant 0 : index
    %11 = vector.load %arg18[%c0_8, %c0_9] : memref<992x32xf32, #tpu.memory_space<vmem>>, vector<992x32xf32>
    tpu.vector_store %arg18[%c0_8, %c0_9], %10 {strides = array<i32>} : memref<992x32xf32, #tpu.memory_space<vmem>>, vector<992x32xf32>,
    %c0_10 = arith.constant 0 : index
    %c0_11 = arith.constant 0 : index
    %12 = tpu.strided_load %arg18[%c0_10, %c0_11] {strides = array<i32: 4, 1>} : memref<992x32xf32, #tpu.memory_space<vmem>>, vector<248x32xf32>
    %c1 = arith.constant 1 : index
    %c0_12 = arith.constant 0 : index
    %13 = tpu.strided_load %arg18[%c1, %c0_12] {strides = array<i32: 4, 1>} : memref<992x32xf32, #tpu.memory_space<vmem>>, vector<248x32xf32>
    %14 = arith.maximumf %12, %13 : vector<248x32xf32>
    %c2 = arith.constant 2 : index
    %c0_13 = arith.constant 0 : index
    %15 = tpu.strided_load %arg18[%c2, %c0_13] {strides = array<i32: 4, 1>} : memref<992x32xf32, #tpu.memory_space<vmem>>, vector<248x32xf32>
    %16 = arith.maximumf %14, %15 : vector<248x32xf32>
    %c3 = arith.constant 3 : index
    %c0_14 = arith.constant 0 : index
    %17 = tpu.strided_load %arg18[%c3, %c0_14] {strides = array<i32: 4, 1>} : memref<992x32xf32, #tpu.memory_space<vmem>>, vector<248x32xf32>
    %18 = arith.maximumf %16, %17 : vector<248x32xf32>
    %c0_15 = arith.constant 0 : index
    %c0_16 = arith.constant 0 : index
    %19 = vector.load %arg19[%c0_15, %c0_16] : memref<248x32xf32, #tpu.memory_space<vmem>>, vector<248x32xf32>
    tpu.vector_store %arg19[%c0_15, %c0_16], %18 {strides = array<i32>} : memref<248x32xf32, #tpu.memory_space<vmem>>, vector<248x32xf32>,
    %c0_17 = arith.constant 0 : index
    %c0_18 = arith.constant 0 : index
    %20 = vector.load %arg7[%c0_17, %c0_18] : memref<1x32xf32, #tpu.memory_space<vmem>>, vector<1x32xf32>
    %21 = vector.shape_cast %20 : vector<1x32xf32> to vector<1x32xf32>
    %22 = vector.broadcast %21 : vector<1x32xf32> to vector<122x32xf32>
    %c0_19 = arith.constant 0 : index
    %c0_20 = arith.constant 0 : index
    %23 = vector.load %arg8[%c0_19, %c0_20] : memref<1x32xf32, #tpu.memory_space<vmem>>, vector<1x32xf32>
    %24 = vector.shape_cast %23 : vector<1x32xf32> to vector<1x32xf32>
    %25 = vector.broadcast %24 : vector<1x32xf32> to vector<122x32xf32>
    %c0_21 = arith.constant 0 : index
    %c0_22 = arith.constant 0 : index
    %26 = vector.load %arg10[%c0_21, %c0_22] : memref<1x64xf32, #tpu.memory_space<vmem>>, vector<1x64xf32>
    %27 = vector.shape_cast %26 : vector<1x64xf32> to vector<1x64xf32>
    %28 = vector.broadcast %27 : vector<1x64xf32> to vector<28x64xf32>
    %c0_23 = arith.constant 0 : index
    %c0_24 = arith.constant 0 : index
    %29 = vector.load %arg11[%c0_23, %c0_24] : memref<1x64xf32, #tpu.memory_space<vmem>>, vector<1x64xf32>
    %30 = vector.shape_cast %29 : vector<1x64xf32> to vector<1x64xf32>
    %31 = vector.broadcast %30 : vector<1x64xf32> to vector<28x64xf32>
    %c0_25 = arith.constant 0 : index
    %c0_26 = arith.constant 0 : index
    %32 = vector.load %arg13[%c0_25, %c0_26] : memref<1x64xf32, #tpu.memory_space<vmem>>, vector<1x64xf32>
    %33 = vector.shape_cast %32 : vector<1x64xf32> to vector<1x64xf32>
    %34 = vector.broadcast %33 : vector<1x64xf32> to vector<5x64xf32>
    %c0_27 = arith.constant 0 : index
    %c0_28 = arith.constant 0 : index
    %35 = vector.load %arg14[%c0_27, %c0_28] : memref<1x64xf32, #tpu.memory_space<vmem>>, vector<1x64xf32>
    %36 = vector.shape_cast %35 : vector<1x64xf32> to vector<1x64xf32>
    %37 = vector.broadcast %36 : vector<1x64xf32> to vector<5x64xf32>
    %c0_29 = arith.constant 0 : index
    %c0_30 = arith.constant 0 : index
    %38 = vector.load %arg19[%c0_29, %c0_30] : memref<248x32xf32, #tpu.memory_space<vmem>>, vector<122x32xf32>
    %39 = arith.truncf %38 : vector<122x32xf32> to vector<122x32xbf16>
    %c0_31 = arith.constant 0 : index
    %c0_32 = arith.constant 0 : index
    %c0_33 = arith.constant 0 : index
    %40 = vector.load %arg6[%c0_31, %c0_32, %c0_33] : memref<3x32x32xbf16, #tpu.memory_space<vmem>>, vector<1x32x32xbf16>
    %41 = vector.shape_cast %40 : vector<1x32x32xbf16> to vector<32x32xbf16>
    %cst_34 = arith.constant dense<0.000000e+00> : vector<122x32xf32>
    %42 = tpu.matmul %39, %41, %cst_34 {dimension_numbers = #tpu.dot_dimension_numbers<[1], [0], [0], [1], [0, 0, 1, 1], [], []>} : vector<122x32xbf16>, vector<32x32xbf16>, vector<122x32xf32> -> vector<122x32xf32>
    %c1_35 = arith.constant 1 : index
    %c0_36 = arith.constant 0 : index
    %43 = vector.load %arg19[%c1_35, %c0_36] : memref<248x32xf32, #tpu.memory_space<vmem>>, vector<122x32xf32>
    %44 = arith.truncf %43 : vector<122x32xf32> to vector<122x32xbf16>
    %c1_37 = arith.constant 1 : index
    %c0_38 = arith.constant 0 : index
    %c0_39 = arith.constant 0 : index
    %45 = vector.load %arg6[%c1_37, %c0_38, %c0_39] : memref<3x32x32xbf16, #tpu.memory_space<vmem>>, vector<1x32x32xbf16>
    %46 = vector.shape_cast %45 : vector<1x32x32xbf16> to vector<32x32xbf16>
    %cst_40 = arith.constant dense<0.000000e+00> : vector<122x32xf32>
    %47 = tpu.matmul %44, %46, %cst_40 {dimension_numbers = #tpu.dot_dimension_numbers<[1], [0], [0], [1], [0, 0, 1, 1], [], []>} : vector<122x32xbf16>, vector<32x32xbf16>, vector<122x32xf32> -> vector<122x32xf32>
    %48 = arith.addf %42, %47 : vector<122x32xf32>
    %c2_41 = arith.constant 2 : index
    %c0_42 = arith.constant 0 : index
    %49 = vector.load %arg19[%c2_41, %c0_42] : memref<248x32xf32, #tpu.memory_space<vmem>>, vector<122x32xf32>
    %50 = arith.truncf %49 : vector<122x32xf32> to vector<122x32xbf16>
    %c2_43 = arith.constant 2 : index
    %c0_44 = arith.constant 0 : index
    %c0_45 = arith.constant 0 : index
    %51 = vector.load %arg6[%c2_43, %c0_44, %c0_45] : memref<3x32x32xbf16, #tpu.memory_space<vmem>>, vector<1x32x32xbf16>
    %52 = vector.shape_cast %51 : vector<1x32x32xbf16> to vector<32x32xbf16>
    %cst_46 = arith.constant dense<0.000000e+00> : vector<122x32xf32>
    %53 = tpu.matmul %50, %52, %cst_46 {dimension_numbers = #tpu.dot_dimension_numbers<[1], [0], [0], [1], [0, 0, 1, 1], [], []>} : vector<122x32xbf16>, vector<32x32xbf16>, vector<122x32xf32> -> vector<122x32xf32>
    %54 = arith.addf %48, %53 : vector<122x32xf32>
    %55 = arith.mulf %54, %22 : vector<122x32xf32>
    %56 = arith.addf %55, %25 : vector<122x32xf32>
    %cst_47 = arith.constant 0.000000e+00 : f32
    %57 = vector.broadcast %cst_47 : f32 to vector<122x32xf32>
    %58 = arith.maximumf %56, %57 : vector<122x32xf32>
    %c0_48 = arith.constant 0 : index
    %c0_49 = arith.constant 0 : index
    %59 = vector.load %arg20[%c0_48, %c0_49] : memref<128x32xf32, #tpu.memory_space<vmem>>, vector<122x32xf32>
    tpu.vector_store %arg20[%c0_48, %c0_49], %58 {strides = array<i32>} : memref<128x32xf32, #tpu.memory_space<vmem>>, vector<122x32xf32>,
    %c0_50 = arith.constant 0 : index
    %c0_51 = arith.constant 0 : index
    %60 = tpu.strided_load %arg20[%c0_50, %c0_51] {strides = array<i32: 4, 1>} : memref<128x32xf32, #tpu.memory_space<vmem>>, vector<30x32xf32>
    %c1_52 = arith.constant 1 : index
    %c0_53 = arith.constant 0 : index
    %61 = tpu.strided_load %arg20[%c1_52, %c0_53] {strides = array<i32: 4, 1>} : memref<128x32xf32, #tpu.memory_space<vmem>>, vector<30x32xf32>
    %62 = arith.maximumf %60, %61 : vector<30x32xf32>
    %c2_54 = arith.constant 2 : index
    %c0_55 = arith.constant 0 : index
    %63 = tpu.strided_load %arg20[%c2_54, %c0_55] {strides = array<i32: 4, 1>} : memref<128x32xf32, #tpu.memory_space<vmem>>, vector<30x32xf32>
    %64 = arith.maximumf %62, %63 : vector<30x32xf32>
    %c3_56 = arith.constant 3 : index
    %c0_57 = arith.constant 0 : index
    %65 = tpu.strided_load %arg20[%c3_56, %c0_57] {strides = array<i32: 4, 1>} : memref<128x32xf32, #tpu.memory_space<vmem>>, vector<30x32xf32>
    %66 = arith.maximumf %64, %65 : vector<30x32xf32>
    %c0_58 = arith.constant 0 : index
    %c0_59 = arith.constant 0 : index
    %67 = vector.load %arg21[%c0_58, %c0_59] : memref<32x32xf32, #tpu.memory_space<vmem>>, vector<30x32xf32>
    tpu.vector_store %arg21[%c0_58, %c0_59], %66 {strides = array<i32>} : memref<32x32xf32, #tpu.memory_space<vmem>>, vector<30x32xf32>,
    %c0_60 = arith.constant 0 : index
    %c0_61 = arith.constant 0 : index
    %68 = vector.load %arg21[%c0_60, %c0_61] : memref<32x32xf32, #tpu.memory_space<vmem>>, vector<28x32xf32>
    %69 = arith.truncf %68 : vector<28x32xf32> to vector<28x32xbf16>
    %c0_62 = arith.constant 0 : index
    %c0_63 = arith.constant 0 : index
    %c0_64 = arith.constant 0 : index
    %70 = vector.load %arg9[%c0_62, %c0_63, %c0_64] : memref<3x32x64xbf16, #tpu.memory_space<vmem>>, vector<1x32x64xbf16>
    %71 = vector.shape_cast %70 : vector<1x32x64xbf16> to vector<32x64xbf16>
    %cst_65 = arith.constant dense<0.000000e+00> : vector<28x64xf32>
    %72 = tpu.matmul %69, %71, %cst_65 {dimension_numbers = #tpu.dot_dimension_numbers<[1], [0], [0], [1], [0, 0, 1, 1], [], []>} : vector<28x32xbf16>, vector<32x64xbf16>, vector<28x64xf32> -> vector<28x64xf32>
    %c1_66 = arith.constant 1 : index
    %c0_67 = arith.constant 0 : index
    %73 = vector.load %arg21[%c1_66, %c0_67] : memref<32x32xf32, #tpu.memory_space<vmem>>, vector<28x32xf32>
    %74 = arith.truncf %73 : vector<28x32xf32> to vector<28x32xbf16>
    %c1_68 = arith.constant 1 : index
    %c0_69 = arith.constant 0 : index
    %c0_70 = arith.constant 0 : index
    %75 = vector.load %arg9[%c1_68, %c0_69, %c0_70] : memref<3x32x64xbf16, #tpu.memory_space<vmem>>, vector<1x32x64xbf16>
    %76 = vector.shape_cast %75 : vector<1x32x64xbf16> to vector<32x64xbf16>
    %cst_71 = arith.constant dense<0.000000e+00> : vector<28x64xf32>
    %77 = tpu.matmul %74, %76, %cst_71 {dimension_numbers = #tpu.dot_dimension_numbers<[1], [0], [0], [1], [0, 0, 1, 1], [], []>} : vector<28x32xbf16>, vector<32x64xbf16>, vector<28x64xf32> -> vector<28x64xf32>
    %78 = arith.addf %72, %77 : vector<28x64xf32>
    %c2_72 = arith.constant 2 : index
    %c0_73 = arith.constant 0 : index
    %79 = vector.load %arg21[%c2_72, %c0_73] : memref<32x32xf32, #tpu.memory_space<vmem>>, vector<28x32xf32>
    %80 = arith.truncf %79 : vector<28x32xf32> to vector<28x32xbf16>
    %c2_74 = arith.constant 2 : index
    %c0_75 = arith.constant 0 : index
    %c0_76 = arith.constant 0 : index
    %81 = vector.load %arg9[%c2_74, %c0_75, %c0_76] : memref<3x32x64xbf16, #tpu.memory_space<vmem>>, vector<1x32x64xbf16>
    %82 = vector.shape_cast %81 : vector<1x32x64xbf16> to vector<32x64xbf16>
    %cst_77 = arith.constant dense<0.000000e+00> : vector<28x64xf32>
    %83 = tpu.matmul %80, %82, %cst_77 {dimension_numbers = #tpu.dot_dimension_numbers<[1], [0], [0], [1], [0, 0, 1, 1], [], []>} : vector<28x32xbf16>, vector<32x64xbf16>, vector<28x64xf32> -> vector<28x64xf32>
    %84 = arith.addf %78, %83 : vector<28x64xf32>
    %85 = arith.mulf %84, %28 : vector<28x64xf32>
    %86 = arith.addf %85, %31 : vector<28x64xf32>
    %cst_78 = arith.constant 0.000000e+00 : f32
    %87 = vector.broadcast %cst_78 : f32 to vector<28x64xf32>
    %88 = arith.maximumf %86, %87 : vector<28x64xf32>
    %c0_79 = arith.constant 0 : index
    %c0_80 = arith.constant 0 : index
    %89 = vector.load %arg22[%c0_79, %c0_80] : memref<32x64xf32, #tpu.memory_space<vmem>>, vector<28x64xf32>
    tpu.vector_store %arg22[%c0_79, %c0_80], %88 {strides = array<i32>} : memref<32x64xf32, #tpu.memory_space<vmem>>, vector<28x64xf32>,
    %c0_81 = arith.constant 0 : index
    %c0_82 = arith.constant 0 : index
    %90 = tpu.strided_load %arg22[%c0_81, %c0_82] {strides = array<i32: 4, 1>} : memref<32x64xf32, #tpu.memory_space<vmem>>, vector<7x64xf32>
    %c1_83 = arith.constant 1 : index
    %c0_84 = arith.constant 0 : index
    %91 = tpu.strided_load %arg22[%c1_83, %c0_84] {strides = array<i32: 4, 1>} : memref<32x64xf32, #tpu.memory_space<vmem>>, vector<7x64xf32>
    %92 = arith.maximumf %90, %91 : vector<7x64xf32>
    %c2_85 = arith.constant 2 : index
    %c0_86 = arith.constant 0 : index
    %93 = tpu.strided_load %arg22[%c2_85, %c0_86] {strides = array<i32: 4, 1>} : memref<32x64xf32, #tpu.memory_space<vmem>>, vector<7x64xf32>
    %94 = arith.maximumf %92, %93 : vector<7x64xf32>
    %c3_87 = arith.constant 3 : index
    %c0_88 = arith.constant 0 : index
    %95 = tpu.strided_load %arg22[%c3_87, %c0_88] {strides = array<i32: 4, 1>} : memref<32x64xf32, #tpu.memory_space<vmem>>, vector<7x64xf32>
    %96 = arith.maximumf %94, %95 : vector<7x64xf32>
    %c0_89 = arith.constant 0 : index
    %c0_90 = arith.constant 0 : index
    %97 = vector.load %arg23[%c0_89, %c0_90] : memref<8x64xf32, #tpu.memory_space<vmem>>, vector<7x64xf32>
    tpu.vector_store %arg23[%c0_89, %c0_90], %96 {strides = array<i32>} : memref<8x64xf32, #tpu.memory_space<vmem>>, vector<7x64xf32>,
    %c0_91 = arith.constant 0 : index
    %c0_92 = arith.constant 0 : index
    %98 = vector.load %arg23[%c0_91, %c0_92] : memref<8x64xf32, #tpu.memory_space<vmem>>, vector<5x64xf32>
    %99 = arith.truncf %98 : vector<5x64xf32> to vector<5x64xbf16>
    %c0_93 = arith.constant 0 : index
    %c0_94 = arith.constant 0 : index
    %c0_95 = arith.constant 0 : index
    %100 = vector.load %arg12[%c0_93, %c0_94, %c0_95] : memref<3x64x64xbf16, #tpu.memory_space<vmem>>, vector<1x64x64xbf16>
    %101 = vector.shape_cast %100 : vector<1x64x64xbf16> to vector<64x64xbf16>
    %cst_96 = arith.constant dense<0.000000e+00> : vector<5x64xf32>
    %102 = tpu.matmul %99, %101, %cst_96 {dimension_numbers = #tpu.dot_dimension_numbers<[1], [0], [0], [1], [0, 0, 1, 1], [], []>} : vector<5x64xbf16>, vector<64x64xbf16>, vector<5x64xf32> -> vector<5x64xf32>
    %c1_97 = arith.constant 1 : index
    %c0_98 = arith.constant 0 : index
    %103 = vector.load %arg23[%c1_97, %c0_98] : memref<8x64xf32, #tpu.memory_space<vmem>>, vector<5x64xf32>
    %104 = arith.truncf %103 : vector<5x64xf32> to vector<5x64xbf16>
    %c1_99 = arith.constant 1 : index
    %c0_100 = arith.constant 0 : index
    %c0_101 = arith.constant 0 : index
    %105 = vector.load %arg12[%c1_99, %c0_100, %c0_101] : memref<3x64x64xbf16, #tpu.memory_space<vmem>>, vector<1x64x64xbf16>
    %106 = vector.shape_cast %105 : vector<1x64x64xbf16> to vector<64x64xbf16>
    %cst_102 = arith.constant dense<0.000000e+00> : vector<5x64xf32>
    %107 = tpu.matmul %104, %106, %cst_102 {dimension_numbers = #tpu.dot_dimension_numbers<[1], [0], [0], [1], [0, 0, 1, 1], [], []>} : vector<5x64xbf16>, vector<64x64xbf16>, vector<5x64xf32> -> vector<5x64xf32>
    %108 = arith.addf %102, %107 : vector<5x64xf32>
    %c2_103 = arith.constant 2 : index
    %c0_104 = arith.constant 0 : index
    %109 = vector.load %arg23[%c2_103, %c0_104] : memref<8x64xf32, #tpu.memory_space<vmem>>, vector<5x64xf32>
    %110 = arith.truncf %109 : vector<5x64xf32> to vector<5x64xbf16>
    %c2_105 = arith.constant 2 : index
    %c0_106 = arith.constant 0 : index
    %c0_107 = arith.constant 0 : index
    %111 = vector.load %arg12[%c2_105, %c0_106, %c0_107] : memref<3x64x64xbf16, #tpu.memory_space<vmem>>, vector<1x64x64xbf16>
    %112 = vector.shape_cast %111 : vector<1x64x64xbf16> to vector<64x64xbf16>
    %cst_108 = arith.constant dense<0.000000e+00> : vector<5x64xf32>
    %113 = tpu.matmul %110, %112, %cst_108 {dimension_numbers = #tpu.dot_dimension_numbers<[1], [0], [0], [1], [0, 0, 1, 1], [], []>} : vector<5x64xbf16>, vector<64x64xbf16>, vector<5x64xf32> -> vector<5x64xf32>
    %114 = arith.addf %108, %113 : vector<5x64xf32>
    %115 = arith.mulf %114, %34 : vector<5x64xf32>
    %116 = arith.addf %115, %37 : vector<5x64xf32>
    %cst_109 = arith.constant 0.000000e+00 : f32
    %117 = vector.broadcast %cst_109 : f32 to vector<5x64xf32>
    %118 = arith.maximumf %116, %117 : vector<5x64xf32>
    %c0_110 = arith.constant 0 : index
    %c0_111 = arith.constant 0 : index
    %119 = vector.load %arg24[%c0_110, %c0_111] : memref<8x64xf32, #tpu.memory_space<vmem>>, vector<5x64xf32>
    tpu.vector_store %arg24[%c0_110, %c0_111], %118 {strides = array<i32>} : memref<8x64xf32, #tpu.memory_space<vmem>>, vector<5x64xf32>,
    %c0_112 = arith.constant 0 : index
    %c0_113 = arith.constant 0 : index
    %120 = tpu.strided_load %arg24[%c0_112, %c0_113] {strides = array<i32: 4, 1>} : memref<8x64xf32, #tpu.memory_space<vmem>>, vector<1x64xf32>
    %c1_114 = arith.constant 1 : index
    %c0_115 = arith.constant 0 : index
    %121 = tpu.strided_load %arg24[%c1_114, %c0_115] {strides = array<i32: 4, 1>} : memref<8x64xf32, #tpu.memory_space<vmem>>, vector<1x64xf32>
    %122 = arith.maximumf %120, %121 : vector<1x64xf32>
    %c2_116 = arith.constant 2 : index
    %c0_117 = arith.constant 0 : index
    %123 = tpu.strided_load %arg24[%c2_116, %c0_117] {strides = array<i32: 4, 1>} : memref<8x64xf32, #tpu.memory_space<vmem>>, vector<1x64xf32>
    %124 = arith.maximumf %122, %123 : vector<1x64xf32>
    %c3_118 = arith.constant 3 : index
    %c0_119 = arith.constant 0 : index
    %125 = tpu.strided_load %arg24[%c3_118, %c0_119] {strides = array<i32: 4, 1>} : memref<8x64xf32, #tpu.memory_space<vmem>>, vector<1x64xf32>
    %126 = arith.maximumf %124, %125 : vector<1x64xf32>
    %cst_120 = arith.constant dense<0.000000e+00> : vector<64xf32>
    %127 = vector.multi_reduction <add>, %126, %cst_120 [0] : vector<1x64xf32> to vector<64xf32>
    %128 = vector.shape_cast %127 : vector<64xf32> to vector<1x64xf32>
    %cst_121 = arith.constant 1.000000e+00 : f32
    %129 = vector.broadcast %cst_121 : f32 to vector<1x64xf32>
    %130 = arith.divf %128, %129 : vector<1x64xf32>
    %c0_122 = arith.constant 0 : index
    %c0_123 = arith.constant 0 : index
    %131 = vector.load %arg25[%c0_122, %c0_123] : memref<8x64xf32, #tpu.memory_space<vmem>>, vector<1x64xf32>
    tpu.vector_store %arg25[%c0_122, %c0_123], %130 {strides = array<i32>} : memref<8x64xf32, #tpu.memory_space<vmem>>, vector<1x64xf32>,
    %c124 = arith.constant 124 : index
    %c0_124 = arith.constant 0 : index
    %132 = vector.load %arg19[%c124, %c0_124] : memref<248x32xf32, #tpu.memory_space<vmem>>, vector<122x32xf32>
    %133 = arith.truncf %132 : vector<122x32xf32> to vector<122x32xbf16>
    %c0_125 = arith.constant 0 : index
    %c0_126 = arith.constant 0 : index
    %c0_127 = arith.constant 0 : index
    %134 = vector.load %arg6[%c0_125, %c0_126, %c0_127] : memref<3x32x32xbf16, #tpu.memory_space<vmem>>, vector<1x32x32xbf16>
    %135 = vector.shape_cast %134 : vector<1x32x32xbf16> to vector<32x32xbf16>
    %cst_128 = arith.constant dense<0.000000e+00> : vector<122x32xf32>
    %136 = tpu.matmul %133, %135, %cst_128 {dimension_numbers = #tpu.dot_dimension_numbers<[1], [0], [0], [1], [0, 0, 1, 1], [], []>} : vector<122x32xbf16>, vector<32x32xbf16>, vector<122x32xf32> -> vector<122x32xf32>
    %c125 = arith.constant 125 : index
    %c0_129 = arith.constant 0 : index
    %137 = vector.load %arg19[%c125, %c0_129] : memref<248x32xf32, #tpu.memory_space<vmem>>, vector<122x32xf32>
    %138 = arith.truncf %137 : vector<122x32xf32> to vector<122x32xbf16>
    %c1_130 = arith.constant 1 : index
    %c0_131 = arith.constant 0 : index
    %c0_132 = arith.constant 0 : index
    %139 = vector.load %arg6[%c1_130, %c0_131, %c0_132] : memref<3x32x32xbf16, #tpu.memory_space<vmem>>, vector<1x32x32xbf16>
    %140 = vector.shape_cast %139 : vector<1x32x32xbf16> to vector<32x32xbf16>
    %cst_133 = arith.constant dense<0.000000e+00> : vector<122x32xf32>
    %141 = tpu.matmul %138, %140, %cst_133 {dimension_numbers = #tpu.dot_dimension_numbers<[1], [0], [0], [1], [0, 0, 1, 1], [], []>} : vector<122x32xbf16>, vector<32x32xbf16>, vector<122x32xf32> -> vector<122x32xf32>
    %142 = arith.addf %136, %141 : vector<122x32xf32>
    %c126 = arith.constant 126 : index
    %c0_134 = arith.constant 0 : index
    %143 = vector.load %arg19[%c126, %c0_134] : memref<248x32xf32, #tpu.memory_space<vmem>>, vector<122x32xf32>
    %144 = arith.truncf %143 : vector<122x32xf32> to vector<122x32xbf16>
    %c2_135 = arith.constant 2 : index
    %c0_136 = arith.constant 0 : index
    %c0_137 = arith.constant 0 : index
    %145 = vector.load %arg6[%c2_135, %c0_136, %c0_137] : memref<3x32x32xbf16, #tpu.memory_space<vmem>>, vector<1x32x32xbf16>
    %146 = vector.shape_cast %145 : vector<1x32x32xbf16> to vector<32x32xbf16>
    %cst_138 = arith.constant dense<0.000000e+00> : vector<122x32xf32>
    %147 = tpu.matmul %144, %146, %cst_138 {dimension_numbers = #tpu.dot_dimension_numbers<[1], [0], [0], [1], [0, 0, 1, 1], [], []>} : vector<122x32xbf16>, vector<32x32xbf16>, vector<122x32xf32> -> vector<122x32xf32>
    %148 = arith.addf %142, %147 : vector<122x32xf32>
    %149 = arith.mulf %148, %22 : vector<122x32xf32>
    %150 = arith.addf %149, %25 : vector<122x32xf32>
    %cst_139 = arith.constant 0.000000e+00 : f32
    %151 = vector.broadcast %cst_139 : f32 to vector<122x32xf32>
    %152 = arith.maximumf %150, %151 : vector<122x32xf32>
    %c0_140 = arith.constant 0 : index
    %c0_141 = arith.constant 0 : index
    %153 = vector.load %arg20[%c0_140, %c0_141] : memref<128x32xf32, #tpu.memory_space<vmem>>, vector<122x32xf32>
    tpu.vector_store %arg20[%c0_140, %c0_141], %152 {strides = array<i32>} : memref<128x32xf32, #tpu.memory_space<vmem>>, vector<122x32xf32>,
    %c0_142 = arith.constant 0 : index
    %c0_143 = arith.constant 0 : index
    %154 = tpu.strided_load %arg20[%c0_142, %c0_143] {strides = array<i32: 4, 1>} : memref<128x32xf32, #tpu.memory_space<vmem>>, vector<30x32xf32>
    %c1_144 = arith.constant 1 : index
    %c0_145 = arith.constant 0 : index
    %155 = tpu.strided_load %arg20[%c1_144, %c0_145] {strides = array<i32: 4, 1>} : memref<128x32xf32, #tpu.memory_space<vmem>>, vector<30x32xf32>
    %156 = arith.maximumf %154, %155 : vector<30x32xf32>
    %c2_146 = arith.constant 2 : index
    %c0_147 = arith.constant 0 : index
    %157 = tpu.strided_load %arg20[%c2_146, %c0_147] {strides = array<i32: 4, 1>} : memref<128x32xf32, #tpu.memory_space<vmem>>, vector<30x32xf32>
    %158 = arith.maximumf %156, %157 : vector<30x32xf32>
    %c3_148 = arith.constant 3 : index
    %c0_149 = arith.constant 0 : index
    %159 = tpu.strided_load %arg20[%c3_148, %c0_149] {strides = array<i32: 4, 1>} : memref<128x32xf32, #tpu.memory_space<vmem>>, vector<30x32xf32>
    %160 = arith.maximumf %158, %159 : vector<30x32xf32>
    %c0_150 = arith.constant 0 : index
    %c0_151 = arith.constant 0 : index
    %161 = vector.load %arg21[%c0_150, %c0_151] : memref<32x32xf32, #tpu.memory_space<vmem>>, vector<30x32xf32>
    tpu.vector_store %arg21[%c0_150, %c0_151], %160 {strides = array<i32>} : memref<32x32xf32, #tpu.memory_space<vmem>>, vector<30x32xf32>,
    %c0_152 = arith.constant 0 : index
    %c0_153 = arith.constant 0 : index
    %162 = vector.load %arg21[%c0_152, %c0_153] : memref<32x32xf32, #tpu.memory_space<vmem>>, vector<28x32xf32>
    %163 = arith.truncf %162 : vector<28x32xf32> to vector<28x32xbf16>
    %c0_154 = arith.constant 0 : index
    %c0_155 = arith.constant 0 : index
    %c0_156 = arith.constant 0 : index
    %164 = vector.load %arg9[%c0_154, %c0_155, %c0_156] : memref<3x32x64xbf16, #tpu.memory_space<vmem>>, vector<1x32x64xbf16>
    %165 = vector.shape_cast %164 : vector<1x32x64xbf16> to vector<32x64xbf16>
    %cst_157 = arith.constant dense<0.000000e+00> : vector<28x64xf32>
    %166 = tpu.matmul %163, %165, %cst_157 {dimension_numbers = #tpu.dot_dimension_numbers<[1], [0], [0], [1], [0, 0, 1, 1], [], []>} : vector<28x32xbf16>, vector<32x64xbf16>, vector<28x64xf32> -> vector<28x64xf32>
    %c1_158 = arith.constant 1 : index
    %c0_159 = arith.constant 0 : index
    %167 = vector.load %arg21[%c1_158, %c0_159] : memref<32x32xf32, #tpu.memory_space<vmem>>, vector<28x32xf32>
    %168 = arith.truncf %167 : vector<28x32xf32> to vector<28x32xbf16>
    %c1_160 = arith.constant 1 : index
    %c0_161 = arith.constant 0 : index
    %c0_162 = arith.constant 0 : index
    %169 = vector.load %arg9[%c1_160, %c0_161, %c0_162] : memref<3x32x64xbf16, #tpu.memory_space<vmem>>, vector<1x32x64xbf16>
    %170 = vector.shape_cast %169 : vector<1x32x64xbf16> to vector<32x64xbf16>
    %cst_163 = arith.constant dense<0.000000e+00> : vector<28x64xf32>
    %171 = tpu.matmul %168, %170, %cst_163 {dimension_numbers = #tpu.dot_dimension_numbers<[1], [0], [0], [1], [0, 0, 1, 1], [], []>} : vector<28x32xbf16>, vector<32x64xbf16>, vector<28x64xf32> -> vector<28x64xf32>
    %172 = arith.addf %166, %171 : vector<28x64xf32>
    %c2_164 = arith.constant 2 : index
    %c0_165 = arith.constant 0 : index
    %173 = vector.load %arg21[%c2_164, %c0_165] : memref<32x32xf32, #tpu.memory_space<vmem>>, vector<28x32xf32>
    %174 = arith.truncf %173 : vector<28x32xf32> to vector<28x32xbf16>
    %c2_166 = arith.constant 2 : index
    %c0_167 = arith.constant 0 : index
    %c0_168 = arith.constant 0 : index
    %175 = vector.load %arg9[%c2_166, %c0_167, %c0_168] : memref<3x32x64xbf16, #tpu.memory_space<vmem>>, vector<1x32x64xbf16>
    %176 = vector.shape_cast %175 : vector<1x32x64xbf16> to vector<32x64xbf16>
    %cst_169 = arith.constant dense<0.000000e+00> : vector<28x64xf32>
    %177 = tpu.matmul %174, %176, %cst_169 {dimension_numbers = #tpu.dot_dimension_numbers<[1], [0], [0], [1], [0, 0, 1, 1], [], []>} : vector<28x32xbf16>, vector<32x64xbf16>, vector<28x64xf32> -> vector<28x64xf32>
    %178 = arith.addf %172, %177 : vector<28x64xf32>
    %179 = arith.mulf %178, %28 : vector<28x64xf32>
    %180 = arith.addf %179, %31 : vector<28x64xf32>
    %cst_170 = arith.constant 0.000000e+00 : f32
    %181 = vector.broadcast %cst_170 : f32 to vector<28x64xf32>
    %182 = arith.maximumf %180, %181 : vector<28x64xf32>
    %c0_171 = arith.constant 0 : index
    %c0_172 = arith.constant 0 : index
    %183 = vector.load %arg22[%c0_171, %c0_172] : memref<32x64xf32, #tpu.memory_space<vmem>>, vector<28x64xf32>
    tpu.vector_store %arg22[%c0_171, %c0_172], %182 {strides = array<i32>} : memref<32x64xf32, #tpu.memory_space<vmem>>, vector<28x64xf32>,
    %c0_173 = arith.constant 0 : index
    %c0_174 = arith.constant 0 : index
    %184 = tpu.strided_load %arg22[%c0_173, %c0_174] {strides = array<i32: 4, 1>} : memref<32x64xf32, #tpu.memory_space<vmem>>, vector<7x64xf32>
    %c1_175 = arith.constant 1 : index
    %c0_176 = arith.constant 0 : index
    %185 = tpu.strided_load %arg22[%c1_175, %c0_176] {strides = array<i32: 4, 1>} : memref<32x64xf32, #tpu.memory_space<vmem>>, vector<7x64xf32>
    %186 = arith.maximumf %184, %185 : vector<7x64xf32>
    %c2_177 = arith.constant 2 : index
    %c0_178 = arith.constant 0 : index
    %187 = tpu.strided_load %arg22[%c2_177, %c0_178] {strides = array<i32: 4, 1>} : memref<32x64xf32, #tpu.memory_space<vmem>>, vector<7x64xf32>
    %188 = arith.maximumf %186, %187 : vector<7x64xf32>
    %c3_179 = arith.constant 3 : index
    %c0_180 = arith.constant 0 : index
    %189 = tpu.strided_load %arg22[%c3_179, %c0_180] {strides = array<i32: 4, 1>} : memref<32x64xf32, #tpu.memory_space<vmem>>, vector<7x64xf32>
    %190 = arith.maximumf %188, %189 : vector<7x64xf32>
    %c0_181 = arith.constant 0 : index
    %c0_182 = arith.constant 0 : index
    %191 = vector.load %arg23[%c0_181, %c0_182] : memref<8x64xf32, #tpu.memory_space<vmem>>, vector<7x64xf32>
    tpu.vector_store %arg23[%c0_181, %c0_182], %190 {strides = array<i32>} : memref<8x64xf32, #tpu.memory_space<vmem>>, vector<7x64xf32>,
    %c0_183 = arith.constant 0 : index
    %c0_184 = arith.constant 0 : index
    %192 = vector.load %arg23[%c0_183, %c0_184] : memref<8x64xf32, #tpu.memory_space<vmem>>, vector<5x64xf32>
    %193 = arith.truncf %192 : vector<5x64xf32> to vector<5x64xbf16>
    %c0_185 = arith.constant 0 : index
    %c0_186 = arith.constant 0 : index
    %c0_187 = arith.constant 0 : index
    %194 = vector.load %arg12[%c0_185, %c0_186, %c0_187] : memref<3x64x64xbf16, #tpu.memory_space<vmem>>, vector<1x64x64xbf16>
    %195 = vector.shape_cast %194 : vector<1x64x64xbf16> to vector<64x64xbf16>
    %cst_188 = arith.constant dense<0.000000e+00> : vector<5x64xf32>
    %196 = tpu.matmul %193, %195, %cst_188 {dimension_numbers = #tpu.dot_dimension_numbers<[1], [0], [0], [1], [0, 0, 1, 1], [], []>} : vector<5x64xbf16>, vector<64x64xbf16>, vector<5x64xf32> -> vector<5x64xf32>
    %c1_189 = arith.constant 1 : index
    %c0_190 = arith.constant 0 : index
    %197 = vector.load %arg23[%c1_189, %c0_190] : memref<8x64xf32, #tpu.memory_space<vmem>>, vector<5x64xf32>
    %198 = arith.truncf %197 : vector<5x64xf32> to vector<5x64xbf16>
    %c1_191 = arith.constant 1 : index
    %c0_192 = arith.constant 0 : index
    %c0_193 = arith.constant 0 : index
    %199 = vector.load %arg12[%c1_191, %c0_192, %c0_193] : memref<3x64x64xbf16, #tpu.memory_space<vmem>>, vector<1x64x64xbf16>
    %200 = vector.shape_cast %199 : vector<1x64x64xbf16> to vector<64x64xbf16>
    %cst_194 = arith.constant dense<0.000000e+00> : vector<5x64xf32>
    %201 = tpu.matmul %198, %200, %cst_194 {dimension_numbers = #tpu.dot_dimension_numbers<[1], [0], [0], [1], [0, 0, 1, 1], [], []>} : vector<5x64xbf16>, vector<64x64xbf16>, vector<5x64xf32> -> vector<5x64xf32>
    %202 = arith.addf %196, %201 : vector<5x64xf32>
    %c2_195 = arith.constant 2 : index
    %c0_196 = arith.constant 0 : index
    %203 = vector.load %arg23[%c2_195, %c0_196] : memref<8x64xf32, #tpu.memory_space<vmem>>, vector<5x64xf32>
    %204 = arith.truncf %203 : vector<5x64xf32> to vector<5x64xbf16>
    %c2_197 = arith.constant 2 : index
    %c0_198 = arith.constant 0 : index
    %c0_199 = arith.constant 0 : index
    %205 = vector.load %arg12[%c2_197, %c0_198, %c0_199] : memref<3x64x64xbf16, #tpu.memory_space<vmem>>, vector<1x64x64xbf16>
    %206 = vector.shape_cast %205 : vector<1x64x64xbf16> to vector<64x64xbf16>
    %cst_200 = arith.constant dense<0.000000e+00> : vector<5x64xf32>
    %207 = tpu.matmul %204, %206, %cst_200 {dimension_numbers = #tpu.dot_dimension_numbers<[1], [0], [0], [1], [0, 0, 1, 1], [], []>} : vector<5x64xbf16>, vector<64x64xbf16>, vector<5x64xf32> -> vector<5x64xf32>
    %208 = arith.addf %202, %207 : vector<5x64xf32>
    %209 = arith.mulf %208, %34 : vector<5x64xf32>
    %210 = arith.addf %209, %37 : vector<5x64xf32>
    %cst_201 = arith.constant 0.000000e+00 : f32
    %211 = vector.broadcast %cst_201 : f32 to vector<5x64xf32>
    %212 = arith.maximumf %210, %211 : vector<5x64xf32>
    %c0_202 = arith.constant 0 : index
    %c0_203 = arith.constant 0 : index
    %213 = vector.load %arg24[%c0_202, %c0_203] : memref<8x64xf32, #tpu.memory_space<vmem>>, vector<5x64xf32>
    tpu.vector_store %arg24[%c0_202, %c0_203], %212 {strides = array<i32>} : memref<8x64xf32, #tpu.memory_space<vmem>>, vector<5x64xf32>,
    %c0_204 = arith.constant 0 : index
    %c0_205 = arith.constant 0 : index
    %214 = tpu.strided_load %arg24[%c0_204, %c0_205] {strides = array<i32: 4, 1>} : memref<8x64xf32, #tpu.memory_space<vmem>>, vector<1x64xf32>
    %c1_206 = arith.constant 1 : index
    %c0_207 = arith.constant 0 : index
    %215 = tpu.strided_load %arg24[%c1_206, %c0_207] {strides = array<i32: 4, 1>} : memref<8x64xf32, #tpu.memory_space<vmem>>, vector<1x64xf32>
    %216 = arith.maximumf %214, %215 : vector<1x64xf32>
    %c2_208 = arith.constant 2 : index
    %c0_209 = arith.constant 0 : index
    %217 = tpu.strided_load %arg24[%c2_208, %c0_209] {strides = array<i32: 4, 1>} : memref<8x64xf32, #tpu.memory_space<vmem>>, vector<1x64xf32>
    %218 = arith.maximumf %216, %217 : vector<1x64xf32>
    %c3_210 = arith.constant 3 : index
    %c0_211 = arith.constant 0 : index
    %219 = tpu.strided_load %arg24[%c3_210, %c0_211] {strides = array<i32: 4, 1>} : memref<8x64xf32, #tpu.memory_space<vmem>>, vector<1x64xf32>
    %220 = arith.maximumf %218, %219 : vector<1x64xf32>
    %cst_212 = arith.constant dense<0.000000e+00> : vector<64xf32>
    %221 = vector.multi_reduction <add>, %220, %cst_212 [0] : vector<1x64xf32> to vector<64xf32>
    %222 = vector.shape_cast %221 : vector<64xf32> to vector<1x64xf32>
    %cst_213 = arith.constant 1.000000e+00 : f32
    %223 = vector.broadcast %cst_213 : f32 to vector<1x64xf32>
    %224 = arith.divf %222, %223 : vector<1x64xf32>
    %c1_214 = arith.constant 1 : index
    %c0_215 = arith.constant 0 : index
    %225 = vector.load %arg25[%c1_214, %c0_215] : memref<8x64xf32, #tpu.memory_space<vmem>>, vector<1x64xf32>
    tpu.vector_store %arg25[%c1_214, %c0_215], %224 {strides = array<i32>} : memref<8x64xf32, #tpu.memory_space<vmem>>, vector<1x64xf32>,
    %c0_216 = arith.constant 0 : index
    %c0_217 = arith.constant 0 : index
    %226 = vector.load %arg25[%c0_216, %c0_217] : memref<8x64xf32, #tpu.memory_space<vmem>>, vector<2x64xf32>
    %227 = arith.truncf %226 : vector<2x64xf32> to vector<2x64xbf16>
    %c0_218 = arith.constant 0 : index
    %c0_219 = arith.constant 0 : index
    %228 = vector.load %arg15[%c0_218, %c0_219] : memref<64x35xbf16, #tpu.memory_space<vmem>>, vector<64x35xbf16>
    %cst_220 = arith.constant dense<0.000000e+00> : vector<2x35xf32>
    %229 = tpu.matmul %227, %228, %cst_220 {dimension_numbers = #tpu.dot_dimension_numbers<[1], [0], [0], [1], [0, 0, 1, 1], [], []>} : vector<2x64xbf16>, vector<64x35xbf16>, vector<2x35xf32> -> vector<2x35xf32>
    %c0_221 = arith.constant 0 : index
    %c0_222 = arith.constant 0 : index
    %230 = vector.load %arg16[%c0_221, %c0_222] : memref<1x35xf32, #tpu.memory_space<vmem>>, vector<1x35xf32>
    %231 = vector.broadcast %230 : vector<1x35xf32> to vector<2x35xf32>
    %232 = arith.addf %229, %231 : vector<2x35xf32>
    %cst_223 = arith.constant dense<0xFF800000> : vector<2xf32>
    %233 = vector.multi_reduction <maximumf>, %232, %cst_223 [1] : vector<2x35xf32> to vector<2xf32>
    %234 = vector.shape_cast %233 : vector<2xf32> to vector<2x1xf32>
    %235 = vector.broadcast %234 : vector<2x1xf32> to vector<2x35xf32>
    %236 = arith.subf %232, %235 : vector<2x35xf32>
    %237 = math.exp %236 : vector<2x35xf32>
    %cst_224 = arith.constant dense<0.000000e+00> : vector<2xf32>
    %238 = vector.multi_reduction <add>, %237, %cst_224 [1] : vector<2x35xf32> to vector<2xf32>
    %239 = vector.shape_cast %238 : vector<2xf32> to vector<2x1xf32>
    %240 = math.log %239 : vector<2x1xf32>
    %241 = arith.addf %240, %234 : vector<2x1xf32>
    %242 = vector.broadcast %241 : vector<2x1xf32> to vector<2x35xf32>
    %243 = arith.subf %232, %242 : vector<2x35xf32>
    %c0_225 = arith.constant 0 : index
    %c0_226 = arith.constant 0 : index
    %c0_227 = arith.constant 0 : index
    %244 = vector.load %arg2[%c0_225, %c0_226, %c0_227] : memref<1x2x35xf32, #tpu.memory_space<vmem>>, vector<1x2x35xf32>
    %245 = vector.shape_cast %244 : vector<1x2x35xf32> to vector<2x35xf32>
    %246 = arith.subf %243, %245 : vector<2x35xf32>
    %247 = arith.mulf %246, %246 : vector<2x35xf32>
    %248 = vector.shape_cast %247 : vector<2x35xf32> to vector<1x2x35xf32>
    %cst_228 = arith.constant dense<0.000000e+00> : vector<1xf32>
    %249 = vector.multi_reduction <add>, %248, %cst_228 [1, 2] : vector<1x2x35xf32> to vector<1xf32>
    %250 = vector.shape_cast %249 : vector<1xf32> to vector<1x1x1xf32>
    %251 = vector.extract %250[0, 0, 0] : f32 from vector<1x1x1xf32>
    %cst_229 = arith.constant 0.0142857144 : f32
    %252 = arith.mulf %251, %cst_229 : f32
    %c0_230 = arith.constant 0 : index
    %c0_231 = arith.constant 0 : index
    %253 = memref.load %arg17[%c0_230, %c0_231] : memref<1x1xf32, #tpu.memory_space<smem>>
    memref.store %252, %arg17[%c0_230, %c0_231] : memref<1x1xf32, #tpu.memory_space<smem>>
    return
  }
  func.func @transform_0(%arg0: i32) -> (i32, i32) {
    %c0_i32 = arith.constant 0 : i32
    %c0_i32_0 = arith.constant 0 : i32
    return %arg0, %c0_i32 : i32, i32
  }
  func.func @transform_1(%arg0: i32) -> (i32, i32, i32) {
    %c0_i32 = arith.constant 0 : i32
    %c0_i32_0 = arith.constant 0 : i32
    %c0_i32_1 = arith.constant 0 : i32
    return %arg0, %c0_i32, %c0_i32_0 : i32, i32, i32
  }
  func.func @transform_2(%arg0: i32) -> (i32, i32) {
    %c0_i32 = arith.constant 0 : i32
    %c0_i32_0 = arith.constant 0 : i32
    %c0_i32_1 = arith.constant 0 : i32
    return %c0_i32, %c0_i32_0 : i32, i32
  }
  func.func @transform_3(%arg0: i32) -> (i32, i32) {
    %c0_i32 = arith.constant 0 : i32
    %c0_i32_0 = arith.constant 0 : i32
    %c0_i32_1 = arith.constant 0 : i32
    return %c0_i32, %c0_i32_0 : i32, i32
  }
  func.func @transform_4(%arg0: i32) -> (i32, i32) {
    %c0_i32 = arith.constant 0 : i32
    %c0_i32_0 = arith.constant 0 : i32
    %c0_i32_1 = arith.constant 0 : i32
    return %c0_i32, %c0_i32_0 : i32, i32
  }
  func.func @transform_5(%arg0: i32) -> (i32, i32, i32) {
    %c0_i32 = arith.constant 0 : i32
    %c0_i32_0 = arith.constant 0 : i32
    %c0_i32_1 = arith.constant 0 : i32
    %c0_i32_2 = arith.constant 0 : i32
    return %c0_i32, %c0_i32_0, %c0_i32_1 : i32, i32, i32
  }
  func.func @transform_6(%arg0: i32) -> (i32, i32) {
    %c0_i32 = arith.constant 0 : i32
    %c0_i32_0 = arith.constant 0 : i32
    %c0_i32_1 = arith.constant 0 : i32
    return %c0_i32, %c0_i32_0 : i32, i32
  }
  func.func @transform_7(%arg0: i32) -> (i32, i32) {
    %c0_i32 = arith.constant 0 : i32
    %c0_i32_0 = arith.constant 0 : i32
    %c0_i32_1 = arith.constant 0 : i32
    return %c0_i32, %c0_i32_0 : i32, i32
  }
  func.func @transform_8(%arg0: i32) -> (i32, i32, i32) {
    %c0_i32 = arith.constant 0 : i32
    %c0_i32_0 = arith.constant 0 : i32
    %c0_i32_1 = arith.constant 0 : i32
    %c0_i32_2 = arith.constant 0 : i32
    return %c0_i32, %c0_i32_0, %c0_i32_1 : i32, i32, i32
  }
  func.func @transform_9(%arg0: i32) -> (i32, i32) {
    %c0_i32 = arith.constant 0 : i32
    %c0_i32_0 = arith.constant 0 : i32
    %c0_i32_1 = arith.constant 0 : i32
    return %c0_i32, %c0_i32_0 : i32, i32
  }
  func.func @transform_10(%arg0: i32) -> (i32, i32) {
    %c0_i32 = arith.constant 0 : i32
    %c0_i32_0 = arith.constant 0 : i32
    %c0_i32_1 = arith.constant 0 : i32
    return %c0_i32, %c0_i32_0 : i32, i32
  }
  func.func @transform_11(%arg0: i32) -> (i32, i32, i32) {
    %c0_i32 = arith.constant 0 : i32
    %c0_i32_0 = arith.constant 0 : i32
    %c0_i32_1 = arith.constant 0 : i32
    %c0_i32_2 = arith.constant 0 : i32
    return %c0_i32, %c0_i32_0, %c0_i32_1 : i32, i32, i32
  }
  func.func @transform_12(%arg0: i32) -> (i32, i32) {
    %c0_i32 = arith.constant 0 : i32
    %c0_i32_0 = arith.constant 0 : i32
    %c0_i32_1 = arith.constant 0 : i32
    return %c0_i32, %c0_i32_0 : i32, i32
  }
  func.func @transform_13(%arg0: i32) -> (i32, i32) {
    %c0_i32 = arith.constant 0 : i32
    %c0_i32_0 = arith.constant 0 : i32
    %c0_i32_1 = arith.constant 0 : i32
    return %c0_i32, %c0_i32_0 : i32, i32
  }
  func.func @transform_14(%arg0: i32) -> (i32, i32) {
    %c0_i32 = arith.constant 0 : i32
    %c0_i32_0 = arith.constant 0 : i32
    %c0_i32_1 = arith.constant 0 : i32
    return %c0_i32, %c0_i32_0 : i32, i32
  }
  func.func @transform_15(%arg0: i32) -> (i32, i32) {
    %c0_i32 = arith.constant 0 : i32
    %c0_i32_0 = arith.constant 0 : i32
    %c0_i32_1 = arith.constant 0 : i32
    return %c0_i32, %c0_i32_0 : i32, i32
  }
  func.func @transform_16(%arg0: i32) -> (i32, i32) {
    %c0_i32 = arith.constant 0 : i32
    %c0_i32_0 = arith.constant 0 : i32
    return %arg0, %c0_i32 : i32, i32
  }
}

</mosaic_0001>

<llo_original>
// kernel: full_model_index_forward.1
$region0: #{full_model_index_forward.1}
  #allocation0 [shape = 'u32[]', space=smem, size = 0x4, offset = 0x4, fixed_abs, tag = 'smem constant byte address 0x4 - core index']
  #allocation1 [shape = 'u32[72,128]{1,0:T(1,128)}', space=vmem, size = 0x9000, scoped, tag = 'internal scratch']
  #allocation2 [shape = 'f32[992,32]{1,0:T(8,128)}', space=vmem, size = 0x7c000, scoped, tag = 'scratch operand']
  #allocation3 [shape = 'f32[248,32]{1,0:T(8,128)}', space=vmem, size = 0x1f000, scoped, tag = 'scratch operand']
  #allocation4 [shape = 'f32[128,32]{1,0:T(8,128)}', space=vmem, size = 0x10000, scoped, tag = 'scratch operand']
  #allocation5 [shape = 'f32[32,32]{1,0:T(8,128)}', space=vmem, size = 0x4000, scoped, tag = 'scratch operand']
  #allocation6 [shape = 'f32[32,64]{1,0:T(8,128)}', space=vmem, size = 0x4000, scoped, tag = 'scratch operand']
  #allocation7 [shape = 'f32[8,64]{1,0:T(8,128)}', space=vmem, size = 0x1000, scoped, tag = 'scratch operand']
  #allocation8 [shape = 'f32[8,64]{1,0:T(8,128)}', space=vmem, size = 0x1000, scoped, tag = 'scratch operand']
  #allocation9 [shape = 'f32[8,64]{1,0:T(8,128)}', space=vmem, size = 0x1000, scoped, tag = 'scratch operand']
  %s0 = inlined_call_operand.vmem [shape: bf16[992,80], index: 0, kind: input, shape index: {}]
  %s1 = inlined_call_operand.vmem [shape: f32[1,2,35], index: 1, kind: input, shape index: {}]
  %s2 = inlined_call_operand.vmem [shape: bf16[80,32], index: 2, kind: input, shape index: {}]
  %s3 = inlined_call_operand.vmem [shape: f32[1,32], index: 3, kind: input, shape index: {}]
  %s4 = inlined_call_operand.vmem [shape: f32[1,32], index: 4, kind: input, shape index: {}]
  %s5 = inlined_call_operand.vmem [shape: bf16[3,32,32], index: 5, kind: input, shape index: {}]
  %s6 = inlined_call_operand.vmem [shape: f32[1,32], index: 6, kind: input, shape index: {}]
  %s7 = inlined_call_operand.vmem [shape: f32[1,32], index: 7, kind: input, shape index: {}]
  %s8 = inlined_call_operand.vmem [shape: bf16[3,32,64], index: 8, kind: input, shape index: {}]
  %s9 = inlined_call_operand.vmem [shape: f32[1,64], index: 9, kind: input, shape index: {}]
  %s10 = inlined_call_operand.vmem [shape: f32[1,64], index: 10, kind: input, shape index: {}]
  %s11 = inlined_call_operand.vmem [shape: bf16[3,64,64], index: 11, kind: input, shape index: {}]
  %s12 = inlined_call_operand.vmem [shape: f32[1,64], index: 12, kind: input, shape index: {}]
  %s13 = inlined_call_operand.vmem [shape: f32[1,64], index: 13, kind: input, shape index: {}]
  %s14 = inlined_call_operand.vmem [shape: bf16[64,35], index: 14, kind: input, shape index: {}]
  %s15 = inlined_call_operand.vmem [shape: f32[1,35], index: 15, kind: input, shape index: {}]
  %s16 = inlined_call_operand.hbm [shape: f32[1,1], index: 16, kind: output, shape index: {}]
  %s17 = sld [smem:[#allocation0]]
  $region74: #{full_model_index_forward.1} parent=0
    _
  %s19 = ssub.s32 1, %s17
  %s20 = scalar_select 0, %s19, %s17
  $region1: #{full_model_index_forward.1} parent=0
    #allocation10 [shape = 'u8[512]{0}', space=smem, size = 0x200, scoped, tag = 'output window, operand 0, single buffered']
    #allocation11 [shape = 's32[1]{0}', space=sflag, size = 0x4, scoped, tag = 'scoped memory for full_model_index_forward.1']
    %21 = vsyncpa [#allocation11], 0
    // Predicated region
    $region2: #{full_model_index_forward.1} parent=1 // pred_check
      _
    $region3: #{full_model_index_forward.1} parent=1 // pred_check_branch
      %23 = sbr.rel (0) target = $region5
    $region4: #{full_model_index_forward.1} parent=1 // pred_region
      _
    $region5: #{full_model_index_forward.1} parent=1 // pred_fallthru
      _
    // Predicated region
    $region6: #{full_model_index_forward.1} parent=1 // pred_check
      _
    $region7: #{full_model_index_forward.1} parent=1 // pred_check_branch
      %25 = sbr.rel (0) target = $region9
    $region8: #{full_model_index_forward.1} parent=1 // pred_region
      _
    $region9: #{full_model_index_forward.1} parent=1 // pred_fallthru
      _
    // Predicated region
    $region10: #{full_model_index_forward.1} parent=1 // pred_check
      _
    $region11: #{full_model_index_forward.1} parent=1 // pred_check_branch
      %27 = sbr.rel (0) target = $region13
    $region12: #{full_model_index_forward.1} parent=1 // pred_region
      _
    $region13: #{full_model_index_forward.1} parent=1 // pred_fallthru
      _
    // Predicated region
    $region14: #{full_model_index_forward.1} parent=1 // pred_check
      _
    $region15: #{full_model_index_forward.1} parent=1 // pred_check_branch
      %29 = sbr.rel (0) target = $region17
    $region16: #{full_model_index_forward.1} parent=1 // pred_region
      _
    $region17: #{full_model_index_forward.1} parent=1 // pred_fallthru
      _
    // Predicated region
    $region18: #{full_model_index_forward.1} parent=1 // pred_check
      _
    $region19: #{full_model_index_forward.1} parent=1 // pred_check_branch
      %31 = sbr.rel (0) target = $region21
    $region20: #{full_model_index_forward.1} parent=1 // pred_region
      _
    $region21: #{full_model_index_forward.1} parent=1 // pred_fallthru
      _
    // Predicated region
    $region22: #{full_model_index_forward.1} parent=1 // pred_check
      _
    $region23: #{full_model_index_forward.1} parent=1 // pred_check_branch
      %33 = sbr.rel (0) target = $region25
    $region24: #{full_model_index_forward.1} parent=1 // pred_region
      _
    $region25: #{full_model_index_forward.1} parent=1 // pred_fallthru
      _
    // Predicated region
    $region26: #{full_model_index_forward.1} parent=1 // pred_check
      _
    $region27: #{full_model_index_forward.1} parent=1 // pred_check_branch
      %35 = sbr.rel (0) target = $region29
    $region28: #{full_model_index_forward.1} parent=1 // pred_region
      _
    $region29: #{full_model_index_forward.1} parent=1 // pred_fallthru
      _
    // Predicated region
    $region30: #{full_model_index_forward.1} parent=1 // pred_check
      _
    $region31: #{full_model_index_forward.1} parent=1 // pred_check_branch
      %37 = sbr.rel (0) target = $region33
    $region32: #{full_model_index_forward.1} parent=1 // pred_region
      _
    $region33: #{full_model_index_forward.1} parent=1 // pred_fallthru
      _
    // Predicated region
    $region34: #{full_model_index_forward.1} parent=1 // pred_check
      _
    $region35: #{full_model_index_forward.1} parent=1 // pred_check_branch
      %39 = sbr.rel (0) target = $region37
    $region36: #{full_model_index_forward.1} parent=1 // pred_region
      _
    $region37: #{full_model_index_forward.1} parent=1 // pred_fallthru
      _
    // Predicated region
    $region38: #{full_model_index_forward.1} parent=1 // pred_check
      _
    $region39: #{full_model_index_forward.1} parent=1 // pred_check_branch
      %41 = sbr.rel (0) target = $region41
    $region40: #{full_model_index_forward.1} parent=1 // pred_region
      _
    $region41: #{full_model_index_forward.1} parent=1 // pred_fallthru
      _
    // Predicated region
    $region42: #{full_model_index_forward.1} parent=1 // pred_check
      _
    $region43: #{full_model_index_forward.1} parent=1 // pred_check_branch
      %43 = sbr.rel (0) target = $region45
    $region44: #{full_model_index_forward.1} parent=1 // pred_region
      _
    $region45: #{full_model_index_forward.1} parent=1 // pred_fallthru
      _
    // Predicated region
    $region46: #{full_model_index_forward.1} parent=1 // pred_check
      _
    $region47: #{full_model_index_forward.1} parent=1 // pred_check_branch
      %45 = sbr.rel (0) target = $region49
    $region48: #{full_model_index_forward.1} parent=1 // pred_region
      _
    $region49: #{full_model_index_forward.1} parent=1 // pred_fallthru
      _
    // Predicated region
    $region50: #{full_model_index_forward.1} parent=1 // pred_check
      _
    $region51: #{full_model_index_forward.1} parent=1 // pred_check_branch
      %47 = sbr.rel (0) target = $region53
    $region52: #{full_model_index_forward.1} parent=1 // pred_region
      _
    $region53: #{full_model_index_forward.1} parent=1 // pred_fallthru
      _
    // Predicated region
    $region54: #{full_model_index_forward.1} parent=1 // pred_check
      _
    $region55: #{full_model_index_forward.1} parent=1 // pred_check_branch
      %49 = sbr.rel (0) target = $region57
    $region56: #{full_model_index_forward.1} parent=1 // pred_region
      _
    $region57: #{full_model_index_forward.1} parent=1 // pred_fallthru
      _
    // Predicated region
    $region58: #{full_model_index_forward.1} parent=1 // pred_check
      _
    $region59: #{full_model_index_forward.1} parent=1 // pred_check_branch
      %51 = sbr.rel (0) target = $region61
    $region60: #{full_model_index_forward.1} parent=1 // pred_region
      _
    $region61: #{full_model_index_forward.1} parent=1 // pred_fallthru
      _
    // Predicated region
    $region62: #{full_model_index_forward.1} parent=1 // pred_check
      _
    $region63: #{full_model_index_forward.1} parent=1 // pred_check_branch
      %53 = sbr.rel (0) target = $region65
    $region64: #{full_model_index_forward.1} parent=1 // pred_region
      _
    $region65: #{full_model_index_forward.1} parent=1 // pred_fallthru
      _
    %v55 = vld [vmem:[%s0] sm:$0xf]
    %v56 = vld [vmem:[%s0 + $0x4] sm:$0xf]
    %v57 = vld [vmem:[%s0 + $0x8] sm:$0xf]
    %v58 = vld [vmem:[%s0 + $0xc] sm:$0xf]
    %v59 = vld [vmem:[%s0 + $0x10] sm:$0xf]
    %v60 = vld [vmem:[%s0 + $0x14] sm:$0xf]
    %v61 = vld [vmem:[%s0 + $0x18] sm:$0xf]
    %v62 = vld [vmem:[%s0 + $0x1c] sm:$0xf]
    %v63 = vld [vmem:[%s0 + $0x20] sm:$0xf]
    %v64 = vld [vmem:[%s0 + $0x24] sm:$0xf]
    %v65 = vld [vmem:[%s0 + $0x28] sm:$0xf]
    %v66 = vld [vmem:[%s0 + $0x2c] sm:$0xf]
    %v67 = vld [vmem:[%s0 + $0x30] sm:$0xf]
    %v68 = vld [vmem:[%s0 + $0x34] sm:$0xf]
    %v69 = vld [vmem:[%s0 + $0x38] sm:$0xf]
    %v70 = vld [vmem:[%s0 + $0x3c] sm:$0xf]
    %v71 = vld [vmem:[%s0 + $0x40] sm:$0xf]
    %v72 = vld [vmem:[%s0 + $0x44] sm:$0xf]
    %v73 = vld [vmem:[%s0 + $0x48] sm:$0xf]
    %v74 = vld [vmem:[%s0 + $0x4c] sm:$0xf]
    %v75 = vld [vmem:[%s0 + $0x50] sm:$0xf]
    %v76 = vld [vmem:[%s0 + $0x54] sm:$0xf]
    %v77 = vld [vmem:[%s0 + $0x58] sm:$0xf]
    %v78 = vld [vmem:[%s0 + $0x5c] sm:$0xf]
    %v79 = vld [vmem:[%s0 + $0x60] sm:$0xf]
    %v80 = vld [vmem:[%s0 + $0x64] sm:$0xf]
    %v81 = vld [vmem:[%s0 + $0x68] sm:$0xf]
    %v82 = vld [vmem:[%s0 + $0x6c] sm:$0xf]
    %v83 = vld [vmem:[%s0 + $0x70] sm:$0xf]
    %v84 = vld [vmem:[%s0 + $0x74] sm:$0xf]
    %v85 = vld [vmem:[%s0 + $0x78] sm:$0xf]
    %v86 = vld [vmem:[%s0 + $0x7c] sm:$0xf]
    %v87 = vld [vmem:[%s0 + $0x80] sm:$0xf]
    %v88 = vld [vmem:[%s0 + $0x84] sm:$0xf]
    %v89 = vld [vmem:[%s0 + $0x88] sm:$0xf]
    %v90 = vld [vmem:[%s0 + $0x8c] sm:$0xf]
    %v91 = vld [vmem:[%s0 + $0x90] sm:$0xf]
    %v92 = vld [vmem:[%s0 + $0x94] sm:$0xf]
    %v93 = vld [vmem:[%s0 + $0x98] sm:$0xf]
    %v94 = vld [vmem:[%s0 + $0x9c] sm:$0xf]
    %v95 = vld [vmem:[%s0 + $0xa0] sm:$0xf]
    %v96 = vld [vmem:[%s0 + $0xa4] sm:$0xf]
    %v97 = vld [vmem:[%s0 + $0xa8] sm:$0xf]
    %v98 = vld [vmem:[%s0 + $0xac] sm:$0xf]
    %v99 = vld [vmem:[%s0 + $0xb0] sm:$0xf]
    %v100 = vld [vmem:[%s0 + $0xb4] sm:$0xf]
    %v101 = vld [vmem:[%s0 + $0xb8] sm:$0xf]
    %v102 = vld [vmem:[%s0 + $0xbc] sm:$0xf]
    %v103 = vld [vmem:[%s0 + $0xc0] sm:$0xf]
    %v104 = vld [vmem:[%s0 + $0xc4] sm:$0xf]
    %v105 = vld [vmem:[%s0 + $0xc8] sm:$0xf]
    %v106 = vld [vmem:[%s0 + $0xcc] sm:$0xf]
    %v107 = vld [vmem:[%s0 + $0xd0] sm:$0xf]
    %v108 = vld [vmem:[%s0 + $0xd4] sm:$0xf]
    %v109 = vld [vmem:[%s0 + $0xd8] sm:$0xf]
    %v110 = vld [vmem:[%s0 + $0xdc] sm:$0xf]
    %v111 = vld [vmem:[%s0 + $0xe0] sm:$0xf]
    %v112 = vld [vmem:[%s0 + $0xe4] sm:$0xf]
    %v113 = vld [vmem:[%s0 + $0xe8] sm:$0xf]
    %v114 = vld [vmem:[%s0 + $0xec] sm:$0xf]
    %v115 = vld [vmem:[%s0 + $0xf0] sm:$0xf]
    %v116 = vld [vmem:[%s0 + $0xf4] sm:$0xf]
    %v117 = vld [vmem:[%s0 + $0xf8] sm:$0xf]
    %v118 = vld [vmem:[%s0 + $0xfc] sm:$0xf]
    %v119 = vld [vmem:[%s0 + $0x100] sm:$0xf]
    %v120 = vld [vmem:[%s0 + $0x104] sm:$0xf]
    %v121 = vld [vmem:[%s0 + $0x108] sm:$0xf]
    %v122 = vld [vmem:[%s0 + $0x10c] sm:$0xf]
    %v123 = vld [vmem:[%s0 + $0x110] sm:$0xf]
    %v124 = vld [vmem:[%s0 + $0x114] sm:$0xf]
    %v125 = vld [vmem:[%s0 + $0x118] sm:$0xf]
    %v126 = vld [vmem:[%s0 + $0x11c] sm:$0xf]
    %v127 = vld [vmem:[%s0 + $0x120] sm:$0xf]
    %v128 = vld [vmem:[%s0 + $0x124] sm:$0xf]
    %v129 = vld [vmem:[%s0 + $0x128] sm:$0xf]
    %v130 = vld [vmem:[%s0 + $0x12c] sm:$0xf]
    %v131 = vld [vmem:[%s0 + $0x130] sm:$0xf]
    %v132 = vld [vmem:[%s0 + $0x134] sm:$0xf]
    %v133 = vld [vmem:[%s0 + $0x138] sm:$0xf]
    %v134 = vld [vmem:[%s0 + $0x13c] sm:$0xf]
    %v135 = vld [vmem:[%s0 + $0x140] sm:$0xf]
    %v136 = vld [vmem:[%s0 + $0x144] sm:$0xf]
    %v137 = vld [vmem:[%s0 + $0x148] sm:$0xf]
    %v138 = vld [vmem:[%s0 + $0x14c] sm:$0xf]
    %v139 = vld [vmem:[%s0 + $0x150] sm:$0xf]
    %v140 = vld [vmem:[%s0 + $0x154] sm:$0xf]
    %v141 = vld [vmem:[%s0 + $0x158] sm:$0xf]
    %v142 = vld [vmem:[%s0 + $0x15c] sm:$0xf]
    %v143 = vld [vmem:[%s0 + $0x160] sm:$0xf]
    %v144 = vld [vmem:[%s0 + $0x164] sm:$0xf]
    %v145 = vld [vmem:[%s0 + $0x168] sm:$0xf]
    %v146 = vld [vmem:[%s0 + $0x16c] sm:$0xf]
    %v147 = vld [vmem:[%s0 + $0x170] sm:$0xf]
    %v148 = vld [vmem:[%s0 + $0x174] sm:$0xf]
    %v149 = vld [vmem:[%s0 + $0x178] sm:$0xf]
    %v150 = vld [vmem:[%s0 + $0x17c] sm:$0xf]
    %v151 = vld [vmem:[%s0 + $0x180] sm:$0xf]
    %v152 = vld [vmem:[%s0 + $0x184] sm:$0xf]
    %v153 = vld [vmem:[%s0 + $0x188] sm:$0xf]
    %v154 = vld [vmem:[%s0 + $0x18c] sm:$0xf]
    %v155 = vld [vmem:[%s0 + $0x190] sm:$0xf]
    %v156 = vld [vmem:[%s0 + $0x194] sm:$0xf]
    %v157 = vld [vmem:[%s0 + $0x198] sm:$0xf]
    %v158 = vld [vmem:[%s0 + $0x19c] sm:$0xf]
    %v159 = vld [vmem:[%s0 + $0x1a0] sm:$0xf]
    %v160 = vld [vmem:[%s0 + $0x1a4] sm:$0xf]
    %v161 = vld [vmem:[%s0 + $0x1a8] sm:$0xf]
    %v162 = vld [vmem:[%s0 + $0x1ac] sm:$0xf]
    %v163 = vld [vmem:[%s0 + $0x1b0] sm:$0xf]
    %v164 = vld [vmem:[%s0 + $0x1b4] sm:$0xf]
    %v165 = vld [vmem:[%s0 + $0x1b8] sm:$0xf]
    %v166 = vld [vmem:[%s0 + $0x1bc] sm:$0xf]
    %v167 = vld [vmem:[%s0 + $0x1c0] sm:$0xf]
    %v168 = vld [vmem:[%s0 + $0x1c4] sm:$0xf]
    %v169 = vld [vmem:[%s0 + $0x1c8] sm:$0xf]
    %v170 = vld [vmem:[%s0 + $0x1cc] sm:$0xf]
    %v171 = vld [vmem:[%s0 + $0x1d0] sm:$0xf]
    %v172 = vld [vmem:[%s0 + $0x1d4] sm:$0xf]
    %v173 = vld [vmem:[%s0 + $0x1d8] sm:$0xf]
    %v174 = vld [vmem:[%s0 + $0x1dc] sm:$0xf]
    %v175 = vld [vmem:[%s0 + $0x1e0] sm:$0xf]
    %v176 = vld [vmem:[%s0 + $0x1e4] sm:$0xf]
    %v177 = vld [vmem:[%s0 + $0x1e8] sm:$0xf]
    %v178 = vld [vmem:[%s0 + $0x1ec] sm:$0xf]
    %v179 = vld [vmem:[%s2] sm:$0xf]
    %v180 = vld [vmem:[%s2 + $0x4] sm:$0xf]
    %v181 = vld [vmem:[%s2 + $0x8] sm:$0xf]
    %v182 = vld [vmem:[%s2 + $0xc] sm:$0xf]
    %v183 = vld [vmem:[%s2 + $0x10] sm:$0xf]
    %v184 = vld [vmem:[%s2 + $0x14] sm:$0xf]
    %v185 = vld [vmem:[%s2 + $0x18] sm:$0xf]
    %v186 = vld [vmem:[%s2 + $0x1c] sm:$0xf]
    %v187 = vld [vmem:[%s2 + $0x20] sm:$0xf]
    %v188 = vld [vmem:[%s2 + $0x24] sm:$0xf]
    %v313 = vunpack.c.l.b16 %v55
    %v314 = vunpack.c.l.b16 %v56
    %v315 = vunpack.c.l.b16 %v57
    %v316 = vunpack.c.l.b16 %v58
    %v317 = vunpack.c.l.b16 %v59
    %v318 = vunpack.c.l.b16 %v60
    %v319 = vunpack.c.l.b16 %v61
    %v320 = vunpack.c.l.b16 %v62
    %v321 = vunpack.c.l.b16 %v63
    %v322 = vunpack.c.l.b16 %v64
    %v323 = vunpack.c.l.b16 %v65
    %v324 = vunpack.c.l.b16 %v66
    %v325 = vunpack.c.l.b16 %v67
    %v326 = vunpack.c.l.b16 %v68
    %v327 = vunpack.c.l.b16 %v69
    %v328 = vunpack.c.l.b16 %v70
    %v329 = vunpack.c.l.b16 %v71
    %v330 = vunpack.c.l.b16 %v72
    %v331 = vunpack.c.l.b16 %v73
    %v332 = vunpack.c.l.b16 %v74
    %v333 = vunpack.c.l.b16 %v75
    %v334 = vunpack.c.l.b16 %v76
    %v335 = vunpack.c.l.b16 %v77
    %v336 = vunpack.c.l.b16 %v78
    %v337 = vunpack.c.l.b16 %v79
    %v338 = vunpack.c.l.b16 %v80
    %v339 = vunpack.c.l.b16 %v81
    %v340 = vunpack.c.l.b16 %v82
    %v341 = vunpack.c.l.b16 %v83
    %v342 = vunpack.c.l.b16 %v84
    %v343 = vunpack.c.l.b16 %v85
    %v344 = vunpack.c.l.b16 %v86
    %v345 = vunpack.c.l.b16 %v87
    %v346 = vunpack.c.l.b16 %v88
    %v347 = vunpack.c.l.b16 %v89
    %v348 = vunpack.c.l.b16 %v90
    %v349 = vunpack.c.l.b16 %v91
    %v350 = vunpack.c.l.b16 %v92
    %v351 = vunpack.c.l.b16 %v93
    %v352 = vunpack.c.l.b16 %v94
    %v353 = vunpack.c.l.b16 %v95
    %v354 = vunpack.c.l.b16 %v96
    %v355 = vunpack.c.l.b16 %v97
    %v356 = vunpack.c.l.b16 %v98
    %v357 = vunpack.c.l.b16 %v99
    %v358 = vunpack.c.l.b16 %v100
    %v359 = vunpack.c.l.b16 %v101
    %v360 = vunpack.c.l.b16 %v102
    %v361 = vunpack.c.l.b16 %v103
    %v362 = vunpack.c.l.b16 %v104
    %v363 = vunpack.c.l.b16 %v105
    %v364 = vunpack.c.l.b16 %v106
    %v365 = vunpack.c.l.b16 %v107
    %v366 = vunpack.c.l.b16 %v108
    %v367 = vunpack.c.l.b16 %v109
    %v368 = vunpack.c.l.b16 %v110
    %v369 = vunpack.c.l.b16 %v111
    %v370 = vunpack.c.l.b16 %v112
    %v371 = vunpack.c.l.b16 %v113
    %v372 = vunpack.c.l.b16 %v114
    %v373 = vunpack.c.l.b16 %v115
    %v374 = vunpack.c.l.b16 %v116
    %v375 = vunpack.c.l.b16 %v117
    %v376 = vunpack.c.l.b16 %v118
    %v377 = vunpack.c.l.b16 %v119
    %v378 = vunpack.c.l.b16 %v120
    %v379 = vunpack.c.l.b16 %v121
    %v380 = vunpack.c.l.b16 %v122
    %v381 = vunpack.c.l.b16 %v123
    %v382 = vunpack.c.l.b16 %v124
    %v383 = vunpack.c.l.b16 %v125
    %v384 = vunpack.c.l.b16 %v126
    %v385 = vunpack.c.l.b16 %v127
    %v386 = vunpack.c.l.b16 %v128
    %v387 = vunpack.c.l.b16 %v129
    %v388 = vunpack.c.l.b16 %v130
    %v389 = vunpack.c.l.b16 %v131
    %v390 = vunpack.c.l.b16 %v132
    %v391 = vunpack.c.l.b16 %v133
    %v392 = vunpack.c.l.b16 %v134
    %v393 = vunpack.c.l.b16 %v135
    %v394 = vunpack.c.l.b16 %v136
    %v395 = vunpack.c.l.b16 %v137
    %v396 = vunpack.c.l.b16 %v138
    %v397 = vunpack.c.l.b16 %v139
    %v398 = vunpack.c.l.b16 %v140
    %v399 = vunpack.c.l.b16 %v141
    %v400 = vunpack.c.l.b16 %v142
    %v401 = vunpack.c.l.b16 %v143
    %v402 = vunpack.c.l.b16 %v144
    %v403 = vunpack.c.l.b16 %v145
    %v404 = vunpack.c.l.b16 %v146
    %v405 = vunpack.c.l.b16 %v147
    %v406 = vunpack.c.l.b16 %v148
    %v407 = vunpack.c.l.b16 %v149
    %v408 = vunpack.c.l.b16 %v150
    %v409 = vunpack.c.l.b16 %v151
    %v410 = vunpack.c.l.b16 %v152
    %v411 = vunpack.c.l.b16 %v153
    %v412 = vunpack.c.l.b16 %v154
    %v413 = vunpack.c.l.b16 %v155
    %v414 = vunpack.c.l.b16 %v156
    %v415 = vunpack.c.l.b16 %v157
    %v416 = vunpack.c.l.b16 %v158
    %v417 = vunpack.c.l.b16 %v159
    %v418 = vunpack.c.l.b16 %v160
    %v419 = vunpack.c.l.b16 %v161
    %v420 = vunpack.c.l.b16 %v162
    %v421 = vunpack.c.l.b16 %v163
    %v422 = vunpack.c.l.b16 %v164
    %v423 = vunpack.c.l.b16 %v165
    %v424 = vunpack.c.l.b16 %v166
    %v425 = vunpack.c.l.b16 %v167
    %v426 = vunpack.c.l.b16 %v168
    %v427 = vunpack.c.l.b16 %v169
    %v428 = vunpack.c.l.b16 %v170
    %v429 = vunpack.c.l.b16 %v171
    %v430 = vunpack.c.l.b16 %v172
    %v431 = vunpack.c.l.b16 %v173
    %v432 = vunpack.c.l.b16 %v174
    %v433 = vunpack.c.l.b16 %v175
    %v434 = vunpack.c.l.b16 %v176
    %v435 = vunpack.c.l.b16 %v177
    %v436 = vunpack.c.l.b16 %v178
    %v437 = vpack.c.b16 %v314, %v313
    %v438 = vpack.c.b16 %v316, %v315
    %v439 = vpack.c.b16 %v318, %v317
    %v440 = vpack.c.b16 %v320, %v319
    %v441 = vpack.c.b16 %v322, %v321
    %v442 = vpack.c.b16 %v324, %v323
    %v443 = vpack.c.b16 %v326, %v325
    %v444 = vpack.c.b16 %v328, %v327
    %v445 = vpack.c.b16 %v330, %v329
    %v446 = vpack.c.b16 %v332, %v331
    %v447 = vpack.c.b16 %v334, %v333
    %v448 = vpack.c.b16 %v336, %v335
    %v449 = vpack.c.b16 %v338, %v337
    %v450 = vpack.c.b16 %v340, %v339
    %v451 = vpack.c.b16 %v342, %v341
    %v452 = vpack.c.b16 %v344, %v343
    %v453 = vpack.c.b16 %v346, %v345
    %v454 = vpack.c.b16 %v348, %v347
    %v455 = vpack.c.b16 %v350, %v349
    %v456 = vpack.c.b16 %v352, %v351
    %v457 = vpack.c.b16 %v354, %v353
    %v458 = vpack.c.b16 %v356, %v355
    %v459 = vpack.c.b16 %v358, %v357
    %v460 = vpack.c.b16 %v360, %v359
    %v461 = vpack.c.b16 %v362, %v361
    %v462 = vpack.c.b16 %v364, %v363
    %v463 = vpack.c.b16 %v366, %v365
    %v464 = vpack.c.b16 %v368, %v367
    %v465 = vpack.c.b16 %v370, %v369
    %v466 = vpack.c.b16 %v372, %v371
    %v467 = vpack.c.b16 %v374, %v373
    %v468 = vpack.c.b16 %v376, %v375
    %v469 = vpack.c.b16 %v378, %v377
    %v470 = vpack.c.b16 %v380, %v379
    %v471 = vpack.c.b16 %v382, %v381
    %v472 = vpack.c.b16 %v384, %v383
    %v473 = vpack.c.b16 %v386, %v385
    %v474 = vpack.c.b16 %v388, %v387
    %v475 = vpack.c.b16 %v390, %v389
    %v476 = vpack.c.b16 %v392, %v391
    %v477 = vpack.c.b16 %v394, %v393
    %v478 = vpack.c.b16 %v396, %v395
    %v479 = vpack.c.b16 %v398, %v397
    %v480 = vpack.c.b16 %v400, %v399
    %v481 = vpack.c.b16 %v402, %v401
    %v482 = vpack.c.b16 %v404, %v403
    %v483 = vpack.c.b16 %v406, %v405
    %v484 = vpack.c.b16 %v408, %v407
    %v485 = vpack.c.b16 %v410, %v409
    %v486 = vpack.c.b16 %v412, %v411
    %v487 = vpack.c.b16 %v414, %v413
    %v488 = vpack.c.b16 %v416, %v415
    %v489 = vpack.c.b16 %v418, %v417
    %v490 = vpack.c.b16 %v420, %v419
    %v491 = vpack.c.b16 %v422, %v421
    %v492 = vpack.c.b16 %v424, %v423
    %v493 = vpack.c.b16 %v426, %v425
    %v494 = vpack.c.b16 %v428, %v427
    %v495 = vpack.c.b16 %v430, %v429
    %v496 = vpack.c.b16 %v432, %v431
    %v497 = vpack.c.b16 %v434, %v433
    %v498 = vpack.c.b16 %v436, %v435
    %v509 = vunpack.c.l.b16 %v179
    %v510 = vunpack.c.l.b16 %v180
    %v511 = vunpack.c.l.b16 %v181
    %v512 = vunpack.c.l.b16 %v182
    %v513 = vunpack.c.l.b16 %v183
    %v514 = vunpack.c.l.b16 %v184
    %v515 = vunpack.c.l.b16 %v185
    %v516 = vunpack.c.l.b16 %v186
    %v517 = vunpack.c.l.b16 %v187
    %v518 = vunpack.c.l.b16 %v188
    %v519 = vpack.c.b16 %v510, %v509
    %v520 = vpack.c.b16 %v512, %v511
    %v521 = vpack.c.b16 %v514, %v513
    %v522 = vpack.c.b16 %v516, %v515
    %v523 = vpack.c.b16 %v518, %v517
    %vm529 = vcmask 654336
    %v531 = vsel %vm529, %v437, 0
    %v534 = vsel %vm529, %v438, 0
    %v537 = vsel %vm529, %v439, 0
    %v540 = vsel %vm529, %v440, 0
    %v543 = vsel %vm529, %v441, 0
    %v546 = vsel %vm529, %v442, 0
    %v549 = vsel %vm529, %v443, 0
    %v552 = vsel %vm529, %v444, 0
    %v555 = vsel %vm529, %v445, 0
    %v558 = vsel %vm529, %v446, 0
    %v561 = vsel %vm529, %v447, 0
    %v564 = vsel %vm529, %v448, 0
    %v567 = vsel %vm529, %v449, 0
    %v570 = vsel %vm529, %v450, 0
    %v573 = vsel %vm529, %v451, 0
    %v576 = vsel %vm529, %v452, 0
    %v579 = vsel %vm529, %v453, 0
    %v582 = vsel %vm529, %v454, 0
    %v585 = vsel %vm529, %v455, 0
    %v588 = vsel %vm529, %v456, 0
    %v591 = vsel %vm529, %v457, 0
    %v594 = vsel %vm529, %v458, 0
    %v597 = vsel %vm529, %v459, 0
    %v600 = vsel %vm529, %v460, 0
    %v603 = vsel %vm529, %v461, 0
    %v606 = vsel %vm529, %v462, 0
    %v609 = vsel %vm529, %v463, 0
    %v612 = vsel %vm529, %v464, 0
    %v615 = vsel %vm529, %v465, 0
    %v618 = vsel %vm529, %v466, 0
    %v621 = vsel %vm529, %v467, 0
    %v624 = vsel %vm529, %v468, 0
    %v627 = vsel %vm529, %v469, 0
    %v630 = vsel %vm529, %v470, 0
    %v633 = vsel %vm529, %v471, 0
    %v636 = vsel %vm529, %v472, 0
    %v639 = vsel %vm529, %v473, 0
    %v642 = vsel %vm529, %v474, 0
    %v645 = vsel %vm529, %v475, 0
    %v648 = vsel %vm529, %v476, 0
    %v651 = vsel %vm529, %v477, 0
    %v654 = vsel %vm529, %v478, 0
    %v657 = vsel %vm529, %v479, 0
    %v660 = vsel %vm529, %v480, 0
    %v663 = vsel %vm529, %v481, 0
    %v666 = vsel %vm529, %v482, 0
    %v669 = vsel %vm529, %v483, 0
    %v672 = vsel %vm529, %v484, 0
    %v675 = vsel %vm529, %v485, 0
    %v678 = vsel %vm529, %v486, 0
    %v681 = vsel %vm529, %v487, 0
    %v684 = vsel %vm529, %v488, 0
    %v687 = vsel %vm529, %v489, 0
    %v690 = vsel %vm529, %v490, 0
    %v693 = vsel %vm529, %v491, 0
    %v696 = vsel %vm529, %v492, 0
    %v699 = vsel %vm529, %v493, 0
    %v702 = vsel %vm529, %v494, 0
    %v705 = vsel %vm529, %v495, 0
    %v708 = vsel %vm529, %v496, 0
    %v711 = vsel %vm529, %v497, 0
    %v714 = vsel %vm529, %v498, 0
    %716 = vmatpush.bf16.msra.mxu0 0
    %717 = vmatpush.bf16.msra.mxu0 0
    %718 = vmatpush.bf16.msra.mxu0 0
    %719 = vmatpush.bf16.msra.mxu0 %v523
    %720 = vmatpush.bf16.msra.mxu0 %v522
    %721 = vmatpush.bf16.msra.mxu0 %v521
    %722 = vmatpush.bf16.msra.mxu0 %v520
    %723 = vmatpush.bf16.msra.mxu0 %v519
    %724 = vmatmul.bf16.gmra.mxu0 %v531
    %v725 = vpop.f32.mrf.mxu0
    %v726 = vadd.f32 0.0, %v725
    %v727 = vpop.f32.mrf.mxu0
    %v728 = vadd.f32 0.0, %v727
    %729 = vmatmul.bf16.gmra.mxu0 %v534
    %v730 = vpop.f32.mrf.mxu0
    %v731 = vadd.f32 0.0, %v730
    %v732 = vpop.f32.mrf.mxu0
    %v733 = vadd.f32 0.0, %v732
    %734 = vmatmul.bf16.gmra.mxu0 %v537
    %v735 = vpop.f32.mrf.mxu0
    %v736 = vadd.f32 0.0, %v735
    %v737 = vpop.f32.mrf.mxu0
    %v738 = vadd.f32 0.0, %v737
    %739 = vmatmul.bf16.gmra.mxu0 %v540
    %v740 = vpop.f32.mrf.mxu0
    %v741 = vadd.f32 0.0, %v740
    %v742 = vpop.f32.mrf.mxu0
    %v743 = vadd.f32 0.0, %v742
    %744 = vmatmul.bf16.gmra.mxu0 %v543
    %v745 = vpop.f32.mrf.mxu0
    %v746 = vadd.f32 0.0, %v745
    %v747 = vpop.f32.mrf.mxu0
    %v748 = vadd.f32 0.0, %v747
    %749 = vmatmul.bf16.gmra.mxu0 %v546
    %v750 = vpop.f32.mrf.mxu0
    %v751 = vadd.f32 0.0, %v750
    %v752 = vpop.f32.mrf.mxu0
    %v753 = vadd.f32 0.0, %v752
    %754 = vmatmul.bf16.gmra.mxu0 %v549
    %v755 = vpop.f32.mrf.mxu0
    %v756 = vadd.f32 0.0, %v755
    %v757 = vpop.f32.mrf.mxu0
    %v758 = vadd.f32 0.0, %v757
    %759 = vmatmul.bf16.gmra.mxu0 %v552
    %v760 = vpop.f32.mrf.mxu0
    %v761 = vadd.f32 0.0, %v760
    %v762 = vpop.f32.mrf.mxu0
    %v763 = vadd.f32 0.0, %v762
    %764 = vmatmul.bf16.gmra.mxu0 %v555
    %v765 = vpop.f32.mrf.mxu0
    %v766 = vadd.f32 0.0, %v765
    %v767 = vpop.f32.mrf.mxu0
    %v768 = vadd.f32 0.0, %v767
    %769 = vmatmul.bf16.gmra.mxu0 %v558
    %v770 = vpop.f32.mrf.mxu0
    %v771 = vadd.f32 0.0, %v770
    %v772 = vpop.f32.mrf.mxu0
    %v773 = vadd.f32 0.0, %v772
    %774 = vmatmul.bf16.gmra.mxu0 %v561
    %v775 = vpop.f32.mrf.mxu0
    %v776 = vadd.f32 0.0, %v775
    %v777 = vpop.f32.mrf.mxu0
    %v778 = vadd.f32 0.0, %v777
    %779 = vmatmul.bf16.gmra.mxu0 %v564
    %v780 = vpop.f32.mrf.mxu0
    %v781 = vadd.f32 0.0, %v780
    %v782 = vpop.f32.mrf.mxu0
    %v783 = vadd.f32 0.0, %v782
    %784 = vmatmul.bf16.gmra.mxu0 %v567
    %v785 = vpop.f32.mrf.mxu0
    %v786 = vadd.f32 0.0, %v785
    %v787 = vpop.f32.mrf.mxu0
    %v788 = vadd.f32 0.0, %v787
    %789 = vmatmul.bf16.gmra.mxu0 %v570
    %v790 = vpop.f32.mrf.mxu0
    %v791 = vadd.f32 0.0, %v790
    %v792 = vpop.f32.mrf.mxu0
    %v793 = vadd.f32 0.0, %v792
    %794 = vmatmul.bf16.gmra.mxu0 %v573
    %v795 = vpop.f32.mrf.mxu0
    %v796 = vadd.f32 0.0, %v795
    %v797 = vpop.f32.mrf.mxu0
    %v798 = vadd.f32 0.0, %v797
    %799 = vmatmul.bf16.gmra.mxu0 %v576
    %v800 = vpop.f32.mrf.mxu0
    %v801 = vadd.f32 0.0, %v800
    %v802 = vpop.f32.mrf.mxu0
    %v803 = vadd.f32 0.0, %v802
    %804 = vmatmul.bf16.gmra.mxu0 %v579
    %v805 = vpop.f32.mrf.mxu0
    %v806 = vadd.f32 0.0, %v805
    %v807 = vpop.f32.mrf.mxu0
    %v808 = vadd.f32 0.0, %v807
    %809 = vmatmul.bf16.gmra.mxu0 %v582
    %v810 = vpop.f32.mrf.mxu0
    %v811 = vadd.f32 0.0, %v810
    %v812 = vpop.f32.mrf.mxu0
    %v813 = vadd.f32 0.0, %v812
    %814 = vmatmul.bf16.gmra.mxu0 %v585
    %v815 = vpop.f32.mrf.mxu0
    %v816 = vadd.f32 0.0, %v815
    %v817 = vpop.f32.mrf.mxu0
    %v818 = vadd.f32 0.0, %v817
    %819 = vmatmul.bf16.gmra.mxu0 %v588
    %v820 = vpop.f32.mrf.mxu0
    %v821 = vadd.f32 0.0, %v820
    %v822 = vpop.f32.mrf.mxu0
    %v823 = vadd.f32 0.0, %v822
    %824 = vmatmul.bf16.gmra.mxu0 %v591
    %v825 = vpop.f32.mrf.mxu0
    %v826 = vadd.f32 0.0, %v825
    %v827 = vpop.f32.mrf.mxu0
    %v828 = vadd.f32 0.0, %v827
    %829 = vmatmul.bf16.gmra.mxu0 %v594
    %v830 = vpop.f32.mrf.mxu0
    %v831 = vadd.f32 0.0, %v830
    %v832 = vpop.f32.mrf.mxu0
    %v833 = vadd.f32 0.0, %v832
    %834 = vmatmul.bf16.gmra.mxu0 %v597
    %v835 = vpop.f32.mrf.mxu0
    %v836 = vadd.f32 0.0, %v835
    %v837 = vpop.f32.mrf.mxu0
    %v838 = vadd.f32 0.0, %v837
    %839 = vmatmul.bf16.gmra.mxu0 %v600
    %v840 = vpop.f32.mrf.mxu0
    %v841 = vadd.f32 0.0, %v840
    %v842 = vpop.f32.mrf.mxu0
    %v843 = vadd.f32 0.0, %v842
    %844 = vmatmul.bf16.gmra.mxu0 %v603
    %v845 = vpop.f32.mrf.mxu0
    %v846 = vadd.f32 0.0, %v845
    %v847 = vpop.f32.mrf.mxu0
    %v848 = vadd.f32 0.0, %v847
    %849 = vmatmul.bf16.gmra.mxu0 %v606
    %v850 = vpop.f32.mrf.mxu0
    %v851 = vadd.f32 0.0, %v850
    %v852 = vpop.f32.mrf.mxu0
    %v853 = vadd.f32 0.0, %v852
    %854 = vmatmul.bf16.gmra.mxu0 %v609
    %v855 = vpop.f32.mrf.mxu0
    %v856 = vadd.f32 0.0, %v855
    %v857 = vpop.f32.mrf.mxu0
    %v858 = vadd.f32 0.0, %v857
    %859 = vmatmul.bf16.gmra.mxu0 %v612
    %v860 = vpop.f32.mrf.mxu0
    %v861 = vadd.f32 0.0, %v860
    %v862 = vpop.f32.mrf.mxu0
    %v863 = vadd.f32 0.0, %v862
    %864 = vmatmul.bf16.gmra.mxu0 %v615
    %v865 = vpop.f32.mrf.mxu0
    %v866 = vadd.f32 0.0, %v865
    %v867 = vpop.f32.mrf.mxu0
    %v868 = vadd.f32 0.0, %v867
    %869 = vmatmul.bf16.gmra.mxu0 %v618
    %v870 = vpop.f32.mrf.mxu0
    %v871 = vadd.f32 0.0, %v870
    %v872 = vpop.f32.mrf.mxu0
    %v873 = vadd.f32 0.0, %v872
    %874 = vmatmul.bf16.gmra.mxu0 %v621
    %v875 = vpop.f32.mrf.mxu0
    %v876 = vadd.f32 0.0, %v875
    %v877 = vpop.f32.mrf.mxu0
    %v878 = vadd.f32 0.0, %v877
    %879 = vmatmul.bf16.gmra.mxu0 %v624
    %v880 = vpop.f32.mrf.mxu0
    %v881 = vadd.f32 0.0, %v880
    %v882 = vpop.f32.mrf.mxu0
    %v883 = vadd.f32 0.0, %v882
    %884 = vmatmul.bf16.gmra.mxu0 %v627
    %v885 = vpop.f32.mrf.mxu0
    %v886 = vadd.f32 0.0, %v885
    %v887 = vpop.f32.mrf.mxu0
    %v888 = vadd.f32 0.0, %v887
    %889 = vmatmul.bf16.gmra.mxu0 %v630
    %v890 = vpop.f32.mrf.mxu0
    %v891 = vadd.f32 0.0, %v890
    %v892 = vpop.f32.mrf.mxu0
    %v893 = vadd.f32 0.0, %v892
    %894 = vmatmul.bf16.gmra.mxu0 %v633
    %v895 = vpop.f32.mrf.mxu0
    %v896 = vadd.f32 0.0, %v895
    %v897 = vpop.f32.mrf.mxu0
    %v898 = vadd.f32 0.0, %v897
    %899 = vmatmul.bf16.gmra.mxu0 %v636
    %v900 = vpop.f32.mrf.mxu0
    %v901 = vadd.f32 0.0, %v900
    %v902 = vpop.f32.mrf.mxu0
    %v903 = vadd.f32 0.0, %v902
    %904 = vmatmul.bf16.gmra.mxu0 %v639
    %v905 = vpop.f32.mrf.mxu0
    %v906 = vadd.f32 0.0, %v905
    %v907 = vpop.f32.mrf.mxu0
    %v908 = vadd.f32 0.0, %v907
    %909 = vmatmul.bf16.gmra.mxu0 %v642
    %v910 = vpop.f32.mrf.mxu0
    %v911 = vadd.f32 0.0, %v910
    %v912 = vpop.f32.mrf.mxu0
    %v913 = vadd.f32 0.0, %v912
    %914 = vmatmul.bf16.gmra.mxu0 %v645
    %v915 = vpop.f32.mrf.mxu0
    %v916 = vadd.f32 0.0, %v915
    %v917 = vpop.f32.mrf.mxu0
    %v918 = vadd.f32 0.0, %v917
    %919 = vmatmul.bf16.gmra.mxu0 %v648
    %v920 = vpop.f32.mrf.mxu0
    %v921 = vadd.f32 0.0, %v920
    %v922 = vpop.f32.mrf.mxu0
    %v923 = vadd.f32 0.0, %v922
    %924 = vmatmul.bf16.gmra.mxu0 %v651
    %v925 = vpop.f32.mrf.mxu0
    %v926 = vadd.f32 0.0, %v925
    %v927 = vpop.f32.mrf.mxu0
    %v928 = vadd.f32 0.0, %v927
    %929 = vmatmul.bf16.gmra.mxu0 %v654
    %v930 = vpop.f32.mrf.mxu0
    %v931 = vadd.f32 0.0, %v930
    %v932 = vpop.f32.mrf.mxu0
    %v933 = vadd.f32 0.0, %v932
    %934 = vmatmul.bf16.gmra.mxu0 %v657
    %v935 = vpop.f32.mrf.mxu0
    %v936 = vadd.f32 0.0, %v935
    %v937 = vpop.f32.mrf.mxu0
    %v938 = vadd.f32 0.0, %v937
    %939 = vmatmul.bf16.gmra.mxu0 %v660
    %v940 = vpop.f32.mrf.mxu0
    %v941 = vadd.f32 0.0, %v940
    %v942 = vpop.f32.mrf.mxu0
    %v943 = vadd.f32 0.0, %v942
    %944 = vmatmul.bf16.gmra.mxu0 %v663
    %v945 = vpop.f32.mrf.mxu0
    %v946 = vadd.f32 0.0, %v945
    %v947 = vpop.f32.mrf.mxu0
    %v948 = vadd.f32 0.0, %v947
    %949 = vmatmul.bf16.gmra.mxu0 %v666
    %v950 = vpop.f32.mrf.mxu0
    %v951 = vadd.f32 0.0, %v950
    %v952 = vpop.f32.mrf.mxu0
    %v953 = vadd.f32 0.0, %v952
    %954 = vmatmul.bf16.gmra.mxu0 %v669
    %v955 = vpop.f32.mrf.mxu0
    %v956 = vadd.f32 0.0, %v955
    %v957 = vpop.f32.mrf.mxu0
    %v958 = vadd.f32 0.0, %v957
    %959 = vmatmul.bf16.gmra.mxu0 %v672
    %v960 = vpop.f32.mrf.mxu0
    %v961 = vadd.f32 0.0, %v960
    %v962 = vpop.f32.mrf.mxu0
    %v963 = vadd.f32 0.0, %v962
    %964 = vmatmul.bf16.gmra.mxu0 %v675
    %v965 = vpop.f32.mrf.mxu0
    %v966 = vadd.f32 0.0, %v965
    %v967 = vpop.f32.mrf.mxu0
    %v968 = vadd.f32 0.0, %v967
    %969 = vmatmul.bf16.gmra.mxu0 %v678
    %v970 = vpop.f32.mrf.mxu0
    %v971 = vadd.f32 0.0, %v970
    %v972 = vpop.f32.mrf.mxu0
    %v973 = vadd.f32 0.0, %v972
    %974 = vmatmul.bf16.gmra.mxu0 %v681
    %v975 = vpop.f32.mrf.mxu0
    %v976 = vadd.f32 0.0, %v975
    %v977 = vpop.f32.mrf.mxu0
    %v978 = vadd.f32 0.0, %v977
    %979 = vmatmul.bf16.gmra.mxu0 %v684
    %v980 = vpop.f32.mrf.mxu0
    %v981 = vadd.f32 0.0, %v980
    %v982 = vpop.f32.mrf.mxu0
    %v983 = vadd.f32 0.0, %v982
    %984 = vmatmul.bf16.gmra.mxu0 %v687
    %v985 = vpop.f32.mrf.mxu0
    %v986 = vadd.f32 0.0, %v985
    %v987 = vpop.f32.mrf.mxu0
    %v988 = vadd.f32 0.0, %v987
    %989 = vmatmul.bf16.gmra.mxu0 %v690
    %v990 = vpop.f32.mrf.mxu0
    %v991 = vadd.f32 0.0, %v990
    %v992 = vpop.f32.mrf.mxu0
    %v993 = vadd.f32 0.0, %v992
    %994 = vmatmul.bf16.gmra.mxu0 %v693
    %v995 = vpop.f32.mrf.mxu0
    %v996 = vadd.f32 0.0, %v995
    %v997 = vpop.f32.mrf.mxu0
    %v998 = vadd.f32 0.0, %v997
    %999 = vmatmul.bf16.gmra.mxu0 %v696
    %v1000 = vpop.f32.mrf.mxu0
    %v1001 = vadd.f32 0.0, %v1000
    %v1002 = vpop.f32.mrf.mxu0
    %v1003 = vadd.f32 0.0, %v1002
    %1004 = vmatmul.bf16.gmra.mxu0 %v699
    %v1005 = vpop.f32.mrf.mxu0
    %v1006 = vadd.f32 0.0, %v1005
    %v1007 = vpop.f32.mrf.mxu0
    %v1008 = vadd.f32 0.0, %v1007
    %1009 = vmatmul.bf16.gmra.mxu0 %v702
    %v1010 = vpop.f32.mrf.mxu0
    %v1011 = vadd.f32 0.0, %v1010
    %v1012 = vpop.f32.mrf.mxu0
    %v1013 = vadd.f32 0.0, %v1012
    %1014 = vmatmul.bf16.gmra.mxu0 %v705
    %v1015 = vpop.f32.mrf.mxu0
    %v1016 = vadd.f32 0.0, %v1015
    %v1017 = vpop.f32.mrf.mxu0
    %v1018 = vadd.f32 0.0, %v1017
    %1019 = vmatmul.bf16.gmra.mxu0 %v708
    %v1020 = vpop.f32.mrf.mxu0
    %v1021 = vadd.f32 0.0, %v1020
    %v1022 = vpop.f32.mrf.mxu0
    %v1023 = vadd.f32 0.0, %v1022
    %1024 = vmatmul.bf16.gmra.mxu0 %v711
    %v1025 = vpop.f32.mrf.mxu0
    %v1026 = vadd.f32 0.0, %v1025
    %v1027 = vpop.f32.mrf.mxu0
    %v1028 = vadd.f32 0.0, %v1027
    %1029 = vmatmul.bf16.gmra.mxu0 %v714
    %v1030 = vpop.f32.mrf.mxu0
    %v1031 = vadd.f32 0.0, %v1030
    %v1032 = vpop.f32.mrf.mxu0
    %v1033 = vadd.f32 0.0, %v1032
    %1034 = vdwg.mxu0
    %v1035 = vld [vmem:[%s3] sm:$0x1]
    %v1037 = vperm.slane %v1035, 0
    %v1039 = vmul.f32 %v726, %v1037
    %v1040 = vmul.f32 %v728, %v1037
    %v1041 = vmul.f32 %v731, %v1037
    %v1042 = vmul.f32 %v733, %v1037
    %v1043 = vmul.f32 %v736, %v1037
    %v1044 = vmul.f32 %v738, %v1037
    %v1045 = vmul.f32 %v741, %v1037
    %v1046 = vmul.f32 %v743, %v1037
    %v1047 = vmul.f32 %v746, %v1037
    %v1048 = vmul.f32 %v748, %v1037
    %v1049 = vmul.f32 %v751, %v1037
    %v1050 = vmul.f32 %v753, %v1037
    %v1051 = vmul.f32 %v756, %v1037
    %v1052 = vmul.f32 %v758, %v1037
    %v1053 = vmul.f32 %v761, %v1037
    %v1054 = vmul.f32 %v763, %v1037
    %v1055 = vmul.f32 %v766, %v1037
    %v1056 = vmul.f32 %v768, %v1037
    %v1057 = vmul.f32 %v771, %v1037
    %v1058 = vmul.f32 %v773, %v1037
    %v1059 = vmul.f32 %v776, %v1037
    %v1060 = vmul.f32 %v778, %v1037
    %v1061 = vmul.f32 %v781, %v1037
    %v1062 = vmul.f32 %v783, %v1037
    %v1063 = vmul.f32 %v786, %v1037
    %v1064 = vmul.f32 %v788, %v1037
    %v1065 = vmul.f32 %v791, %v1037
    %v1066 = vmul.f32 %v793, %v1037
    %v1067 = vmul.f32 %v796, %v1037
    %v1068 = vmul.f32 %v798, %v1037
    %v1069 = vmul.f32 %v801, %v1037
    %v1070 = vmul.f32 %v803, %v1037
    %v1071 = vmul.f32 %v806, %v1037
    %v1072 = vmul.f32 %v808, %v1037
    %v1073 = vmul.f32 %v811, %v1037
    %v1074 = vmul.f32 %v813, %v1037
    %v1075 = vmul.f32 %v816, %v1037
    %v1076 = vmul.f32 %v818, %v1037
    %v1077 = vmul.f32 %v821, %v1037
    %v1078 = vmul.f32 %v823, %v1037
    %v1079 = vmul.f32 %v826, %v1037
    %v1080 = vmul.f32 %v828, %v1037
    %v1081 = vmul.f32 %v831, %v1037
    %v1082 = vmul.f32 %v833, %v1037
    %v1083 = vmul.f32 %v836, %v1037
    %v1084 = vmul.f32 %v838, %v1037
    %v1085 = vmul.f32 %v841, %v1037
    %v1086 = vmul.f32 %v843, %v1037
    %v1087 = vmul.f32 %v846, %v1037
    %v1088 = vmul.f32 %v848, %v1037
    %v1089 = vmul.f32 %v851, %v1037
    %v1090 = vmul.f32 %v853, %v1037
    %v1091 = vmul.f32 %v856, %v1037
    %v1092 = vmul.f32 %v858, %v1037
    %v1093 = vmul.f32 %v861, %v1037
    %v1094 = vmul.f32 %v863, %v1037
    %v1095 = vmul.f32 %v866, %v1037
    %v1096 = vmul.f32 %v868, %v1037
    %v1097 = vmul.f32 %v871, %v1037
    %v1098 = vmul.f32 %v873, %v1037
    %v1099 = vmul.f32 %v876, %v1037
    %v1100 = vmul.f32 %v878, %v1037
    %v1101 = vmul.f32 %v881, %v1037
    %v1102 = vmul.f32 %v883, %v1037
    %v1103 = vmul.f32 %v886, %v1037
    %v1104 = vmul.f32 %v888, %v1037
    %v1105 = vmul.f32 %v891, %v1037
    %v1106 = vmul.f32 %v893, %v1037
    %v1107 = vmul.f32 %v896, %v1037
    %v1108 = vmul.f32 %v898, %v1037
    %v1109 = vmul.f32 %v901, %v1037
    %v1110 = vmul.f32 %v903, %v1037
    %v1111 = vmul.f32 %v906, %v1037
    %v1112 = vmul.f32 %v908, %v1037
    %v1113 = vmul.f32 %v911, %v1037
    %v1114 = vmul.f32 %v913, %v1037
    %v1115 = vmul.f32 %v916, %v1037
    %v1116 = vmul.f32 %v918, %v1037
    %v1117 = vmul.f32 %v921, %v1037
    %v1118 = vmul.f32 %v923, %v1037
    %v1119 = vmul.f32 %v926, %v1037
    %v1120 = vmul.f32 %v928, %v1037
    %v1121 = vmul.f32 %v931, %v1037
    %v1122 = vmul.f32 %v933, %v1037
    %v1123 = vmul.f32 %v936, %v1037
    %v1124 = vmul.f32 %v938, %v1037
    %v1125 = vmul.f32 %v941, %v1037
    %v1126 = vmul.f32 %v943, %v1037
    %v1127 = vmul.f32 %v946, %v1037
    %v1128 = vmul.f32 %v948, %v1037
    %v1129 = vmul.f32 %v951, %v1037
    %v1130 = vmul.f32 %v953, %v1037
    %v1131 = vmul.f32 %v956, %v1037
    %v1132 = vmul.f32 %v958, %v1037
    %v1133 = vmul.f32 %v961, %v1037
    %v1134 = vmul.f32 %v963, %v1037
    %v1135 = vmul.f32 %v966, %v1037
    %v1136 = vmul.f32 %v968, %v1037
    %v1137 = vmul.f32 %v971, %v1037
    %v1138 = vmul.f32 %v973, %v1037
    %v1139 = vmul.f32 %v976, %v1037
    %v1140 = vmul.f32 %v978, %v1037
    %v1141 = vmul.f32 %v981, %v1037
    %v1142 = vmul.f32 %v983, %v1037
    %v1143 = vmul.f32 %v986, %v1037
    %v1144 = vmul.f32 %v988, %v1037
    %v1145 = vmul.f32 %v991, %v1037
    %v1146 = vmul.f32 %v993, %v1037
    %v1147 = vmul.f32 %v996, %v1037
    %v1148 = vmul.f32 %v998, %v1037
    %v1149 = vmul.f32 %v1001, %v1037
    %v1150 = vmul.f32 %v1003, %v1037
    %v1151 = vmul.f32 %v1006, %v1037
    %v1152 = vmul.f32 %v1008, %v1037
    %v1153 = vmul.f32 %v1011, %v1037
    %v1154 = vmul.f32 %v1013, %v1037
    %v1155 = vmul.f32 %v1016, %v1037
    %v1156 = vmul.f32 %v1018, %v1037
    %v1157 = vmul.f32 %v1021, %v1037
    %v1158 = vmul.f32 %v1023, %v1037
    %v1159 = vmul.f32 %v1026, %v1037
    %v1160 = vmul.f32 %v1028, %v1037
    %v1161 = vmul.f32 %v1031, %v1037
    %v1162 = vmul.f32 %v1033, %v1037
    %v1163 = vld [vmem:[%s4] sm:$0x1]
    %v1165 = vperm.slane %v1163, 0
    %v1167 = vadd.f32 %v1039, %v1165
    %v1168 = vadd.f32 %v1040, %v1165
    %v1169 = vadd.f32 %v1041, %v1165
    %v1170 = vadd.f32 %v1042, %v1165
    %v1171 = vadd.f32 %v1043, %v1165
    %v1172 = vadd.f32 %v1044, %v1165
    %v1173 = vadd.f32 %v1045, %v1165
    %v1174 = vadd.f32 %v1046, %v1165
    %v1175 = vadd.f32 %v1047, %v1165
    %v1176 = vadd.f32 %v1048, %v1165
    %v1177 = vadd.f32 %v1049, %v1165
    %v1178 = vadd.f32 %v1050, %v1165
    %v1179 = vadd.f32 %v1051, %v1165
    %v1180 = vadd.f32 %v1052, %v1165
    %v1181 = vadd.f32 %v1053, %v1165
    %v1182 = vadd.f32 %v1054, %v1165
    %v1183 = vadd.f32 %v1055, %v1165
    %v1184 = vadd.f32 %v1056, %v1165
    %v1185 = vadd.f32 %v1057, %v1165
    %v1186 = vadd.f32 %v1058, %v1165
    %v1187 = vadd.f32 %v1059, %v1165
    %v1188 = vadd.f32 %v1060, %v1165
    %v1189 = vadd.f32 %v1061, %v1165
    %v1190 = vadd.f32 %v1062, %v1165
    %v1191 = vadd.f32 %v1063, %v1165
    %v1192 = vadd.f32 %v1064, %v1165
    %v1193 = vadd.f32 %v1065, %v1165
    %v1194 = vadd.f32 %v1066, %v1165
    %v1195 = vadd.f32 %v1067, %v1165
    %v1196 = vadd.f32 %v1068, %v1165
    %v1197 = vadd.f32 %v1069, %v1165
    %v1198 = vadd.f32 %v1070, %v1165
    %v1199 = vadd.f32 %v1071, %v1165
    %v1200 = vadd.f32 %v1072, %v1165
    %v1201 = vadd.f32 %v1073, %v1165
    %v1202 = vadd.f32 %v1074, %v1165
    %v1203 = vadd.f32 %v1075, %v1165
    %v1204 = vadd.f32 %v1076, %v1165
    %v1205 = vadd.f32 %v1077, %v1165
    %v1206 = vadd.f32 %v1078, %v1165
    %v1207 = vadd.f32 %v1079, %v1165
    %v1208 = vadd.f32 %v1080, %v1165
    %v1209 = vadd.f32 %v1081, %v1165
    %v1210 = vadd.f32 %v1082, %v1165
    %v1211 = vadd.f32 %v1083, %v1165
    %v1212 = vadd.f32 %v1084, %v1165
    %v1213 = vadd.f32 %v1085, %v1165
    %v1214 = vadd.f32 %v1086, %v1165
    %v1215 = vadd.f32 %v1087, %v1165
    %v1216 = vadd.f32 %v1088, %v1165
    %v1217 = vadd.f32 %v1089, %v1165
    %v1218 = vadd.f32 %v1090, %v1165
    %v1219 = vadd.f32 %v1091, %v1165
    %v1220 = vadd.f32 %v1092, %v1165
    %v1221 = vadd.f32 %v1093, %v1165
    %v1222 = vadd.f32 %v1094, %v1165
    %v1223 = vadd.f32 %v1095, %v1165
    %v1224 = vadd.f32 %v1096, %v1165
    %v1225 = vadd.f32 %v1097, %v1165
    %v1226 = vadd.f32 %v1098, %v1165
    %v1227 = vadd.f32 %v1099, %v1165
    %v1228 = vadd.f32 %v1100, %v1165
    %v1229 = vadd.f32 %v1101, %v1165
    %v1230 = vadd.f32 %v1102, %v1165
    %v1231 = vadd.f32 %v1103, %v1165
    %v1232 = vadd.f32 %v1104, %v1165
    %v1233 = vadd.f32 %v1105, %v1165
    %v1234 = vadd.f32 %v1106, %v1165
    %v1235 = vadd.f32 %v1107, %v1165
    %v1236 = vadd.f32 %v1108, %v1165
    %v1237 = vadd.f32 %v1109, %v1165
    %v1238 = vadd.f32 %v1110, %v1165
    %v1239 = vadd.f32 %v1111, %v1165
    %v1240 = vadd.f32 %v1112, %v1165
    %v1241 = vadd.f32 %v1113, %v1165
    %v1242 = vadd.f32 %v1114, %v1165
    %v1243 = vadd.f32 %v1115, %v1165
    %v1244 = vadd.f32 %v1116, %v1165
    %v1245 = vadd.f32 %v1117, %v1165
    %v1246 = vadd.f32 %v1118, %v1165
    %v1247 = vadd.f32 %v1119, %v1165
    %v1248 = vadd.f32 %v1120, %v1165
    %v1249 = vadd.f32 %v1121, %v1165
    %v1250 = vadd.f32 %v1122, %v1165
    %v1251 = vadd.f32 %v1123, %v1165
    %v1252 = vadd.f32 %v1124, %v1165
    %v1253 = vadd.f32 %v1125, %v1165
    %v1254 = vadd.f32 %v1126, %v1165
    %v1255 = vadd.f32 %v1127, %v1165
    %v1256 = vadd.f32 %v1128, %v1165
    %v1257 = vadd.f32 %v1129, %v1165
    %v1258 = vadd.f32 %v1130, %v1165
    %v1259 = vadd.f32 %v1131, %v1165
    %v1260 = vadd.f32 %v1132, %v1165
    %v1261 = vadd.f32 %v1133, %v1165
    %v1262 = vadd.f32 %v1134, %v1165
    %v1263 = vadd.f32 %v1135, %v1165
    %v1264 = vadd.f32 %v1136, %v1165
    %v1265 = vadd.f32 %v1137, %v1165
    %v1266 = vadd.f32 %v1138, %v1165
    %v1267 = vadd.f32 %v1139, %v1165
    %v1268 = vadd.f32 %v1140, %v1165
    %v1269 = vadd.f32 %v1141, %v1165
    %v1270 = vadd.f32 %v1142, %v1165
    %v1271 = vadd.f32 %v1143, %v1165
    %v1272 = vadd.f32 %v1144, %v1165
    %v1273 = vadd.f32 %v1145, %v1165
    %v1274 = vadd.f32 %v1146, %v1165
    %v1275 = vadd.f32 %v1147, %v1165
    %v1276 = vadd.f32 %v1148, %v1165
    %v1277 = vadd.f32 %v1149, %v1165
    %v1278 = vadd.f32 %v1150, %v1165
    %v1279 = vadd.f32 %v1151, %v1165
    %v1280 = vadd.f32 %v1152, %v1165
    %v1281 = vadd.f32 %v1153, %v1165
    %v1282 = vadd.f32 %v1154, %v1165
    %v1283 = vadd.f32 %v1155, %v1165
    %v1284 = vadd.f32 %v1156, %v1165
    %v1285 = vadd.f32 %v1157, %v1165
    %v1286 = vadd.f32 %v1158, %v1165
    %v1287 = vadd.f32 %v1159, %v1165
    %v1288 = vadd.f32 %v1160, %v1165
    %v1289 = vadd.f32 %v1161, %v1165
    %v1290 = vadd.f32 %v1162, %v1165
    %v1291 = vmax.f32 %v1167, 0.0
    %v1292 = vmax.f32 %v1168, 0.0
    %v1293 = vmax.f32 %v1169, 0.0
    %v1294 = vmax.f32 %v1170, 0.0
    %v1295 = vmax.f32 %v1171, 0.0
    %v1296 = vmax.f32 %v1172, 0.0
    %v1297 = vmax.f32 %v1173, 0.0
    %v1298 = vmax.f32 %v1174, 0.0
    %v1299 = vmax.f32 %v1175, 0.0
    %v1300 = vmax.f32 %v1176, 0.0
    %v1301 = vmax.f32 %v1177, 0.0
    %v1302 = vmax.f32 %v1178, 0.0
    %v1303 = vmax.f32 %v1179, 0.0
    %v1304 = vmax.f32 %v1180, 0.0
    %v1305 = vmax.f32 %v1181, 0.0
    %v1306 = vmax.f32 %v1182, 0.0
    %v1307 = vmax.f32 %v1183, 0.0
    %v1308 = vmax.f32 %v1184, 0.0
    %v1309 = vmax.f32 %v1185, 0.0
    %v1310 = vmax.f32 %v1186, 0.0
    %v1311 = vmax.f32 %v1187, 0.0
    %v1312 = vmax.f32 %v1188, 0.0
    %v1313 = vmax.f32 %v1189, 0.0
    %v1314 = vmax.f32 %v1190, 0.0
    %v1315 = vmax.f32 %v1191, 0.0
    %v1316 = vmax.f32 %v1192, 0.0
    %v1317 = vmax.f32 %v1193, 0.0
    %v1318 = vmax.f32 %v1194, 0.0
    %v1319 = vmax.f32 %v1195, 0.0
    %v1320 = vmax.f32 %v1196, 0.0
    %v1321 = vmax.f32 %v1197, 0.0
    %v1322 = vmax.f32 %v1198, 0.0
    %v1323 = vmax.f32 %v1199, 0.0
    %v1324 = vmax.f32 %v1200, 0.0
    %v1325 = vmax.f32 %v1201, 0.0
    %v1326 = vmax.f32 %v1202, 0.0
    %v1327 = vmax.f32 %v1203, 0.0
    %v1328 = vmax.f32 %v1204, 0.0
    %v1329 = vmax.f32 %v1205, 0.0
    %v1330 = vmax.f32 %v1206, 0.0
    %v1331 = vmax.f32 %v1207, 0.0
    %v1332 = vmax.f32 %v1208, 0.0
    %v1333 = vmax.f32 %v1209, 0.0
    %v1334 = vmax.f32 %v1210, 0.0
    %v1335 = vmax.f32 %v1211, 0.0
    %v1336 = vmax.f32 %v1212, 0.0
    %v1337 = vmax.f32 %v1213, 0.0
    %v1338 = vmax.f32 %v1214, 0.0
    %v1339 = vmax.f32 %v1215, 0.0
    %v1340 = vmax.f32 %v1216, 0.0
    %v1341 = vmax.f32 %v1217, 0.0
    %v1342 = vmax.f32 %v1218, 0.0
    %v1343 = vmax.f32 %v1219, 0.0
    %v1344 = vmax.f32 %v1220, 0.0
    %v1345 = vmax.f32 %v1221, 0.0
    %v1346 = vmax.f32 %v1222, 0.0
    %v1347 = vmax.f32 %v1223, 0.0
    %v1348 = vmax.f32 %v1224, 0.0
    %v1349 = vmax.f32 %v1225, 0.0
    %v1350 = vmax.f32 %v1226, 0.0
    %v1351 = vmax.f32 %v1227, 0.0
    %v1352 = vmax.f32 %v1228, 0.0
    %v1353 = vmax.f32 %v1229, 0.0
    %v1354 = vmax.f32 %v1230, 0.0
    %v1355 = vmax.f32 %v1231, 0.0
    %v1356 = vmax.f32 %v1232, 0.0
    %v1357 = vmax.f32 %v1233, 0.0
    %v1358 = vmax.f32 %v1234, 0.0
    %v1359 = vmax.f32 %v1235, 0.0
    %v1360 = vmax.f32 %v1236, 0.0
    %v1361 = vmax.f32 %v1237, 0.0
    %v1362 = vmax.f32 %v1238, 0.0
    %v1363 = vmax.f32 %v1239, 0.0
    %v1364 = vmax.f32 %v1240, 0.0
    %v1365 = vmax.f32 %v1241, 0.0
    %v1366 = vmax.f32 %v1242, 0.0
    %v1367 = vmax.f32 %v1243, 0.0
    %v1368 = vmax.f32 %v1244, 0.0
    %v1369 = vmax.f32 %v1245, 0.0
    %v1370 = vmax.f32 %v1246, 0.0
    %v1371 = vmax.f32 %v1247, 0.0
    %v1372 = vmax.f32 %v1248, 0.0
    %v1373 = vmax.f32 %v1249, 0.0
    %v1374 = vmax.f32 %v1250, 0.0
    %v1375 = vmax.f32 %v1251, 0.0
    %v1376 = vmax.f32 %v1252, 0.0
    %v1377 = vmax.f32 %v1253, 0.0
    %v1378 = vmax.f32 %v1254, 0.0
    %v1379 = vmax.f32 %v1255, 0.0
    %v1380 = vmax.f32 %v1256, 0.0
    %v1381 = vmax.f32 %v1257, 0.0
    %v1382 = vmax.f32 %v1258, 0.0
    %v1383 = vmax.f32 %v1259, 0.0
    %v1384 = vmax.f32 %v1260, 0.0
    %v1385 = vmax.f32 %v1261, 0.0
    %v1386 = vmax.f32 %v1262, 0.0
    %v1387 = vmax.f32 %v1263, 0.0
    %v1388 = vmax.f32 %v1264, 0.0
    %v1389 = vmax.f32 %v1265, 0.0
    %v1390 = vmax.f32 %v1266, 0.0
    %v1391 = vmax.f32 %v1267, 0.0
    %v1392 = vmax.f32 %v1268, 0.0
    %v1393 = vmax.f32 %v1269, 0.0
    %v1394 = vmax.f32 %v1270, 0.0
    %v1395 = vmax.f32 %v1271, 0.0
    %v1396 = vmax.f32 %v1272, 0.0
    %v1397 = vmax.f32 %v1273, 0.0
    %v1398 = vmax.f32 %v1274, 0.0
    %v1399 = vmax.f32 %v1275, 0.0
    %v1400 = vmax.f32 %v1276, 0.0
    %v1401 = vmax.f32 %v1277, 0.0
    %v1402 = vmax.f32 %v1278, 0.0
    %v1403 = vmax.f32 %v1279, 0.0
    %v1404 = vmax.f32 %v1280, 0.0
    %v1405 = vmax.f32 %v1281, 0.0
    %v1406 = vmax.f32 %v1282, 0.0
    %v1407 = vmax.f32 %v1283, 0.0
    %v1408 = vmax.f32 %v1284, 0.0
    %v1409 = vmax.f32 %v1285, 0.0
    %v1410 = vmax.f32 %v1286, 0.0
    %v1411 = vmax.f32 %v1287, 0.0
    %v1412 = vmax.f32 %v1288, 0.0
    %v1413 = vmax.f32 %v1289, 0.0
    %v1414 = vmax.f32 %v1290, 0.0
    %vm1415 = vcmask 261120
    %1416 = vst.msk [vmem:[#allocation2] sm:$0xff] %vm1415, %v1291
    %1417 = vst.msk [vmem:[#allocation2 + $0x8] sm:$0xff] %vm1415, %v1292
    %1418 = vst.msk [vmem:[#allocation2 + $0x10] sm:$0xff] %vm1415, %v1293
    %1419 = vst.msk [vmem:[#allocation2 + $0x18] sm:$0xff] %vm1415, %v1294
    %1420 = vst.msk [vmem:[#allocation2 + $0x20] sm:$0xff] %vm1415, %v1295
    %1421 = vst.msk [vmem:[#allocation2 + $0x28] sm:$0xff] %vm1415, %v1296
    %1422 = vst.msk [vmem:[#allocation2 + $0x30] sm:$0xff] %vm1415, %v1297
    %1423 = vst.msk [vmem:[#allocation2 + $0x38] sm:$0xff] %vm1415, %v1298
    %1424 = vst.msk [vmem:[#allocation2 + $0x40] sm:$0xff] %vm1415, %v1299
    %1425 = vst.msk [vmem:[#allocation2 + $0x48] sm:$0xff] %vm1415, %v1300
    %1426 = vst.msk [vmem:[#allocation2 + $0x50] sm:$0xff] %vm1415, %v1301
    %1427 = vst.msk [vmem:[#allocation2 + $0x58] sm:$0xff] %vm1415, %v1302
    %1428 = vst.msk [vmem:[#allocation2 + $0x60] sm:$0xff] %vm1415, %v1303
    %1429 = vst.msk [vmem:[#allocation2 + $0x68] sm:$0xff] %vm1415, %v1304
    %1430 = vst.msk [vmem:[#allocation2 + $0x70] sm:$0xff] %vm1415, %v1305
    %1431 = vst.msk [vmem:[#allocation2 + $0x78] sm:$0xff] %vm1415, %v1306
    %1432 = vst.msk [vmem:[#allocation2 + $0x80] sm:$0xff] %vm1415, %v1307
    %1433 = vst.msk [vmem:[#allocation2 + $0x88] sm:$0xff] %vm1415, %v1308
    %1434 = vst.msk [vmem:[#allocation2 + $0x90] sm:$0xff] %vm1415, %v1309
    %1435 = vst.msk [vmem:[#allocation2 + $0x98] sm:$0xff] %vm1415, %v1310
    %1436 = vst.msk [vmem:[#allocation2 + $0xa0] sm:$0xff] %vm1415, %v1311
    %1437 = vst.msk [vmem:[#allocation2 + $0xa8] sm:$0xff] %vm1415, %v1312
    %1438 = vst.msk [vmem:[#allocation2 + $0xb0] sm:$0xff] %vm1415, %v1313
    %1439 = vst.msk [vmem:[#allocation2 + $0xb8] sm:$0xff] %vm1415, %v1314
    %1440 = vst.msk [vmem:[#allocation2 + $0xc0] sm:$0xff] %vm1415, %v1315
    %1441 = vst.msk [vmem:[#allocation2 + $0xc8] sm:$0xff] %vm1415, %v1316
    %1442 = vst.msk [vmem:[#allocation2 + $0xd0] sm:$0xff] %vm1415, %v1317
    %1443 = vst.msk [vmem:[#allocation2 + $0xd8] sm:$0xff] %vm1415, %v1318
    %1444 = vst.msk [vmem:[#allocation2 + $0xe0] sm:$0xff] %vm1415, %v1319
    %1445 = vst.msk [vmem:[#allocation2 + $0xe8] sm:$0xff] %vm1415, %v1320
    %1446 = vst.msk [vmem:[#allocation2 + $0xf0] sm:$0xff] %vm1415, %v1321
    %1447 = vst.msk [vmem:[#allocation2 + $0xf8] sm:$0xff] %vm1415, %v1322
    %1448 = vst.msk [vmem:[#allocation2 + $0x100] sm:$0xff] %vm1415, %v1323
    %1449 = vst.msk [vmem:[#allocation2 + $0x108] sm:$0xff] %vm1415, %v1324
    %1450 = vst.msk [vmem:[#allocation2 + $0x110] sm:$0xff] %vm1415, %v1325
    %1451 = vst.msk [vmem:[#allocation2 + $0x118] sm:$0xff] %vm1415, %v1326
    %1452 = vst.msk [vmem:[#allocation2 + $0x120] sm:$0xff] %vm1415, %v1327
    %1453 = vst.msk [vmem:[#allocation2 + $0x128] sm:$0xff] %vm1415, %v1328
    %1454 = vst.msk [vmem:[#allocation2 + $0x130] sm:$0xff] %vm1415, %v1329
    %1455 = vst.msk [vmem:[#allocation2 + $0x138] sm:$0xff] %vm1415, %v1330
    %1456 = vst.msk [vmem:[#allocation2 + $0x140] sm:$0xff] %vm1415, %v1331
    %1457 = vst.msk [vmem:[#allocation2 + $0x148] sm:$0xff] %vm1415, %v1332
    %1458 = vst.msk [vmem:[#allocation2 + $0x150] sm:$0xff] %vm1415, %v1333
    %1459 = vst.msk [vmem:[#allocation2 + $0x158] sm:$0xff] %vm1415, %v1334
    %1460 = vst.msk [vmem:[#allocation2 + $0x160] sm:$0xff] %vm1415, %v1335
    %1461 = vst.msk [vmem:[#allocation2 + $0x168] sm:$0xff] %vm1415, %v1336
    %1462 = vst.msk [vmem:[#allocation2 + $0x170] sm:$0xff] %vm1415, %v1337
    %1463 = vst.msk [vmem:[#allocation2 + $0x178] sm:$0xff] %vm1415, %v1338
    %1464 = vst.msk [vmem:[#allocation2 + $0x180] sm:$0xff] %vm1415, %v1339
    %1465 = vst.msk [vmem:[#allocation2 + $0x188] sm:$0xff] %vm1415, %v1340
    %1466 = vst.msk [vmem:[#allocation2 + $0x190] sm:$0xff] %vm1415, %v1341
    %1467 = vst.msk [vmem:[#allocation2 + $0x198] sm:$0xff] %vm1415, %v1342
    %1468 = vst.msk [vmem:[#allocation2 + $0x1a0] sm:$0xff] %vm1415, %v1343
    %1469 = vst.msk [vmem:[#allocation2 + $0x1a8] sm:$0xff] %vm1415, %v1344
    %1470 = vst.msk [vmem:[#allocation2 + $0x1b0] sm:$0xff] %vm1415, %v1345
    %1471 = vst.msk [vmem:[#allocation2 + $0x1b8] sm:$0xff] %vm1415, %v1346
    %1472 = vst.msk [vmem:[#allocation2 + $0x1c0] sm:$0xff] %vm1415, %v1347
    %1473 = vst.msk [vmem:[#allocation2 + $0x1c8] sm:$0xff] %vm1415, %v1348
    %1474 = vst.msk [vmem:[#allocation2 + $0x1d0] sm:$0xff] %vm1415, %v1349
    %1475 = vst.msk [vmem:[#allocation2 + $0x1d8] sm:$0xff] %vm1415, %v1350
    %1476 = vst.msk [vmem:[#allocation2 + $0x1e0] sm:$0xff] %vm1415, %v1351
    %1477 = vst.msk [vmem:[#allocation2 + $0x1e8] sm:$0xff] %vm1415, %v1352
    %1478 = vst.msk [vmem:[#allocation2 + $0x1f0] sm:$0xff] %vm1415, %v1353
    %1479 = vst.msk [vmem:[#allocation2 + $0x1f8] sm:$0xff] %vm1415, %v1354
    %1480 = vst.msk [vmem:[#allocation2 + $0x200] sm:$0xff] %vm1415, %v1355
    %1481 = vst.msk [vmem:[#allocation2 + $0x208] sm:$0xff] %vm1415, %v1356
    %1482 = vst.msk [vmem:[#allocation2 + $0x210] sm:$0xff] %vm1415, %v1357
    %1483 = vst.msk [vmem:[#allocation2 + $0x218] sm:$0xff] %vm1415, %v1358
    %1484 = vst.msk [vmem:[#allocation2 + $0x220] sm:$0xff] %vm1415, %v1359
    %1485 = vst.msk [vmem:[#allocation2 + $0x228] sm:$0xff] %vm1415, %v1360
    %1486 = vst.msk [vmem:[#allocation2 + $0x230] sm:$0xff] %vm1415, %v1361
    %1487 = vst.msk [vmem:[#allocation2 + $0x238] sm:$0xff] %vm1415, %v1362
    %1488 = vst.msk [vmem:[#allocation2 + $0x240] sm:$0xff] %vm1415, %v1363
    %1489 = vst.msk [vmem:[#allocation2 + $0x248] sm:$0xff] %vm1415, %v1364
    %1490 = vst.msk [vmem:[#allocation2 + $0x250] sm:$0xff] %vm1415, %v1365
    %1491 = vst.msk [vmem:[#allocation2 + $0x258] sm:$0xff] %vm1415, %v1366
    %1492 = vst.msk [vmem:[#allocation2 + $0x260] sm:$0xff] %vm1415, %v1367
    %1493 = vst.msk [vmem:[#allocation2 + $0x268] sm:$0xff] %vm1415, %v1368
    %1494 = vst.msk [vmem:[#allocation2 + $0x270] sm:$0xff] %vm1415, %v1369
    %1495 = vst.msk [vmem:[#allocation2 + $0x278] sm:$0xff] %vm1415, %v1370
    %1496 = vst.msk [vmem:[#allocation2 + $0x280] sm:$0xff] %vm1415, %v1371
    %1497 = vst.msk [vmem:[#allocation2 + $0x288] sm:$0xff] %vm1415, %v1372
    %1498 = vst.msk [vmem:[#allocation2 + $0x290] sm:$0xff] %vm1415, %v1373
    %1499 = vst.msk [vmem:[#allocation2 + $0x298] sm:$0xff] %vm1415, %v1374
    %1500 = vst.msk [vmem:[#allocation2 + $0x2a0] sm:$0xff] %vm1415, %v1375
    %1501 = vst.msk [vmem:[#allocation2 + $0x2a8] sm:$0xff] %vm1415, %v1376
    %1502 = vst.msk [vmem:[#allocation2 + $0x2b0] sm:$0xff] %vm1415, %v1377
    %1503 = vst.msk [vmem:[#allocation2 + $0x2b8] sm:$0xff] %vm1415, %v1378
    %1504 = vst.msk [vmem:[#allocation2 + $0x2c0] sm:$0xff] %vm1415, %v1379
    %1505 = vst.msk [vmem:[#allocation2 + $0x2c8] sm:$0xff] %vm1415, %v1380
    %1506 = vst.msk [vmem:[#allocation2 + $0x2d0] sm:$0xff] %vm1415, %v1381
    %1507 = vst.msk [vmem:[#allocation2 + $0x2d8] sm:$0xff] %vm1415, %v1382
    %1508 = vst.msk [vmem:[#allocation2 + $0x2e0] sm:$0xff] %vm1415, %v1383
    %1509 = vst.msk [vmem:[#allocation2 + $0x2e8] sm:$0xff] %vm1415, %v1384
    %1510 = vst.msk [vmem:[#allocation2 + $0x2f0] sm:$0xff] %vm1415, %v1385
    %1511 = vst.msk [vmem:[#allocation2 + $0x2f8] sm:$0xff] %vm1415, %v1386
    %1512 = vst.msk [vmem:[#allocation2 + $0x300] sm:$0xff] %vm1415, %v1387
    %1513 = vst.msk [vmem:[#allocation2 + $0x308] sm:$0xff] %vm1415, %v1388
    %1514 = vst.msk [vmem:[#allocation2 + $0x310] sm:$0xff] %vm1415, %v1389
    %1515 = vst.msk [vmem:[#allocation2 + $0x318] sm:$0xff] %vm1415, %v1390
    %1516 = vst.msk [vmem:[#allocation2 + $0x320] sm:$0xff] %vm1415, %v1391
    %1517 = vst.msk [vmem:[#allocation2 + $0x328] sm:$0xff] %vm1415, %v1392
    %1518 = vst.msk [vmem:[#allocation2 + $0x330] sm:$0xff] %vm1415, %v1393
    %1519 = vst.msk [vmem:[#allocation2 + $0x338] sm:$0xff] %vm1415, %v1394
    %1520 = vst.msk [vmem:[#allocation2 + $0x340] sm:$0xff] %vm1415, %v1395
    %1521 = vst.msk [vmem:[#allocation2 + $0x348] sm:$0xff] %vm1415, %v1396
    %1522 = vst.msk [vmem:[#allocation2 + $0x350] sm:$0xff] %vm1415, %v1397
    %1523 = vst.msk [vmem:[#allocation2 + $0x358] sm:$0xff] %vm1415, %v1398
    %1524 = vst.msk [vmem:[#allocation2 + $0x360] sm:$0xff] %vm1415, %v1399
    %1525 = vst.msk [vmem:[#allocation2 + $0x368] sm:$0xff] %vm1415, %v1400
    %1526 = vst.msk [vmem:[#allocation2 + $0x370] sm:$0xff] %vm1415, %v1401
    %1527 = vst.msk [vmem:[#allocation2 + $0x378] sm:$0xff] %vm1415, %v1402
    %1528 = vst.msk [vmem:[#allocation2 + $0x380] sm:$0xff] %vm1415, %v1403
    %1529 = vst.msk [vmem:[#allocation2 + $0x388] sm:$0xff] %vm1415, %v1404
    %1530 = vst.msk [vmem:[#allocation2 + $0x390] sm:$0xff] %vm1415, %v1405
    %1531 = vst.msk [vmem:[#allocation2 + $0x398] sm:$0xff] %vm1415, %v1406
    %1532 = vst.msk [vmem:[#allocation2 + $0x3a0] sm:$0xff] %vm1415, %v1407
    %1533 = vst.msk [vmem:[#allocation2 + $0x3a8] sm:$0xff] %vm1415, %v1408
    %1534 = vst.msk [vmem:[#allocation2 + $0x3b0] sm:$0xff] %vm1415, %v1409
    %1535 = vst.msk [vmem:[#allocation2 + $0x3b8] sm:$0xff] %vm1415, %v1410
    %1536 = vst.msk [vmem:[#allocation2 + $0x3c0] sm:$0xff] %vm1415, %v1411
    %1537 = vst.msk [vmem:[#allocation2 + $0x3c8] sm:$0xff] %vm1415, %v1412
    %1538 = vst.msk [vmem:[#allocation2 + $0x3d0] sm:$0xff] %vm1415, %v1413
    %1539 = vst.msk [vmem:[#allocation2 + $0x3d8] sm:$0xff] %vm1415, %v1414
    %v1540 = vld [vmem:[#allocation2] ss:$4 sm:$0xff]
    %s1541 = scalar_lea.vmem [#allocation2], 32
    %v1542 = vld [vmem:[%s1541] ss:$4 sm:$0xff]
    %s1543 = scalar_lea.vmem [#allocation2], 64
    %v1544 = vld [vmem:[%s1543] ss:$4 sm:$0xff]
    %s1545 = scalar_lea.vmem [#allocation2], 96
    %v1546 = vld [vmem:[%s1545] ss:$4 sm:$0xff]
    %s1547 = scalar_lea.vmem [#allocation2], 128
    %v1548 = vld [vmem:[%s1547] ss:$4 sm:$0xff]
    %s1549 = scalar_lea.vmem [#allocation2], 160
    %v1550 = vld [vmem:[%s1549] ss:$4 sm:$0xff]
    %s1551 = scalar_lea.vmem [#allocation2], 192
    %v1552 = vld [vmem:[%s1551] ss:$4 sm:$0xff]
    %s1553 = scalar_lea.vmem [#allocation2], 224
    %v1554 = vld [vmem:[%s1553] ss:$4 sm:$0xff]
    %s1555 = scalar_lea.vmem [#allocation2], 256
    %v1556 = vld [vmem:[%s1555] ss:$4 sm:$0xff]
    %s1557 = scalar_lea.vmem [#allocation2], 288
    %v1558 = vld [vmem:[%s1557] ss:$4 sm:$0xff]
    %s1559 = scalar_lea.vmem [#allocation2], 320
    %v1560 = vld [vmem:[%s1559] ss:$4 sm:$0xff]
    %s1561 = scalar_lea.vmem [#allocation2], 352
    %v1562 = vld [vmem:[%s1561] ss:$4 sm:$0xff]
    %s1563 = scalar_lea.vmem [#allocation2], 384
    %v1564 = vld [vmem:[%s1563] ss:$4 sm:$0xff]
    %s1565 = scalar_lea.vmem [#allocation2], 416
    %v1566 = vld [vmem:[%s1565] ss:$4 sm:$0xff]
    %s1567 = scalar_lea.vmem [#allocation2], 448
    %v1568 = vld [vmem:[%s1567] ss:$4 sm:$0xff]
    %s1569 = scalar_lea.vmem [#allocation2], 480
    %v1570 = vld [vmem:[%s1569] ss:$4 sm:$0xff]
    %s1571 = scalar_lea.vmem [#allocation2], 512
    %v1572 = vld [vmem:[%s1571] ss:$4 sm:$0xff]
    %s1573 = scalar_lea.vmem [#allocation2], 544
    %v1574 = vld [vmem:[%s1573] ss:$4 sm:$0xff]
    %s1575 = scalar_lea.vmem [#allocation2], 576
    %v1576 = vld [vmem:[%s1575] ss:$4 sm:$0xff]
    %s1577 = scalar_lea.vmem [#allocation2], 608
    %v1578 = vld [vmem:[%s1577] ss:$4 sm:$0xff]
    %s1579 = scalar_lea.vmem [#allocation2], 640
    %v1580 = vld [vmem:[%s1579] ss:$4 sm:$0xff]
    %s1581 = scalar_lea.vmem [#allocation2], 672
    %v1582 = vld [vmem:[%s1581] ss:$4 sm:$0xff]
    %s1583 = scalar_lea.vmem [#allocation2], 704
    %v1584 = vld [vmem:[%s1583] ss:$4 sm:$0xff]
    %s1585 = scalar_lea.vmem [#allocation2], 736
    %v1586 = vld [vmem:[%s1585] ss:$4 sm:$0xff]
    %s1587 = scalar_lea.vmem [#allocation2], 768
    %v1588 = vld [vmem:[%s1587] ss:$4 sm:$0xff]
    %s1589 = scalar_lea.vmem [#allocation2], 800
    %v1590 = vld [vmem:[%s1589] ss:$4 sm:$0xff]
    %s1591 = scalar_lea.vmem [#allocation2], 832
    %v1592 = vld [vmem:[%s1591] ss:$4 sm:$0xff]
    %s1593 = scalar_lea.vmem [#allocation2], 864
    %v1594 = vld [vmem:[%s1593] ss:$4 sm:$0xff]
    %s1595 = scalar_lea.vmem [#allocation2], 896
    %v1596 = vld [vmem:[%s1595] ss:$4 sm:$0xff]
    %s1597 = scalar_lea.vmem [#allocation2], 928
    %v1598 = vld [vmem:[%s1597] ss:$4 sm:$0xff]
    %s1599 = scalar_lea.vmem [#allocation2], 960
    %v1600 = vld [vmem:[%s1599] ss:$4 sm:$0xff]
    %s1601 = scalar_lea.vmem [#allocation2], 1
    %v1602 = vld [vmem:[%s1601] ss:$4 sm:$0xff]
    %s1603 = scalar_lea.vmem [#allocation2], 33
    %v1604 = vld [vmem:[%s1603] ss:$4 sm:$0xff]
    %s1605 = scalar_lea.vmem [#allocation2], 65
    %v1606 = vld [vmem:[%s1605] ss:$4 sm:$0xff]
    %s1607 = scalar_lea.vmem [#allocation2], 97
    %v1608 = vld [vmem:[%s1607] ss:$4 sm:$0xff]
    %s1609 = scalar_lea.vmem [#allocation2], 129
    %v1610 = vld [vmem:[%s1609] ss:$4 sm:$0xff]
    %s1611 = scalar_lea.vmem [#allocation2], 161
    %v1612 = vld [vmem:[%s1611] ss:$4 sm:$0xff]
    %s1613 = scalar_lea.vmem [#allocation2], 193
    %v1614 = vld [vmem:[%s1613] ss:$4 sm:$0xff]
    %s1615 = scalar_lea.vmem [#allocation2], 225
    %v1616 = vld [vmem:[%s1615] ss:$4 sm:$0xff]
    %s1617 = scalar_lea.vmem [#allocation2], 257
    %v1618 = vld [vmem:[%s1617] ss:$4 sm:$0xff]
    %s1619 = scalar_lea.vmem [#allocation2], 289
    %v1620 = vld [vmem:[%s1619] ss:$4 sm:$0xff]
    %s1621 = scalar_lea.vmem [#allocation2], 321
    %v1622 = vld [vmem:[%s1621] ss:$4 sm:$0xff]
    %s1623 = scalar_lea.vmem [#allocation2], 353
    %v1624 = vld [vmem:[%s1623] ss:$4 sm:$0xff]
    %s1625 = scalar_lea.vmem [#allocation2], 385
    %v1626 = vld [vmem:[%s1625] ss:$4 sm:$0xff]
    %s1627 = scalar_lea.vmem [#allocation2], 417
    %v1628 = vld [vmem:[%s1627] ss:$4 sm:$0xff]
    %s1629 = scalar_lea.vmem [#allocation2], 449
    %v1630 = vld [vmem:[%s1629] ss:$4 sm:$0xff]
    %s1631 = scalar_lea.vmem [#allocation2], 481
    %v1632 = vld [vmem:[%s1631] ss:$4 sm:$0xff]
    %s1633 = scalar_lea.vmem [#allocation2], 513
    %v1634 = vld [vmem:[%s1633] ss:$4 sm:$0xff]
    %s1635 = scalar_lea.vmem [#allocation2], 545
    %v1636 = vld [vmem:[%s1635] ss:$4 sm:$0xff]
    %s1637 = scalar_lea.vmem [#allocation2], 577
    %v1638 = vld [vmem:[%s1637] ss:$4 sm:$0xff]
    %s1639 = scalar_lea.vmem [#allocation2], 609
    %v1640 = vld [vmem:[%s1639] ss:$4 sm:$0xff]
    %s1641 = scalar_lea.vmem [#allocation2], 641
    %v1642 = vld [vmem:[%s1641] ss:$4 sm:$0xff]
    %s1643 = scalar_lea.vmem [#allocation2], 673
    %v1644 = vld [vmem:[%s1643] ss:$4 sm:$0xff]
    %s1645 = scalar_lea.vmem [#allocation2], 705
    %v1646 = vld [vmem:[%s1645] ss:$4 sm:$0xff]
    %s1647 = scalar_lea.vmem [#allocation2], 737
    %v1648 = vld [vmem:[%s1647] ss:$4 sm:$0xff]
    %s1649 = scalar_lea.vmem [#allocation2], 769
    %v1650 = vld [vmem:[%s1649] ss:$4 sm:$0xff]
    %s1651 = scalar_lea.vmem [#allocation2], 801
    %v1652 = vld [vmem:[%s1651] ss:$4 sm:$0xff]
    %s1653 = scalar_lea.vmem [#allocation2], 833
    %v1654 = vld [vmem:[%s1653] ss:$4 sm:$0xff]
    %s1655 = scalar_lea.vmem [#allocation2], 865
    %v1656 = vld [vmem:[%s1655] ss:$4 sm:$0xff]
    %s1657 = scalar_lea.vmem [#allocation2], 897
    %v1658 = vld [vmem:[%s1657] ss:$4 sm:$0xff]
    %s1659 = scalar_lea.vmem [#allocation2], 929
    %v1660 = vld [vmem:[%s1659] ss:$4 sm:$0xff]
    %s1661 = scalar_lea.vmem [#allocation2], 961
    %v1662 = vld [vmem:[%s1661] ss:$4 sm:$0xff]
    %v1663 = vmax.f32 %v1540, %v1602
    %v1664 = vmax.f32 %v1542, %v1604
    %v1665 = vmax.f32 %v1544, %v1606
    %v1666 = vmax.f32 %v1546, %v1608
    %v1667 = vmax.f32 %v1548, %v1610
    %v1668 = vmax.f32 %v1550, %v1612
    %v1669 = vmax.f32 %v1552, %v1614
    %v1670 = vmax.f32 %v1554, %v1616
    %v1671 = vmax.f32 %v1556, %v1618
    %v1672 = vmax.f32 %v1558, %v1620
    %v1673 = vmax.f32 %v1560, %v1622
    %v1674 = vmax.f32 %v1562, %v1624
    %v1675 = vmax.f32 %v1564, %v1626
    %v1676 = vmax.f32 %v1566, %v1628
    %v1677 = vmax.f32 %v1568, %v1630
    %v1678 = vmax.f32 %v1570, %v1632
    %v1679 = vmax.f32 %v1572, %v1634
    %v1680 = vmax.f32 %v1574, %v1636
    %v1681 = vmax.f32 %v1576, %v1638
    %v1682 = vmax.f32 %v1578, %v1640
    %v1683 = vmax.f32 %v1580, %v1642
    %v1684 = vmax.f32 %v1582, %v1644
    %v1685 = vmax.f32 %v1584, %v1646
    %v1686 = vmax.f32 %v1586, %v1648
    %v1687 = vmax.f32 %v1588, %v1650
    %v1688 = vmax.f32 %v1590, %v1652
    %v1689 = vmax.f32 %v1592, %v1654
    %v1690 = vmax.f32 %v1594, %v1656
    %v1691 = vmax.f32 %v1596, %v1658
    %v1692 = vmax.f32 %v1598, %v1660
    %v1693 = vmax.f32 %v1600, %v1662
    %s1694 = scalar_lea.vmem [#allocation2], 2
    %v1695 = vld [vmem:[%s1694] ss:$4 sm:$0xff]
    %s1696 = scalar_lea.vmem [#allocation2], 34
    %v1697 = vld [vmem:[%s1696] ss:$4 sm:$0xff]
    %s1698 = scalar_lea.vmem [#allocation2], 66
    %v1699 = vld [vmem:[%s1698] ss:$4 sm:$0xff]
    %s1700 = scalar_lea.vmem [#allocation2], 98
    %v1701 = vld [vmem:[%s1700] ss:$4 sm:$0xff]
    %s1702 = scalar_lea.vmem [#allocation2], 130
    %v1703 = vld [vmem:[%s1702] ss:$4 sm:$0xff]
    %s1704 = scalar_lea.vmem [#allocation2], 162
    %v1705 = vld [vmem:[%s1704] ss:$4 sm:$0xff]
    %s1706 = scalar_lea.vmem [#allocation2], 194
    %v1707 = vld [vmem:[%s1706] ss:$4 sm:$0xff]
    %s1708 = scalar_lea.vmem [#allocation2], 226
    %v1709 = vld [vmem:[%s1708] ss:$4 sm:$0xff]
    %s1710 = scalar_lea.vmem [#allocation2], 258
    %v1711 = vld [vmem:[%s1710] ss:$4 sm:$0xff]
    %s1712 = scalar_lea.vmem [#allocation2], 290
    %v1713 = vld [vmem:[%s1712] ss:$4 sm:$0xff]
    %s1714 = scalar_lea.vmem [#allocation2], 322
    %v1715 = vld [vmem:[%s1714] ss:$4 sm:$0xff]
    %s1716 = scalar_lea.vmem [#allocation2], 354
    %v1717 = vld [vmem:[%s1716] ss:$4 sm:$0xff]
    %s1718 = scalar_lea.vmem [#allocation2], 386
    %v1719 = vld [vmem:[%s1718] ss:$4 sm:$0xff]
    %s1720 = scalar_lea.vmem [#allocation2], 418
    %v1721 = vld [vmem:[%s1720] ss:$4 sm:$0xff]
    %s1722 = scalar_lea.vmem [#allocation2], 450
    %v1723 = vld [vmem:[%s1722] ss:$4 sm:$0xff]
    %s1724 = scalar_lea.vmem [#allocation2], 482
    %v1725 = vld [vmem:[%s1724] ss:$4 sm:$0xff]
    %s1726 = scalar_lea.vmem [#allocation2], 514
    %v1727 = vld [vmem:[%s1726] ss:$4 sm:$0xff]
    %s1728 = scalar_lea.vmem [#allocation2], 546
    %v1729 = vld [vmem:[%s1728] ss:$4 sm:$0xff]
    %s1730 = scalar_lea.vmem [#allocation2], 578
    %v1731 = vld [vmem:[%s1730] ss:$4 sm:$0xff]
    %s1732 = scalar_lea.vmem [#allocation2], 610
    %v1733 = vld [vmem:[%s1732] ss:$4 sm:$0xff]
    %s1734 = scalar_lea.vmem [#allocation2], 642
    %v1735 = vld [vmem:[%s1734] ss:$4 sm:$0xff]
    %s1736 = scalar_lea.vmem [#allocation2], 674
    %v1737 = vld [vmem:[%s1736] ss:$4 sm:$0xff]
    %s1738 = scalar_lea.vmem [#allocation2], 706
    %v1739 = vld [vmem:[%s1738] ss:$4 sm:$0xff]
    %s1740 = scalar_lea.vmem [#allocation2], 738
    %v1741 = vld [vmem:[%s1740] ss:$4 sm:$0xff]
    %s1742 = scalar_lea.vmem [#allocation2], 770
    %v1743 = vld [vmem:[%s1742] ss:$4 sm:$0xff]
    %s1744 = scalar_lea.vmem [#allocation2], 802
    %v1745 = vld [vmem:[%s1744] ss:$4 sm:$0xff]
    %s1746 = scalar_lea.vmem [#allocation2], 834
    %v1747 = vld [vmem:[%s1746] ss:$4 sm:$0xff]
    %s1748 = scalar_lea.vmem [#allocation2], 866
    %v1749 = vld [vmem:[%s1748] ss:$4 sm:$0xff]
    %s1750 = scalar_lea.vmem [#allocation2], 898
    %v1751 = vld [vmem:[%s1750] ss:$4 sm:$0xff]
    %s1752 = scalar_lea.vmem [#allocation2], 930
    %v1753 = vld [vmem:[%s1752] ss:$4 sm:$0xff]
    %s1754 = scalar_lea.vmem [#allocation2], 962
    %v1755 = vld [vmem:[%s1754] ss:$4 sm:$0xff]
    %v1756 = vmax.f32 %v1663, %v1695
    %v1757 = vmax.f32 %v1664, %v1697
    %v1758 = vmax.f32 %v1665, %v1699
    %v1759 = vmax.f32 %v1666, %v1701
    %v1760 = vmax.f32 %v1667, %v1703
    %v1761 = vmax.f32 %v1668, %v1705
    %v1762 = vmax.f32 %v1669, %v1707
    %v1763 = vmax.f32 %v1670, %v1709
    %v1764 = vmax.f32 %v1671, %v1711
    %v1765 = vmax.f32 %v1672, %v1713
    %v1766 = vmax.f32 %v1673, %v1715
    %v1767 = vmax.f32 %v1674, %v1717
    %v1768 = vmax.f32 %v1675, %v1719
    %v1769 = vmax.f32 %v1676, %v1721
    %v1770 = vmax.f32 %v1677, %v1723
    %v1771 = vmax.f32 %v1678, %v1725
    %v1772 = vmax.f32 %v1679, %v1727
    %v1773 = vmax.f32 %v1680, %v1729
    %v1774 = vmax.f32 %v1681, %v1731
    %v1775 = vmax.f32 %v1682, %v1733
    %v1776 = vmax.f32 %v1683, %v1735
    %v1777 = vmax.f32 %v1684, %v1737
    %v1778 = vmax.f32 %v1685, %v1739
    %v1779 = vmax.f32 %v1686, %v1741
    %v1780 = vmax.f32 %v1687, %v1743
    %v1781 = vmax.f32 %v1688, %v1745
    %v1782 = vmax.f32 %v1689, %v1747
    %v1783 = vmax.f32 %v1690, %v1749
    %v1784 = vmax.f32 %v1691, %v1751
    %v1785 = vmax.f32 %v1692, %v1753
    %v1786 = vmax.f32 %v1693, %v1755
    %s1787 = scalar_lea.vmem [#allocation2], 3
    %v1788 = vld [vmem:[%s1787] ss:$4 sm:$0xff]
    %s1789 = scalar_lea.vmem [#allocation2], 35
    %v1790 = vld [vmem:[%s1789] ss:$4 sm:$0xff]
    %s1791 = scalar_lea.vmem [#allocation2], 67
    %v1792 = vld [vmem:[%s1791] ss:$4 sm:$0xff]
    %s1793 = scalar_lea.vmem [#allocation2], 99
    %v1794 = vld [vmem:[%s1793] ss:$4 sm:$0xff]
    %s1795 = scalar_lea.vmem [#allocation2], 131
    %v1796 = vld [vmem:[%s1795] ss:$4 sm:$0xff]
    %s1797 = scalar_lea.vmem [#allocation2], 163
    %v1798 = vld [vmem:[%s1797] ss:$4 sm:$0xff]
    %s1799 = scalar_lea.vmem [#allocation2], 195
    %v1800 = vld [vmem:[%s1799] ss:$4 sm:$0xff]
    %s1801 = scalar_lea.vmem [#allocation2], 227
    %v1802 = vld [vmem:[%s1801] ss:$4 sm:$0xff]
    %s1803 = scalar_lea.vmem [#allocation2], 259
    %v1804 = vld [vmem:[%s1803] ss:$4 sm:$0xff]
    %s1805 = scalar_lea.vmem [#allocation2], 291
    %v1806 = vld [vmem:[%s1805] ss:$4 sm:$0xff]
    %s1807 = scalar_lea.vmem [#allocation2], 323
    %v1808 = vld [vmem:[%s1807] ss:$4 sm:$0xff]
    %s1809 = scalar_lea.vmem [#allocation2], 355
    %v1810 = vld [vmem:[%s1809] ss:$4 sm:$0xff]
    %s1811 = scalar_lea.vmem [#allocation2], 387
    %v1812 = vld [vmem:[%s1811] ss:$4 sm:$0xff]
    %s1813 = scalar_lea.vmem [#allocation2], 419
    %v1814 = vld [vmem:[%s1813] ss:$4 sm:$0xff]
    %s1815 = scalar_lea.vmem [#allocation2], 451
    %v1816 = vld [vmem:[%s1815] ss:$4 sm:$0xff]
    %s1817 = scalar_lea.vmem [#allocation2], 483
    %v1818 = vld [vmem:[%s1817] ss:$4 sm:$0xff]
    %s1819 = scalar_lea.vmem [#allocation2], 515
    %v1820 = vld [vmem:[%s1819] ss:$4 sm:$0xff]
    %s1821 = scalar_lea.vmem [#allocation2], 547
    %v1822 = vld [vmem:[%s1821] ss:$4 sm:$0xff]
    %s1823 = scalar_lea.vmem [#allocation2], 579
    %v1824 = vld [vmem:[%s1823] ss:$4 sm:$0xff]
    %s1825 = scalar_lea.vmem [#allocation2], 611
    %v1826 = vld [vmem:[%s1825] ss:$4 sm:$0xff]
    %s1827 = scalar_lea.vmem [#allocation2], 643
    %v1828 = vld [vmem:[%s1827] ss:$4 sm:$0xff]
    %s1829 = scalar_lea.vmem [#allocation2], 675
    %v1830 = vld [vmem:[%s1829] ss:$4 sm:$0xff]
    %s1831 = scalar_lea.vmem [#allocation2], 707
    %v1832 = vld [vmem:[%s1831] ss:$4 sm:$0xff]
    %s1833 = scalar_lea.vmem [#allocation2], 739
    %v1834 = vld [vmem:[%s1833] ss:$4 sm:$0xff]
    %s1835 = scalar_lea.vmem [#allocation2], 771
    %v1836 = vld [vmem:[%s1835] ss:$4 sm:$0xff]
    %s1837 = scalar_lea.vmem [#allocation2], 803
    %v1838 = vld [vmem:[%s1837] ss:$4 sm:$0xff]
    %s1839 = scalar_lea.vmem [#allocation2], 835
    %v1840 = vld [vmem:[%s1839] ss:$4 sm:$0xff]
    %s1841 = scalar_lea.vmem [#allocation2], 867
    %v1842 = vld [vmem:[%s1841] ss:$4 sm:$0xff]
    %s1843 = scalar_lea.vmem [#allocation2], 899
    %v1844 = vld [vmem:[%s1843] ss:$4 sm:$0xff]
    %s1845 = scalar_lea.vmem [#allocation2], 931
    %v1846 = vld [vmem:[%s1845] ss:$4 sm:$0xff]
    %s1847 = scalar_lea.vmem [#allocation2], 963
    %v1848 = vld [vmem:[%s1847] ss:$4 sm:$0xff]
    %v1849 = vmax.f32 %v1756, %v1788
    %v1850 = vmax.f32 %v1757, %v1790
    %v1851 = vmax.f32 %v1758, %v1792
    %v1852 = vmax.f32 %v1759, %v1794
    %v1853 = vmax.f32 %v1760, %v1796
    %v1854 = vmax.f32 %v1761, %v1798
    %v1855 = vmax.f32 %v1762, %v1800
    %v1856 = vmax.f32 %v1763, %v1802
    %v1857 = vmax.f32 %v1764, %v1804
    %v1858 = vmax.f32 %v1765, %v1806
    %v1859 = vmax.f32 %v1766, %v1808
    %v1860 = vmax.f32 %v1767, %v1810
    %v1861 = vmax.f32 %v1768, %v1812
    %v1862 = vmax.f32 %v1769, %v1814
    %v1863 = vmax.f32 %v1770, %v1816
    %v1864 = vmax.f32 %v1771, %v1818
    %v1865 = vmax.f32 %v1772, %v1820
    %v1866 = vmax.f32 %v1773, %v1822
    %v1867 = vmax.f32 %v1774, %v1824
    %v1868 = vmax.f32 %v1775, %v1826
    %v1869 = vmax.f32 %v1776, %v1828
    %v1870 = vmax.f32 %v1777, %v1830
    %v1871 = vmax.f32 %v1778, %v1832
    %v1872 = vmax.f32 %v1779, %v1834
    %v1873 = vmax.f32 %v1780, %v1836
    %v1874 = vmax.f32 %v1781, %v1838
    %v1875 = vmax.f32 %v1782, %v1840
    %v1876 = vmax.f32 %v1783, %v1842
    %v1877 = vmax.f32 %v1784, %v1844
    %v1878 = vmax.f32 %v1785, %v1846
    %v1879 = vmax.f32 %v1786, %v1848
    %1880 = vst.msk [vmem:[#allocation3] sm:$0xff] %vm1415, %v1849
    %1881 = vst.msk [vmem:[#allocation3 + $0x8] sm:$0xff] %vm1415, %v1850
    %1882 = vst.msk [vmem:[#allocation3 + $0x10] sm:$0xff] %vm1415, %v1851
    %1883 = vst.msk [vmem:[#allocation3 + $0x18] sm:$0xff] %vm1415, %v1852
    %1884 = vst.msk [vmem:[#allocation3 + $0x20] sm:$0xff] %vm1415, %v1853
    %1885 = vst.msk [vmem:[#allocation3 + $0x28] sm:$0xff] %vm1415, %v1854
    %1886 = vst.msk [vmem:[#allocation3 + $0x30] sm:$0xff] %vm1415, %v1855
    %1887 = vst.msk [vmem:[#allocation3 + $0x38] sm:$0xff] %vm1415, %v1856
    %1888 = vst.msk [vmem:[#allocation3 + $0x40] sm:$0xff] %vm1415, %v1857
    %1889 = vst.msk [vmem:[#allocation3 + $0x48] sm:$0xff] %vm1415, %v1858
    %1890 = vst.msk [vmem:[#allocation3 + $0x50] sm:$0xff] %vm1415, %v1859
    %1891 = vst.msk [vmem:[#allocation3 + $0x58] sm:$0xff] %vm1415, %v1860
    %1892 = vst.msk [vmem:[#allocation3 + $0x60] sm:$0xff] %vm1415, %v1861
    %1893 = vst.msk [vmem:[#allocation3 + $0x68] sm:$0xff] %vm1415, %v1862
    %1894 = vst.msk [vmem:[#allocation3 + $0x70] sm:$0xff] %vm1415, %v1863
    %1895 = vst.msk [vmem:[#allocation3 + $0x78] sm:$0xff] %vm1415, %v1864
    %1896 = vst.msk [vmem:[#allocation3 + $0x80] sm:$0xff] %vm1415, %v1865
    %1897 = vst.msk [vmem:[#allocation3 + $0x88] sm:$0xff] %vm1415, %v1866
    %1898 = vst.msk [vmem:[#allocation3 + $0x90] sm:$0xff] %vm1415, %v1867
    %1899 = vst.msk [vmem:[#allocation3 + $0x98] sm:$0xff] %vm1415, %v1868
    %1900 = vst.msk [vmem:[#allocation3 + $0xa0] sm:$0xff] %vm1415, %v1869
    %1901 = vst.msk [vmem:[#allocation3 + $0xa8] sm:$0xff] %vm1415, %v1870
    %1902 = vst.msk [vmem:[#allocation3 + $0xb0] sm:$0xff] %vm1415, %v1871
    %1903 = vst.msk [vmem:[#allocation3 + $0xb8] sm:$0xff] %vm1415, %v1872
    %1904 = vst.msk [vmem:[#allocation3 + $0xc0] sm:$0xff] %vm1415, %v1873
    %1905 = vst.msk [vmem:[#allocation3 + $0xc8] sm:$0xff] %vm1415, %v1874
    %1906 = vst.msk [vmem:[#allocation3 + $0xd0] sm:$0xff] %vm1415, %v1875
    %1907 = vst.msk [vmem:[#allocation3 + $0xd8] sm:$0xff] %vm1415, %v1876
    %1908 = vst.msk [vmem:[#allocation3 + $0xe0] sm:$0xff] %vm1415, %v1877
    %1909 = vst.msk [vmem:[#allocation3 + $0xe8] sm:$0xff] %vm1415, %v1878
    %1910 = vst.msk [vmem:[#allocation3 + $0xf0] sm:$0xff] %vm1415, %v1879
    %v1911 = vld [vmem:[%s6] sm:$0x1]
    %v1913 = vperm.slane %v1911, 0
    %v1915 = vld [vmem:[%s7] sm:$0x1]
    %v1917 = vperm.slane %v1915, 0
    %v1919 = vld [vmem:[%s9] sm:$0x1]
    %v1921 = vperm.slane %v1919, 0
    %v1923 = vld [vmem:[%s10] sm:$0x1]
    %v1925 = vperm.slane %v1923, 0
    %v1927 = vld [vmem:[%s12] sm:$0x1]
    %v1929 = vperm.slane %v1927, 0
    %v1931 = vld [vmem:[%s13] sm:$0x1]
    %v1933 = vperm.slane %v1931, 0
    %v1935 = vld [vmem:[#allocation3] sm:$0xff]
    %v1936 = vld [vmem:[#allocation3 + $0x8] sm:$0xff]
    %v1937 = vld [vmem:[#allocation3 + $0x10] sm:$0xff]
    %v1938 = vld [vmem:[#allocation3 + $0x18] sm:$0xff]
    %v1939 = vld [vmem:[#allocation3 + $0x20] sm:$0xff]
    %v1940 = vld [vmem:[#allocation3 + $0x28] sm:$0xff]
    %v1941 = vld [vmem:[#allocation3 + $0x30] sm:$0xff]
    %v1942 = vld [vmem:[#allocation3 + $0x38] sm:$0xff]
    %v1943 = vld [vmem:[#allocation3 + $0x40] sm:$0xff]
    %v1944 = vld [vmem:[#allocation3 + $0x48] sm:$0xff]
    %v1945 = vld [vmem:[#allocation3 + $0x50] sm:$0xff]
    %v1946 = vld [vmem:[#allocation3 + $0x58] sm:$0xff]
    %v1947 = vld [vmem:[#allocation3 + $0x60] sm:$0xff]
    %v1948 = vld [vmem:[#allocation3 + $0x68] sm:$0xff]
    %v1949 = vld [vmem:[#allocation3 + $0x70] sm:$0xff]
    %v1950 = vld [vmem:[#allocation3 + $0x78] sm:$0x3]
    %v1951 = vpack.c.bf16 %v1936, %v1935
    %v1952 = vpack.c.bf16 %v1938, %v1937
    %v1953 = vpack.c.bf16 %v1940, %v1939
    %v1954 = vpack.c.bf16 %v1942, %v1941
    %v1955 = vpack.c.bf16 %v1944, %v1943
    %v1956 = vpack.c.bf16 %v1946, %v1945
    %v1957 = vpack.c.bf16 %v1948, %v1947
    %v1958 = vpack.c.bf16 %v1950, %v1949
    %v1959 = vld [vmem:[%s5] sm:$0xf]
    %v1960 = vld [vmem:[%s5 + $0x4] sm:$0xf]
    %v1961 = vld [vmem:[%s5 + $0x8] sm:$0xf]
    %v1962 = vld [vmem:[%s5 + $0xc] sm:$0xf]
    %v1963 = vld [vmem:[#allocation3 + $0x1] sm:$0xff]
    %v1964 = vld [vmem:[#allocation3 + $0x9] sm:$0xff]
    %v1965 = vld [vmem:[#allocation3 + $0x11] sm:$0xff]
    %v1966 = vld [vmem:[#allocation3 + $0x19] sm:$0xff]
    %v1967 = vld [vmem:[#allocation3 + $0x21] sm:$0xff]
    %v1968 = vld [vmem:[#allocation3 + $0x29] sm:$0xff]
    %v1969 = vld [vmem:[#allocation3 + $0x31] sm:$0xff]
    %v1970 = vld [vmem:[#allocation3 + $0x39] sm:$0xff]
    %v1971 = vld [vmem:[#allocation3 + $0x41] sm:$0xff]
    %v1972 = vld [vmem:[#allocation3 + $0x49] sm:$0xff]
    %v1973 = vld [vmem:[#allocation3 + $0x51] sm:$0xff]
    %v1974 = vld [vmem:[#allocation3 + $0x59] sm:$0xff]
    %v1975 = vld [vmem:[#allocation3 + $0x61] sm:$0xff]
    %v1976 = vld [vmem:[#allocation3 + $0x69] sm:$0xff]
    %v1977 = vld [vmem:[#allocation3 + $0x71] sm:$0xff]
    %v1978 = vld [vmem:[#allocation3 + $0x79] sm:$0x3]
    %v1979 = vpack.c.bf16 %v1964, %v1963
    %v1980 = vpack.c.bf16 %v1966, %v1965
    %v1981 = vpack.c.bf16 %v1968, %v1967
    %v1982 = vpack.c.bf16 %v1970, %v1969
    %v1983 = vpack.c.bf16 %v1972, %v1971
    %v1984 = vpack.c.bf16 %v1974, %v1973
    %v1985 = vpack.c.bf16 %v1976, %v1975
    %v1986 = vpack.c.bf16 %v1978, %v1977
    %s1987 = scalar_lea.vmem %s5, 16
    %v1988 = vld [vmem:[%s1987] sm:$0xf]
    %v1989 = vld [vmem:[%s1987 + $0x4] sm:$0xf]
    %v1990 = vld [vmem:[%s1987 + $0x8] sm:$0xf]
    %v1991 = vld [vmem:[%s1987 + $0xc] sm:$0xf]
    %v1996 = vunpack.c.l.b16 %v1988
    %v1997 = vunpack.c.l.b16 %v1989
    %v1998 = vunpack.c.l.b16 %v1990
    %v1999 = vunpack.c.l.b16 %v1991
    %v2000 = vpack.c.b16 %v1997, %v1996
    %v2001 = vpack.c.b16 %v1999, %v1998
    %v2005 = vsel %vm1415, %v1979, 0
    %v2008 = vsel %vm1415, %v1980, 0
    %v2011 = vsel %vm1415, %v1981, 0
    %v2014 = vsel %vm1415, %v1982, 0
    %v2017 = vsel %vm1415, %v1983, 0
    %v2020 = vsel %vm1415, %v1984, 0
    %v2023 = vsel %vm1415, %v1985, 0
    %v2026 = vsel %vm1415, %v1986, 0
    %2028 = vmatpush.bf16.msra.mxu0 0
    %2029 = vmatpush.bf16.msra.mxu0 0
    %2030 = vmatpush.bf16.msra.mxu0 0
    %2031 = vmatpush.bf16.msra.mxu0 0
    %2032 = vmatpush.bf16.msra.mxu0 0
    %2033 = vmatpush.bf16.msra.mxu0 0
    %2034 = vmatpush.bf16.msra.mxu0 %v2001
    %2035 = vmatpush.bf16.msra.mxu0 %v2000
    %2036 = vmatmul.bf16.gmra.mxu0 %v2005
    %v2037 = vpop.f32.mrf.mxu0
    %v2038 = vadd.f32 0.0, %v2037
    %v2039 = vpop.f32.mrf.mxu0
    %v2040 = vadd.f32 0.0, %v2039
    %2041 = vmatmul.bf16.gmra.mxu0 %v2008
    %v2042 = vpop.f32.mrf.mxu0
    %v2043 = vadd.f32 0.0, %v2042
    %v2044 = vpop.f32.mrf.mxu0
    %v2045 = vadd.f32 0.0, %v2044
    %2046 = vmatmul.bf16.gmra.mxu0 %v2011
    %v2047 = vpop.f32.mrf.mxu0
    %v2048 = vadd.f32 0.0, %v2047
    %v2049 = vpop.f32.mrf.mxu0
    %v2050 = vadd.f32 0.0, %v2049
    %2051 = vmatmul.bf16.gmra.mxu0 %v2014
    %v2052 = vpop.f32.mrf.mxu0
    %v2053 = vadd.f32 0.0, %v2052
    %v2054 = vpop.f32.mrf.mxu0
    %v2055 = vadd.f32 0.0, %v2054
    %2056 = vmatmul.bf16.gmra.mxu0 %v2017
    %v2057 = vpop.f32.mrf.mxu0
    %v2058 = vadd.f32 0.0, %v2057
    %v2059 = vpop.f32.mrf.mxu0
    %v2060 = vadd.f32 0.0, %v2059
    %2061 = vmatmul.bf16.gmra.mxu0 %v2020
    %v2062 = vpop.f32.mrf.mxu0
    %v2063 = vadd.f32 0.0, %v2062
    %v2064 = vpop.f32.mrf.mxu0
    %v2065 = vadd.f32 0.0, %v2064
    %2066 = vmatmul.bf16.gmra.mxu0 %v2023
    %v2067 = vpop.f32.mrf.mxu0
    %v2068 = vadd.f32 0.0, %v2067
    %v2069 = vpop.f32.mrf.mxu0
    %v2070 = vadd.f32 0.0, %v2069
    %2071 = vmatmul.bf16.gmra.mxu0 %v2026
    %v2072 = vpop.f32.mrf.mxu0
    %v2073 = vadd.f32 0.0, %v2072
    %v2074 = vpop.f32.mrf.mxu0
    %v2075 = vadd.f32 0.0, %v2074
    %2076 = vdwg.mxu0
    %v2081 = vunpack.c.l.b16 %v1959
    %v2082 = vunpack.c.l.b16 %v1960
    %v2083 = vunpack.c.l.b16 %v1961
    %v2084 = vunpack.c.l.b16 %v1962
    %v2085 = vpack.c.b16 %v2082, %v2081
    %v2086 = vpack.c.b16 %v2084, %v2083
    %v2090 = vsel %vm1415, %v1951, 0
    %v2093 = vsel %vm1415, %v1952, 0
    %v2096 = vsel %vm1415, %v1953, 0
    %v2099 = vsel %vm1415, %v1954, 0
    %v2102 = vsel %vm1415, %v1955, 0
    %v2105 = vsel %vm1415, %v1956, 0
    %v2108 = vsel %vm1415, %v1957, 0
    %v2111 = vsel %vm1415, %v1958, 0
    %2113 = vmatpush.bf16.msra.mxu0 0
    %2114 = vmatpush.bf16.msra.mxu0 0
    %2115 = vmatpush.bf16.msra.mxu0 0
    %2116 = vmatpush.bf16.msra.mxu0 0
    %2117 = vmatpush.bf16.msra.mxu0 0
    %2118 = vmatpush.bf16.msra.mxu0 0
    %2119 = vmatpush.bf16.msra.mxu0 %v2086
    %2120 = vmatpush.bf16.msra.mxu0 %v2085
    %2121 = vmatmul.bf16.gmra.mxu0 %v2090
    %v2122 = vpop.f32.mrf.mxu0
    %v2123 = vadd.f32 %v2038, %v2122
    %v2124 = vpop.f32.mrf.mxu0
    %v2125 = vadd.f32 %v2040, %v2124
    %2126 = vmatmul.bf16.gmra.mxu0 %v2093
    %v2127 = vpop.f32.mrf.mxu0
    %v2128 = vadd.f32 %v2043, %v2127
    %v2129 = vpop.f32.mrf.mxu0
    %v2130 = vadd.f32 %v2045, %v2129
    %2131 = vmatmul.bf16.gmra.mxu0 %v2096
    %v2132 = vpop.f32.mrf.mxu0
    %v2133 = vadd.f32 %v2048, %v2132
    %v2134 = vpop.f32.mrf.mxu0
    %v2135 = vadd.f32 %v2050, %v2134
    %2136 = vmatmul.bf16.gmra.mxu0 %v2099
    %v2137 = vpop.f32.mrf.mxu0
    %v2138 = vadd.f32 %v2053, %v2137
    %v2139 = vpop.f32.mrf.mxu0
    %v2140 = vadd.f32 %v2055, %v2139
    %2141 = vmatmul.bf16.gmra.mxu0 %v2102
    %v2142 = vpop.f32.mrf.mxu0
    %v2143 = vadd.f32 %v2058, %v2142
    %v2144 = vpop.f32.mrf.mxu0
    %v2145 = vadd.f32 %v2060, %v2144
    %2146 = vmatmul.bf16.gmra.mxu0 %v2105
    %v2147 = vpop.f32.mrf.mxu0
    %v2148 = vadd.f32 %v2063, %v2147
    %v2149 = vpop.f32.mrf.mxu0
    %v2150 = vadd.f32 %v2065, %v2149
    %2151 = vmatmul.bf16.gmra.mxu0 %v2108
    %v2152 = vpop.f32.mrf.mxu0
    %v2153 = vadd.f32 %v2068, %v2152
    %v2154 = vpop.f32.mrf.mxu0
    %v2155 = vadd.f32 %v2070, %v2154
    %2156 = vmatmul.bf16.gmra.mxu0 %v2111
    %v2157 = vpop.f32.mrf.mxu0
    %v2158 = vadd.f32 %v2073, %v2157
    %v2159 = vpop.f32.mrf.mxu0
    %v2160 = vadd.f32 %v2075, %v2159
    %2161 = vdwg.mxu0
    %v2162 = vld [vmem:[#allocation3 + $0x2] sm:$0xff]
    %v2163 = vld [vmem:[#allocation3 + $0xa] sm:$0xff]
    %v2164 = vld [vmem:[#allocation3 + $0x12] sm:$0xff]
    %v2165 = vld [vmem:[#allocation3 + $0x1a] sm:$0xff]
    %v2166 = vld [vmem:[#allocation3 + $0x22] sm:$0xff]
    %v2167 = vld [vmem:[#allocation3 + $0x2a] sm:$0xff]
    %v2168 = vld [vmem:[#allocation3 + $0x32] sm:$0xff]
    %v2169 = vld [vmem:[#allocation3 + $0x3a] sm:$0xff]
    %v2170 = vld [vmem:[#allocation3 + $0x42] sm:$0xff]
    %v2171 = vld [vmem:[#allocation3 + $0x4a] sm:$0xff]
    %v2172 = vld [vmem:[#allocation3 + $0x52] sm:$0xff]
    %v2173 = vld [vmem:[#allocation3 + $0x5a] sm:$0xff]
    %v2174 = vld [vmem:[#allocation3 + $0x62] sm:$0xff]
    %v2175 = vld [vmem:[#allocation3 + $0x6a] sm:$0xff]
    %v2176 = vld [vmem:[#allocation3 + $0x72] sm:$0xff]
    %v2177 = vld [vmem:[#allocation3 + $0x7a] sm:$0x3]
    %v2178 = vpack.c.bf16 %v2163, %v2162
    %v2179 = vpack.c.bf16 %v2165, %v2164
    %v2180 = vpack.c.bf16 %v2167, %v2166
    %v2181 = vpack.c.bf16 %v2169, %v2168
    %v2182 = vpack.c.bf16 %v2171, %v2170
    %v2183 = vpack.c.bf16 %v2173, %v2172
    %v2184 = vpack.c.bf16 %v2175, %v2174
    %v2185 = vpack.c.bf16 %v2177, %v2176
    %s2186 = scalar_lea.vmem %s5, 32
    %v2187 = vld [vmem:[%s2186] sm:$0xf]
    %v2188 = vld [vmem:[%s2186 + $0x4] sm:$0xf]
    %v2189 = vld [vmem:[%s2186 + $0x8] sm:$0xf]
    %v2190 = vld [vmem:[%s2186 + $0xc] sm:$0xf]
    %v2195 = vunpack.c.l.b16 %v2187
    %v2196 = vunpack.c.l.b16 %v2188
    %v2197 = vunpack.c.l.b16 %v2189
    %v2198 = vunpack.c.l.b16 %v2190
    %v2199 = vpack.c.b16 %v2196, %v2195
    %v2200 = vpack.c.b16 %v2198, %v2197
    %v2204 = vsel %vm1415, %v2178, 0
    %v2207 = vsel %vm1415, %v2179, 0
    %v2210 = vsel %vm1415, %v2180, 0
    %v2213 = vsel %vm1415, %v2181, 0
    %v2216 = vsel %vm1415, %v2182, 0
    %v2219 = vsel %vm1415, %v2183, 0
    %v2222 = vsel %vm1415, %v2184, 0
    %v2225 = vsel %vm1415, %v2185, 0
    %2227 = vmatpush.bf16.msra.mxu0 0
    %2228 = vmatpush.bf16.msra.mxu0 0
    %2229 = vmatpush.bf16.msra.mxu0 0
    %2230 = vmatpush.bf16.msra.mxu0 0
    %2231 = vmatpush.bf16.msra.mxu0 0
    %2232 = vmatpush.bf16.msra.mxu0 0
    %2233 = vmatpush.bf16.msra.mxu0 %v2200
    %2234 = vmatpush.bf16.msra.mxu0 %v2199
    %2235 = vmatmul.bf16.gmra.mxu0 %v2204
    %v2236 = vpop.f32.mrf.mxu0
    %v2237 = vadd.f32 0.0, %v2236
    %v2238 = vpop.f32.mrf.mxu0
    %v2239 = vadd.f32 0.0, %v2238
    %2240 = vmatmul.bf16.gmra.mxu0 %v2207
    %v2241 = vpop.f32.mrf.mxu0
    %v2242 = vadd.f32 0.0, %v2241
    %v2243 = vpop.f32.mrf.mxu0
    %v2244 = vadd.f32 0.0, %v2243
    %2245 = vmatmul.bf16.gmra.mxu0 %v2210
    %v2246 = vpop.f32.mrf.mxu0
    %v2247 = vadd.f32 0.0, %v2246
    %v2248 = vpop.f32.mrf.mxu0
    %v2249 = vadd.f32 0.0, %v2248
    %2250 = vmatmul.bf16.gmra.mxu0 %v2213
    %v2251 = vpop.f32.mrf.mxu0
    %v2252 = vadd.f32 0.0, %v2251
    %v2253 = vpop.f32.mrf.mxu0
    %v2254 = vadd.f32 0.0, %v2253
    %2255 = vmatmul.bf16.gmra.mxu0 %v2216
    %v2256 = vpop.f32.mrf.mxu0
    %v2257 = vadd.f32 0.0, %v2256
    %v2258 = vpop.f32.mrf.mxu0
    %v2259 = vadd.f32 0.0, %v2258
    %2260 = vmatmul.bf16.gmra.mxu0 %v2219
    %v2261 = vpop.f32.mrf.mxu0
    %v2262 = vadd.f32 0.0, %v2261
    %v2263 = vpop.f32.mrf.mxu0
    %v2264 = vadd.f32 0.0, %v2263
    %2265 = vmatmul.bf16.gmra.mxu0 %v2222
    %v2266 = vpop.f32.mrf.mxu0
    %v2267 = vadd.f32 0.0, %v2266
    %v2268 = vpop.f32.mrf.mxu0
    %v2269 = vadd.f32 0.0, %v2268
    %2270 = vmatmul.bf16.gmra.mxu0 %v2225
    %v2271 = vpop.f32.mrf.mxu0
    %v2272 = vadd.f32 0.0, %v2271
    %v2273 = vpop.f32.mrf.mxu0
    %v2274 = vadd.f32 0.0, %v2273
    %2275 = vdwg.mxu0
    %v2276 = vadd.f32 %v2123, %v2237
    %v2277 = vadd.f32 %v2125, %v2239
    %v2278 = vadd.f32 %v2128, %v2242
    %v2279 = vadd.f32 %v2130, %v2244
    %v2280 = vadd.f32 %v2133, %v2247
    %v2281 = vadd.f32 %v2135, %v2249
    %v2282 = vadd.f32 %v2138, %v2252
    %v2283 = vadd.f32 %v2140, %v2254
    %v2284 = vadd.f32 %v2143, %v2257
    %v2285 = vadd.f32 %v2145, %v2259
    %v2286 = vadd.f32 %v2148, %v2262
    %v2287 = vadd.f32 %v2150, %v2264
    %v2288 = vadd.f32 %v2153, %v2267
    %v2289 = vadd.f32 %v2155, %v2269
    %v2290 = vadd.f32 %v2158, %v2272
    %v2291 = vadd.f32 %v2160, %v2274
    %v2292 = vmul.f32 %v2276, %v1913
    %v2293 = vmul.f32 %v2277, %v1913
    %v2294 = vmul.f32 %v2278, %v1913
    %v2295 = vmul.f32 %v2279, %v1913
    %v2296 = vmul.f32 %v2280, %v1913
    %v2297 = vmul.f32 %v2281, %v1913
    %v2298 = vmul.f32 %v2282, %v1913
    %v2299 = vmul.f32 %v2283, %v1913
    %v2300 = vmul.f32 %v2284, %v1913
    %v2301 = vmul.f32 %v2285, %v1913
    %v2302 = vmul.f32 %v2286, %v1913
    %v2303 = vmul.f32 %v2287, %v1913
    %v2304 = vmul.f32 %v2288, %v1913
    %v2305 = vmul.f32 %v2289, %v1913
    %v2306 = vmul.f32 %v2290, %v1913
    %v2307 = vmul.f32 %v2291, %v1913
    %v2308 = vadd.f32 %v2292, %v1917
    %v2309 = vadd.f32 %v2293, %v1917
    %v2310 = vadd.f32 %v2294, %v1917
    %v2311 = vadd.f32 %v2295, %v1917
    %v2312 = vadd.f32 %v2296, %v1917
    %v2313 = vadd.f32 %v2297, %v1917
    %v2314 = vadd.f32 %v2298, %v1917
    %v2315 = vadd.f32 %v2299, %v1917
    %v2316 = vadd.f32 %v2300, %v1917
    %v2317 = vadd.f32 %v2301, %v1917
    %v2318 = vadd.f32 %v2302, %v1917
    %v2319 = vadd.f32 %v2303, %v1917
    %v2320 = vadd.f32 %v2304, %v1917
    %v2321 = vadd.f32 %v2305, %v1917
    %v2322 = vadd.f32 %v2306, %v1917
    %v2323 = vadd.f32 %v2307, %v1917
    %v2324 = vmax.f32 %v2308, 0.0
    %v2325 = vmax.f32 %v2309, 0.0
    %v2326 = vmax.f32 %v2310, 0.0
    %v2327 = vmax.f32 %v2311, 0.0
    %v2328 = vmax.f32 %v2312, 0.0
    %v2329 = vmax.f32 %v2313, 0.0
    %v2330 = vmax.f32 %v2314, 0.0
    %v2331 = vmax.f32 %v2315, 0.0
    %v2332 = vmax.f32 %v2316, 0.0
    %v2333 = vmax.f32 %v2317, 0.0
    %v2334 = vmax.f32 %v2318, 0.0
    %v2335 = vmax.f32 %v2319, 0.0
    %v2336 = vmax.f32 %v2320, 0.0
    %v2337 = vmax.f32 %v2321, 0.0
    %v2338 = vmax.f32 %v2322, 0.0
    %v2339 = vmax.f32 %v2323, 0.0
    %2340 = vst.msk [vmem:[#allocation4] sm:$0xff] %vm1415, %v2324
    %2341 = vst.msk [vmem:[#allocation4 + $0x8] sm:$0xff] %vm1415, %v2325
    %2342 = vst.msk [vmem:[#allocation4 + $0x10] sm:$0xff] %vm1415, %v2326
    %2343 = vst.msk [vmem:[#allocation4 + $0x18] sm:$0xff] %vm1415, %v2327
    %2344 = vst.msk [vmem:[#allocation4 + $0x20] sm:$0xff] %vm1415, %v2328
    %2345 = vst.msk [vmem:[#allocation4 + $0x28] sm:$0xff] %vm1415, %v2329
    %2346 = vst.msk [vmem:[#allocation4 + $0x30] sm:$0xff] %vm1415, %v2330
    %2347 = vst.msk [vmem:[#allocation4 + $0x38] sm:$0xff] %vm1415, %v2331
    %2348 = vst.msk [vmem:[#allocation4 + $0x40] sm:$0xff] %vm1415, %v2332
    %2349 = vst.msk [vmem:[#allocation4 + $0x48] sm:$0xff] %vm1415, %v2333
    %2350 = vst.msk [vmem:[#allocation4 + $0x50] sm:$0xff] %vm1415, %v2334
    %2351 = vst.msk [vmem:[#allocation4 + $0x58] sm:$0xff] %vm1415, %v2335
    %2352 = vst.msk [vmem:[#allocation4 + $0x60] sm:$0xff] %vm1415, %v2336
    %2353 = vst.msk [vmem:[#allocation4 + $0x68] sm:$0xff] %vm1415, %v2337
    %2354 = vst.msk [vmem:[#allocation4 + $0x70] sm:$0xff] %vm1415, %v2338
    %vm2355 = vcmask 254976
    %2356 = vst.msk [vmem:[#allocation4 + $0x78] sm:$0x3] %vm2355, %v2339
    %v2357 = vld [vmem:[#allocation4] ss:$4 sm:$0xff]
    %s2358 = scalar_lea.vmem [#allocation4], 32
    %v2359 = vld [vmem:[%s2358] ss:$4 sm:$0xff]
    %s2360 = scalar_lea.vmem [#allocation4], 64
    %v2361 = vld [vmem:[%s2360] ss:$4 sm:$0xff]
    %s2362 = scalar_lea.vmem [#allocation4], 96
    %v2363 = vld [vmem:[%s2362] ss:$4 sm:$0x3f]
    %s2364 = scalar_lea.vmem [#allocation4], 1
    %v2365 = vld [vmem:[%s2364] ss:$4 sm:$0xff]
    %s2366 = scalar_lea.vmem [#allocation4], 33
    %v2367 = vld [vmem:[%s2366] ss:$4 sm:$0xff]
    %s2368 = scalar_lea.vmem [#allocation4], 65
    %v2369 = vld [vmem:[%s2368] ss:$4 sm:$0xff]
    %s2370 = scalar_lea.vmem [#allocation4], 97
    %v2371 = vld [vmem:[%s2370] ss:$4 sm:$0x3f]
    %v2372 = vmax.f32 %v2357, %v2365
    %v2373 = vmax.f32 %v2359, %v2367
    %v2374 = vmax.f32 %v2361, %v2369
    %v2375 = vmax.f32 %v2363, %v2371
    %s2376 = scalar_lea.vmem [#allocation4], 2
    %v2377 = vld [vmem:[%s2376] ss:$4 sm:$0xff]
    %s2378 = scalar_lea.vmem [#allocation4], 34
    %v2379 = vld [vmem:[%s2378] ss:$4 sm:$0xff]
    %s2380 = scalar_lea.vmem [#allocation4], 66
    %v2381 = vld [vmem:[%s2380] ss:$4 sm:$0xff]
    %s2382 = scalar_lea.vmem [#allocation4], 98
    %v2383 = vld [vmem:[%s2382] ss:$4 sm:$0x3f]
    %v2384 = vmax.f32 %v2372, %v2377
    %v2385 = vmax.f32 %v2373, %v2379
    %v2386 = vmax.f32 %v2374, %v2381
    %v2387 = vmax.f32 %v2375, %v2383
    %s2388 = scalar_lea.vmem [#allocation4], 3
    %v2389 = vld [vmem:[%s2388] ss:$4 sm:$0xff]
    %s2390 = scalar_lea.vmem [#allocation4], 35
    %v2391 = vld [vmem:[%s2390] ss:$4 sm:$0xff]
    %s2392 = scalar_lea.vmem [#allocation4], 67
    %v2393 = vld [vmem:[%s2392] ss:$4 sm:$0xff]
    %s2394 = scalar_lea.vmem [#allocation4], 99
    %v2395 = vld [vmem:[%s2394] ss:$4 sm:$0x3f]
    %v2396 = vmax.f32 %v2384, %v2389
    %v2397 = vmax.f32 %v2385, %v2391
    %v2398 = vmax.f32 %v2386, %v2393
    %v2399 = vmax.f32 %v2387, %v2395
    %2400 = vst.msk [vmem:[#allocation5] sm:$0xff] %vm1415, %v2396
    %2401 = vst.msk [vmem:[#allocation5 + $0x8] sm:$0xff] %vm1415, %v2397
    %2402 = vst.msk [vmem:[#allocation5 + $0x10] sm:$0xff] %vm1415, %v2398
    %vm2403 = vcmask 259072
    %2404 = vst.msk [vmem:[#allocation5 + $0x18] sm:$0x3f] %vm2403, %v2399
    %v2405 = vld [vmem:[#allocation5] sm:$0xff]
    %v2406 = vld [vmem:[#allocation5 + $0x8] sm:$0xff]
    %v2407 = vld [vmem:[#allocation5 + $0x10] sm:$0xff]
    %v2408 = vld [vmem:[#allocation5 + $0x18] sm:$0xf]
    %v2409 = vpack.c.bf16 %v2406, %v2405
    %v2410 = vpack.c.bf16 %v2408, %v2407
    %v2411 = vld [vmem:[%s8] sm:$0xf]
    %v2412 = vld [vmem:[%s8 + $0x4] sm:$0xf]
    %v2413 = vld [vmem:[%s8 + $0x8] sm:$0xf]
    %v2414 = vld [vmem:[%s8 + $0xc] sm:$0xf]
    %v2415 = vld [vmem:[#allocation5 + $0x1] sm:$0xff]
    %v2416 = vld [vmem:[#allocation5 + $0x9] sm:$0xff]
    %v2417 = vld [vmem:[#allocation5 + $0x11] sm:$0xff]
    %v2418 = vld [vmem:[#allocation5 + $0x19] sm:$0xf]
    %v2419 = vpack.c.bf16 %v2416, %v2415
    %v2420 = vpack.c.bf16 %v2418, %v2417
    %s2421 = scalar_lea.vmem %s8, 16
    %v2422 = vld [vmem:[%s2421] sm:$0xf]
    %v2423 = vld [vmem:[%s2421 + $0x4] sm:$0xf]
    %v2424 = vld [vmem:[%s2421 + $0x8] sm:$0xf]
    %v2425 = vld [vmem:[%s2421 + $0xc] sm:$0xf]
    %v2430 = vunpack.c.l.b16 %v2422
    %v2431 = vunpack.c.l.b16 %v2423
    %v2432 = vunpack.c.l.b16 %v2424
    %v2433 = vunpack.c.l.b16 %v2425
    %v2434 = vpack.c.b16 %v2431, %v2430
    %v2435 = vpack.c.b16 %v2433, %v2432
    %v2439 = vsel %vm1415, %v2419, 0
    %v2442 = vsel %vm1415, %v2420, 0
    %2444 = vmatpush.bf16.msra.mxu0 0
    %2445 = vmatpush.bf16.msra.mxu0 0
    %2446 = vmatpush.bf16.msra.mxu0 0
    %2447 = vmatpush.bf16.msra.mxu0 0
    %2448 = vmatpush.bf16.msra.mxu0 0
    %2449 = vmatpush.bf16.msra.mxu0 0
    %2450 = vmatpush.bf16.msra.mxu0 %v2435
    %2451 = vmatpush.bf16.msra.mxu0 %v2434
    %2452 = vmatmul.bf16.gmra.mxu0 %v2439
    %v2453 = vpop.f32.mrf.mxu0
    %v2454 = vadd.f32 0.0, %v2453
    %v2455 = vpop.f32.mrf.mxu0
    %v2456 = vadd.f32 0.0, %v2455
    %2457 = vmatmul.bf16.gmra.mxu0 %v2442
    %v2458 = vpop.f32.mrf.mxu0
    %v2459 = vadd.f32 0.0, %v2458
    %v2460 = vpop.f32.mrf.mxu0
    %v2461 = vadd.f32 0.0, %v2460
    %2462 = vdwg.mxu0
    %v2467 = vunpack.c.l.b16 %v2411
    %v2468 = vunpack.c.l.b16 %v2412
    %v2469 = vunpack.c.l.b16 %v2413
    %v2470 = vunpack.c.l.b16 %v2414
    %v2471 = vpack.c.b16 %v2468, %v2467
    %v2472 = vpack.c.b16 %v2470, %v2469
    %v2476 = vsel %vm1415, %v2409, 0
    %v2479 = vsel %vm1415, %v2410, 0
    %2481 = vmatpush.bf16.msra.mxu0 0
    %2482 = vmatpush.bf16.msra.mxu0 0
    %2483 = vmatpush.bf16.msra.mxu0 0
    %2484 = vmatpush.bf16.msra.mxu0 0
    %2485 = vmatpush.bf16.msra.mxu0 0
    %2486 = vmatpush.bf16.msra.mxu0 0
    %2487 = vmatpush.bf16.msra.mxu0 %v2472
    %2488 = vmatpush.bf16.msra.mxu0 %v2471
    %2489 = vmatmul.bf16.gmra.mxu0 %v2476
    %v2490 = vpop.f32.mrf.mxu0
    %v2491 = vadd.f32 %v2454, %v2490
    %v2492 = vpop.f32.mrf.mxu0
    %v2493 = vadd.f32 %v2456, %v2492
    %2494 = vmatmul.bf16.gmra.mxu0 %v2479
    %v2495 = vpop.f32.mrf.mxu0
    %v2496 = vadd.f32 %v2459, %v2495
    %v2497 = vpop.f32.mrf.mxu0
    %v2498 = vadd.f32 %v2461, %v2497
    %2499 = vdwg.mxu0
    %v2500 = vld [vmem:[#allocation5 + $0x2] sm:$0xff]
    %v2501 = vld [vmem:[#allocation5 + $0xa] sm:$0xff]
    %v2502 = vld [vmem:[#allocation5 + $0x12] sm:$0xff]
    %v2503 = vld [vmem:[#allocation5 + $0x1a] sm:$0xf]
    %v2504 = vpack.c.bf16 %v2501, %v2500
    %v2505 = vpack.c.bf16 %v2503, %v2502
    %s2506 = scalar_lea.vmem %s8, 32
    %v2507 = vld [vmem:[%s2506] sm:$0xf]
    %v2508 = vld [vmem:[%s2506 + $0x4] sm:$0xf]
    %v2509 = vld [vmem:[%s2506 + $0x8] sm:$0xf]
    %v2510 = vld [vmem:[%s2506 + $0xc] sm:$0xf]
    %v2515 = vunpack.c.l.b16 %v2507
    %v2516 = vunpack.c.l.b16 %v2508
    %v2517 = vunpack.c.l.b16 %v2509
    %v2518 = vunpack.c.l.b16 %v2510
    %v2519 = vpack.c.b16 %v2516, %v2515
    %v2520 = vpack.c.b16 %v2518, %v2517
    %v2524 = vsel %vm1415, %v2504, 0
    %v2527 = vsel %vm1415, %v2505, 0
    %2529 = vmatpush.bf16.msra.mxu0 0
    %2530 = vmatpush.bf16.msra.mxu0 0
    %2531 = vmatpush.bf16.msra.mxu0 0
    %2532 = vmatpush.bf16.msra.mxu0 0
    %2533 = vmatpush.bf16.msra.mxu0 0
    %2534 = vmatpush.bf16.msra.mxu0 0
    %2535 = vmatpush.bf16.msra.mxu0 %v2520
    %2536 = vmatpush.bf16.msra.mxu0 %v2519
    %2537 = vmatmul.bf16.gmra.mxu0 %v2524
    %v2538 = vpop.f32.mrf.mxu0
    %v2539 = vadd.f32 0.0, %v2538
    %v2540 = vpop.f32.mrf.mxu0
    %v2541 = vadd.f32 0.0, %v2540
    %2542 = vmatmul.bf16.gmra.mxu0 %v2527
    %v2543 = vpop.f32.mrf.mxu0
    %v2544 = vadd.f32 0.0, %v2543
    %v2545 = vpop.f32.mrf.mxu0
    %v2546 = vadd.f32 0.0, %v2545
    %2547 = vdwg.mxu0
    %v2548 = vadd.f32 %v2491, %v2539
    %v2549 = vadd.f32 %v2493, %v2541
    %v2550 = vadd.f32 %v2496, %v2544
    %v2551 = vadd.f32 %v2498, %v2546
    %v2552 = vmul.f32 %v2548, %v1921
    %v2553 = vmul.f32 %v2549, %v1921
    %v2554 = vmul.f32 %v2550, %v1921
    %v2555 = vmul.f32 %v2551, %v1921
    %v2556 = vadd.f32 %v2552, %v1925
    %v2557 = vadd.f32 %v2553, %v1925
    %v2558 = vadd.f32 %v2554, %v1925
    %v2559 = vadd.f32 %v2555, %v1925
    %v2560 = vmax.f32 %v2556, 0.0
    %v2561 = vmax.f32 %v2557, 0.0
    %v2562 = vmax.f32 %v2558, 0.0
    %v2563 = vmax.f32 %v2559, 0.0
    %vm2564 = vcmask 523264
    %2565 = vst.msk [vmem:[#allocation6] sm:$0xff] %vm2564, %v2560
    %2566 = vst.msk [vmem:[#allocation6 + $0x8] sm:$0xff] %vm2564, %v2561
    %2567 = vst.msk [vmem:[#allocation6 + $0x10] sm:$0xff] %vm2564, %v2562
    %vm2568 = vcmask 519168
    %2569 = vst.msk [vmem:[#allocation6 + $0x18] sm:$0xf] %vm2568, %v2563
    %v2570 = vld [vmem:[#allocation6] ss:$4 sm:$0x7f]
    %s2571 = scalar_lea.vmem [#allocation6], 1
    %v2572 = vld [vmem:[%s2571] ss:$4 sm:$0x7f]
    %v2573 = vmax.f32 %v2570, %v2572
    %s2574 = scalar_lea.vmem [#allocation6], 2
    %v2575 = vld [vmem:[%s2574] ss:$4 sm:$0x7f]
    %v2576 = vmax.f32 %v2573, %v2575
    %s2577 = scalar_lea.vmem [#allocation6], 3
    %v2578 = vld [vmem:[%s2577] ss:$4 sm:$0x7f]
    %v2579 = vmax.f32 %v2576, %v2578
    %vm2580 = vcmask 522240
    %2581 = vst.msk [vmem:[#allocation7] sm:$0x7f] %vm2580, %v2579
    %v2582 = vld [vmem:[#allocation7] sm:$0x1f]
    %v2583 = vpack.c.bf16 %v2582, %v2582
    %v2584 = vld [vmem:[%s11] sm:$0xf]
    %v2585 = vld [vmem:[%s11 + $0x4] sm:$0xf]
    %v2586 = vld [vmem:[%s11 + $0x8] sm:$0xf]
    %v2587 = vld [vmem:[%s11 + $0xc] sm:$0xf]
    %v2588 = vld [vmem:[%s11 + $0x10] sm:$0xf]
    %v2589 = vld [vmem:[%s11 + $0x14] sm:$0xf]
    %v2590 = vld [vmem:[%s11 + $0x18] sm:$0xf]
    %v2591 = vld [vmem:[%s11 + $0x1c] sm:$0xf]
    %v2592 = vld [vmem:[#allocation7 + $0x1] sm:$0x1f]
    %v2593 = vpack.c.bf16 %v2592, %v2592
    %s2594 = scalar_lea.vmem %s11, 32
    %v2595 = vld [vmem:[%s2594] sm:$0xf]
    %v2596 = vld [vmem:[%s2594 + $0x4] sm:$0xf]
    %v2597 = vld [vmem:[%s2594 + $0x8] sm:$0xf]
    %v2598 = vld [vmem:[%s2594 + $0xc] sm:$0xf]
    %v2599 = vld [vmem:[%s2594 + $0x10] sm:$0xf]
    %v2600 = vld [vmem:[%s2594 + $0x14] sm:$0xf]
    %v2601 = vld [vmem:[%s2594 + $0x18] sm:$0xf]
    %v2602 = vld [vmem:[%s2594 + $0x1c] sm:$0xf]
    %v2611 = vunpack.c.l.b16 %v2595
    %v2612 = vunpack.c.l.b16 %v2596
    %v2613 = vunpack.c.l.b16 %v2597
    %v2614 = vunpack.c.l.b16 %v2598
    %v2615 = vunpack.c.l.b16 %v2599
    %v2616 = vunpack.c.l.b16 %v2600
    %v2617 = vunpack.c.l.b16 %v2601
    %v2618 = vunpack.c.l.b16 %v2602
    %v2619 = vpack.c.b16 %v2612, %v2611
    %v2620 = vpack.c.b16 %v2614, %v2613
    %v2621 = vpack.c.b16 %v2616, %v2615
    %v2622 = vpack.c.b16 %v2618, %v2617
    %v2628 = vsel %vm2564, %v2593, 0
    %2630 = vmatpush.bf16.msra.mxu0 0
    %2631 = vmatpush.bf16.msra.mxu0 0
    %2632 = vmatpush.bf16.msra.mxu0 0
    %2633 = vmatpush.bf16.msra.mxu0 0
    %2634 = vmatpush.bf16.msra.mxu0 %v2622
    %2635 = vmatpush.bf16.msra.mxu0 %v2621
    %2636 = vmatpush.bf16.msra.mxu0 %v2620
    %2637 = vmatpush.bf16.msra.mxu0 %v2619
    %2638 = vmatmul.bf16.gmra.mxu0 %v2628
    %v2639 = vpop.f32.mrf.mxu0
    %v2640 = vadd.f32 0.0, %v2639
    %v2641 = vpop.f32.mrf.mxu0
    %2642 = vdwg.mxu0
    %v2651 = vunpack.c.l.b16 %v2584
    %v2652 = vunpack.c.l.b16 %v2585
    %v2653 = vunpack.c.l.b16 %v2586
    %v2654 = vunpack.c.l.b16 %v2587
    %v2655 = vunpack.c.l.b16 %v2588
    %v2656 = vunpack.c.l.b16 %v2589
    %v2657 = vunpack.c.l.b16 %v2590
    %v2658 = vunpack.c.l.b16 %v2591
    %v2659 = vpack.c.b16 %v2652, %v2651
    %v2660 = vpack.c.b16 %v2654, %v2653
    %v2661 = vpack.c.b16 %v2656, %v2655
    %v2662 = vpack.c.b16 %v2658, %v2657
    %v2668 = vsel %vm2564, %v2583, 0
    %2670 = vmatpush.bf16.msra.mxu0 0
    %2671 = vmatpush.bf16.msra.mxu0 0
    %2672 = vmatpush.bf16.msra.mxu0 0
    %2673 = vmatpush.bf16.msra.mxu0 0
    %2674 = vmatpush.bf16.msra.mxu0 %v2662
    %2675 = vmatpush.bf16.msra.mxu0 %v2661
    %2676 = vmatpush.bf16.msra.mxu0 %v2660
    %2677 = vmatpush.bf16.msra.mxu0 %v2659
    %2678 = vmatmul.bf16.gmra.mxu0 %v2668
    %v2679 = vpop.f32.mrf.mxu0
    %v2680 = vadd.f32 %v2640, %v2679
    %v2681 = vpop.f32.mrf.mxu0
    %2682 = vdwg.mxu0
    %v2683 = vld [vmem:[#allocation7 + $0x2] sm:$0x1f]
    %v2684 = vpack.c.bf16 %v2683, %v2683
    %s2685 = scalar_lea.vmem %s11, 64
    %v2686 = vld [vmem:[%s2685] sm:$0xf]
    %v2687 = vld [vmem:[%s2685 + $0x4] sm:$0xf]
    %v2688 = vld [vmem:[%s2685 + $0x8] sm:$0xf]
    %v2689 = vld [vmem:[%s2685 + $0xc] sm:$0xf]
    %v2690 = vld [vmem:[%s2685 + $0x10] sm:$0xf]
    %v2691 = vld [vmem:[%s2685 + $0x14] sm:$0xf]
    %v2692 = vld [vmem:[%s2685 + $0x18] sm:$0xf]
    %v2693 = vld [vmem:[%s2685 + $0x1c] sm:$0xf]
    %v2702 = vunpack.c.l.b16 %v2686
    %v2703 = vunpack.c.l.b16 %v2687
    %v2704 = vunpack.c.l.b16 %v2688
    %v2705 = vunpack.c.l.b16 %v2689
    %v2706 = vunpack.c.l.b16 %v2690
    %v2707 = vunpack.c.l.b16 %v2691
    %v2708 = vunpack.c.l.b16 %v2692
    %v2709 = vunpack.c.l.b16 %v2693
    %v2710 = vpack.c.b16 %v2703, %v2702
    %v2711 = vpack.c.b16 %v2705, %v2704
    %v2712 = vpack.c.b16 %v2707, %v2706
    %v2713 = vpack.c.b16 %v2709, %v2708
    %v2719 = vsel %vm2564, %v2684, 0
    %2721 = vmatpush.bf16.msra.mxu0 0
    %2722 = vmatpush.bf16.msra.mxu0 0
    %2723 = vmatpush.bf16.msra.mxu0 0
    %2724 = vmatpush.bf16.msra.mxu0 0
    %2725 = vmatpush.bf16.msra.mxu0 %v2713
    %2726 = vmatpush.bf16.msra.mxu0 %v2712
    %2727 = vmatpush.bf16.msra.mxu0 %v2711
    %2728 = vmatpush.bf16.msra.mxu0 %v2710
    %2729 = vmatmul.bf16.gmra.mxu0 %v2719
    %v2730 = vpop.f32.mrf.mxu0
    %v2731 = vadd.f32 0.0, %v2730
    %v2732 = vpop.f32.mrf.mxu0
    %2733 = vdwg.mxu0
    %v2734 = vadd.f32 %v2680, %v2731
    %v2735 = vmul.f32 %v2734, %v1929
    %v2736 = vadd.f32 %v2735, %v1933
    %v2737 = vmax.f32 %v2736, 0.0
    %vm2738 = vcmask 520192
    %2739 = vst.msk [vmem:[#allocation8] sm:$0x1f] %vm2738, %v2737
    %v2740 = vld [vmem:[#allocation8] ss:$4 sm:$0x1]
    %s2741 = scalar_lea.vmem [#allocation8], 1
    %v2742 = vld [vmem:[%s2741] ss:$4 sm:$0x1]
    %v2743 = vmax.f32 %v2740, %v2742
    %s2744 = scalar_lea.vmem [#allocation8], 2
    %v2745 = vld [vmem:[%s2744] ss:$4 sm:$0x1]
    %v2746 = vmax.f32 %v2743, %v2745
    %s2747 = scalar_lea.vmem [#allocation8], 3
    %v2748 = vld [vmem:[%s2747] ss:$4 sm:$0x1]
    %v2749 = vmax.f32 %v2746, %v2748
    %v2750 = vadd.f32 %v2749, 0.0
    %vm2751 = vcmask 516096
    %2752 = vst.msk [vmem:[#allocation9] sm:$0x1] %vm2751, %v2750
    %v2753 = vld [vmem:[#allocation3 + $0x7c] sm:$0xff]
    %v2754 = vld [vmem:[#allocation3 + $0x84] sm:$0xff]
    %v2755 = vld [vmem:[#allocation3 + $0x8c] sm:$0xff]
    %v2756 = vld [vmem:[#allocation3 + $0x94] sm:$0xff]
    %v2757 = vld [vmem:[#allocation3 + $0x9c] sm:$0xff]
    %v2758 = vld [vmem:[#allocation3 + $0xa4] sm:$0xff]
    %v2759 = vld [vmem:[#allocation3 + $0xac] sm:$0xff]
    %v2760 = vld [vmem:[#allocation3 + $0xb4] sm:$0xff]
    %v2761 = vld [vmem:[#allocation3 + $0xbc] sm:$0xff]
    %v2762 = vld [vmem:[#allocation3 + $0xc4] sm:$0xff]
    %v2763 = vld [vmem:[#allocation3 + $0xcc] sm:$0xff]
    %v2764 = vld [vmem:[#allocation3 + $0xd4] sm:$0xff]
    %v2765 = vld [vmem:[#allocation3 + $0xdc] sm:$0xff]
    %v2766 = vld [vmem:[#allocation3 + $0xe4] sm:$0xff]
    %v2767 = vld [vmem:[#allocation3 + $0xec] sm:$0xff]
    %v2768 = vld [vmem:[#allocation3 + $0xf4] sm:$0x3]
    %v2769 = vpack.c.bf16 %v2754, %v2753
    %v2770 = vpack.c.bf16 %v2756, %v2755
    %v2771 = vpack.c.bf16 %v2758, %v2757
    %v2772 = vpack.c.bf16 %v2760, %v2759
    %v2773 = vpack.c.bf16 %v2762, %v2761
    %v2774 = vpack.c.bf16 %v2764, %v2763
    %v2775 = vpack.c.bf16 %v2766, %v2765
    %v2776 = vpack.c.bf16 %v2768, %v2767
    %v2777 = vld [vmem:[%s5] sm:$0xf]
    %v2778 = vld [vmem:[%s5 + $0x4] sm:$0xf]
    %v2779 = vld [vmem:[%s5 + $0x8] sm:$0xf]
    %v2780 = vld [vmem:[%s5 + $0xc] sm:$0xf]
    %v2781 = vld [vmem:[#allocation3 + $0x7d] sm:$0xff]
    %v2782 = vld [vmem:[#allocation3 + $0x85] sm:$0xff]
    %v2783 = vld [vmem:[#allocation3 + $0x8d] sm:$0xff]
    %v2784 = vld [vmem:[#allocation3 + $0x95] sm:$0xff]
    %v2785 = vld [vmem:[#allocation3 + $0x9d] sm:$0xff]
    %v2786 = vld [vmem:[#allocation3 + $0xa5] sm:$0xff]
    %v2787 = vld [vmem:[#allocation3 + $0xad] sm:$0xff]
    %v2788 = vld [vmem:[#allocation3 + $0xb5] sm:$0xff]
    %v2789 = vld [vmem:[#allocation3 + $0xbd] sm:$0xff]
    %v2790 = vld [vmem:[#allocation3 + $0xc5] sm:$0xff]
    %v2791 = vld [vmem:[#allocation3 + $0xcd] sm:$0xff]
    %v2792 = vld [vmem:[#allocation3 + $0xd5] sm:$0xff]
    %v2793 = vld [vmem:[#allocation3 + $0xdd] sm:$0xff]
    %v2794 = vld [vmem:[#allocation3 + $0xe5] sm:$0xff]
    %v2795 = vld [vmem:[#allocation3 + $0xed] sm:$0xff]
    %v2796 = vld [vmem:[#allocation3 + $0xf5] sm:$0x3]
    %v2797 = vpack.c.bf16 %v2782, %v2781
    %v2798 = vpack.c.bf16 %v2784, %v2783
    %v2799 = vpack.c.bf16 %v2786, %v2785
    %v2800 = vpack.c.bf16 %v2788, %v2787
    %v2801 = vpack.c.bf16 %v2790, %v2789
    %v2802 = vpack.c.bf16 %v2792, %v2791
    %v2803 = vpack.c.bf16 %v2794, %v2793
    %v2804 = vpack.c.bf16 %v2796, %v2795
    %v2805 = vld [vmem:[%s1987] sm:$0xf]
    %v2806 = vld [vmem:[%s1987 + $0x4] sm:$0xf]
    %v2807 = vld [vmem:[%s1987 + $0x8] sm:$0xf]
    %v2808 = vld [vmem:[%s1987 + $0xc] sm:$0xf]
    %v2813 = vunpack.c.l.b16 %v2805
    %v2814 = vunpack.c.l.b16 %v2806
    %v2815 = vunpack.c.l.b16 %v2807
    %v2816 = vunpack.c.l.b16 %v2808
    %v2817 = vpack.c.b16 %v2814, %v2813
    %v2818 = vpack.c.b16 %v2816, %v2815
    %v2822 = vsel %vm1415, %v2797, 0
    %v2825 = vsel %vm1415, %v2798, 0
    %v2828 = vsel %vm1415, %v2799, 0
    %v2831 = vsel %vm1415, %v2800, 0
    %v2834 = vsel %vm1415, %v2801, 0
    %v2837 = vsel %vm1415, %v2802, 0
    %v2840 = vsel %vm1415, %v2803, 0
    %v2843 = vsel %vm1415, %v2804, 0
    %2845 = vmatpush.bf16.msra.mxu0 0
    %2846 = vmatpush.bf16.msra.mxu0 0
    %2847 = vmatpush.bf16.msra.mxu0 0
    %2848 = vmatpush.bf16.msra.mxu0 0
    %2849 = vmatpush.bf16.msra.mxu0 0
    %2850 = vmatpush.bf16.msra.mxu0 0
    %2851 = vmatpush.bf16.msra.mxu0 %v2818
    %2852 = vmatpush.bf16.msra.mxu0 %v2817
    %2853 = vmatmul.bf16.gmra.mxu0 %v2822
    %v2854 = vpop.f32.mrf.mxu0
    %v2855 = vadd.f32 0.0, %v2854
    %v2856 = vpop.f32.mrf.mxu0
    %v2857 = vadd.f32 0.0, %v2856
    %2858 = vmatmul.bf16.gmra.mxu0 %v2825
    %v2859 = vpop.f32.mrf.mxu0
    %v2860 = vadd.f32 0.0, %v2859
    %v2861 = vpop.f32.mrf.mxu0
    %v2862 = vadd.f32 0.0, %v2861
    %2863 = vmatmul.bf16.gmra.mxu0 %v2828
    %v2864 = vpop.f32.mrf.mxu0
    %v2865 = vadd.f32 0.0, %v2864
    %v2866 = vpop.f32.mrf.mxu0
    %v2867 = vadd.f32 0.0, %v2866
    %2868 = vmatmul.bf16.gmra.mxu0 %v2831
    %v2869 = vpop.f32.mrf.mxu0
    %v2870 = vadd.f32 0.0, %v2869
    %v2871 = vpop.f32.mrf.mxu0
    %v2872 = vadd.f32 0.0, %v2871
    %2873 = vmatmul.bf16.gmra.mxu0 %v2834
    %v2874 = vpop.f32.mrf.mxu0
    %v2875 = vadd.f32 0.0, %v2874
    %v2876 = vpop.f32.mrf.mxu0
    %v2877 = vadd.f32 0.0, %v2876
    %2878 = vmatmul.bf16.gmra.mxu0 %v2837
    %v2879 = vpop.f32.mrf.mxu0
    %v2880 = vadd.f32 0.0, %v2879
    %v2881 = vpop.f32.mrf.mxu0
    %v2882 = vadd.f32 0.0, %v2881
    %2883 = vmatmul.bf16.gmra.mxu0 %v2840
    %v2884 = vpop.f32.mrf.mxu0
    %v2885 = vadd.f32 0.0, %v2884
    %v2886 = vpop.f32.mrf.mxu0
    %v2887 = vadd.f32 0.0, %v2886
    %2888 = vmatmul.bf16.gmra.mxu0 %v2843
    %v2889 = vpop.f32.mrf.mxu0
    %v2890 = vadd.f32 0.0, %v2889
    %v2891 = vpop.f32.mrf.mxu0
    %v2892 = vadd.f32 0.0, %v2891
    %2893 = vdwg.mxu0
    %v2898 = vunpack.c.l.b16 %v2777
    %v2899 = vunpack.c.l.b16 %v2778
    %v2900 = vunpack.c.l.b16 %v2779
    %v2901 = vunpack.c.l.b16 %v2780
    %v2902 = vpack.c.b16 %v2899, %v2898
    %v2903 = vpack.c.b16 %v2901, %v2900
    %v2907 = vsel %vm1415, %v2769, 0
    %v2910 = vsel %vm1415, %v2770, 0
    %v2913 = vsel %vm1415, %v2771, 0
    %v2916 = vsel %vm1415, %v2772, 0
    %v2919 = vsel %vm1415, %v2773, 0
    %v2922 = vsel %vm1415, %v2774, 0
    %v2925 = vsel %vm1415, %v2775, 0
    %v2928 = vsel %vm1415, %v2776, 0
    %2930 = vmatpush.bf16.msra.mxu0 0
    %2931 = vmatpush.bf16.msra.mxu0 0
    %2932 = vmatpush.bf16.msra.mxu0 0
    %2933 = vmatpush.bf16.msra.mxu0 0
    %2934 = vmatpush.bf16.msra.mxu0 0
    %2935 = vmatpush.bf16.msra.mxu0 0
    %2936 = vmatpush.bf16.msra.mxu0 %v2903
    %2937 = vmatpush.bf16.msra.mxu0 %v2902
    %2938 = vmatmul.bf16.gmra.mxu0 %v2907
    %v2939 = vpop.f32.mrf.mxu0
    %v2940 = vadd.f32 %v2855, %v2939
    %v2941 = vpop.f32.mrf.mxu0
    %v2942 = vadd.f32 %v2857, %v2941
    %2943 = vmatmul.bf16.gmra.mxu0 %v2910
    %v2944 = vpop.f32.mrf.mxu0
    %v2945 = vadd.f32 %v2860, %v2944
    %v2946 = vpop.f32.mrf.mxu0
    %v2947 = vadd.f32 %v2862, %v2946
    %2948 = vmatmul.bf16.gmra.mxu0 %v2913
    %v2949 = vpop.f32.mrf.mxu0
    %v2950 = vadd.f32 %v2865, %v2949
    %v2951 = vpop.f32.mrf.mxu0
    %v2952 = vadd.f32 %v2867, %v2951
    %2953 = vmatmul.bf16.gmra.mxu0 %v2916
    %v2954 = vpop.f32.mrf.mxu0
    %v2955 = vadd.f32 %v2870, %v2954
    %v2956 = vpop.f32.mrf.mxu0
    %v2957 = vadd.f32 %v2872, %v2956
    %2958 = vmatmul.bf16.gmra.mxu0 %v2919
    %v2959 = vpop.f32.mrf.mxu0
    %v2960 = vadd.f32 %v2875, %v2959
    %v2961 = vpop.f32.mrf.mxu0
    %v2962 = vadd.f32 %v2877, %v2961
    %2963 = vmatmul.bf16.gmra.mxu0 %v2922
    %v2964 = vpop.f32.mrf.mxu0
    %v2965 = vadd.f32 %v2880, %v2964
    %v2966 = vpop.f32.mrf.mxu0
    %v2967 = vadd.f32 %v2882, %v2966
    %2968 = vmatmul.bf16.gmra.mxu0 %v2925
    %v2969 = vpop.f32.mrf.mxu0
    %v2970 = vadd.f32 %v2885, %v2969
    %v2971 = vpop.f32.mrf.mxu0
    %v2972 = vadd.f32 %v2887, %v2971
    %2973 = vmatmul.bf16.gmra.mxu0 %v2928
    %v2974 = vpop.f32.mrf.mxu0
    %v2975 = vadd.f32 %v2890, %v2974
    %v2976 = vpop.f32.mrf.mxu0
    %v2977 = vadd.f32 %v2892, %v2976
    %2978 = vdwg.mxu0
    %v2979 = vld [vmem:[#allocation3 + $0x7e] sm:$0xff]
    %v2980 = vld [vmem:[#allocation3 + $0x86] sm:$0xff]
    %v2981 = vld [vmem:[#allocation3 + $0x8e] sm:$0xff]
    %v2982 = vld [vmem:[#allocation3 + $0x96] sm:$0xff]
    %v2983 = vld [vmem:[#allocation3 + $0x9e] sm:$0xff]
    %v2984 = vld [vmem:[#allocation3 + $0xa6] sm:$0xff]
    %v2985 = vld [vmem:[#allocation3 + $0xae] sm:$0xff]
    %v2986 = vld [vmem:[#allocation3 + $0xb6] sm:$0xff]
    %v2987 = vld [vmem:[#allocation3 + $0xbe] sm:$0xff]
    %v2988 = vld [vmem:[#allocation3 + $0xc6] sm:$0xff]
    %v2989 = vld [vmem:[#allocation3 + $0xce] sm:$0xff]
    %v2990 = vld [vmem:[#allocation3 + $0xd6] sm:$0xff]
    %v2991 = vld [vmem:[#allocation3 + $0xde] sm:$0xff]
    %v2992 = vld [vmem:[#allocation3 + $0xe6] sm:$0xff]
    %v2993 = vld [vmem:[#allocation3 + $0xee] sm:$0xff]
    %v2994 = vld [vmem:[#allocation3 + $0xf6] sm:$0x3]
    %v2995 = vpack.c.bf16 %v2980, %v2979
    %v2996 = vpack.c.bf16 %v2982, %v2981
    %v2997 = vpack.c.bf16 %v2984, %v2983
    %v2998 = vpack.c.bf16 %v2986, %v2985
    %v2999 = vpack.c.bf16 %v2988, %v2987
    %v3000 = vpack.c.bf16 %v2990, %v2989
    %v3001 = vpack.c.bf16 %v2992, %v2991
    %v3002 = vpack.c.bf16 %v2994, %v2993
    %v3003 = vld [vmem:[%s2186] sm:$0xf]
    %v3004 = vld [vmem:[%s2186 + $0x4] sm:$0xf]
    %v3005 = vld [vmem:[%s2186 + $0x8] sm:$0xf]
    %v3006 = vld [vmem:[%s2186 + $0xc] sm:$0xf]
    %v3011 = vunpack.c.l.b16 %v3003
    %v3012 = vunpack.c.l.b16 %v3004
    %v3013 = vunpack.c.l.b16 %v3005
    %v3014 = vunpack.c.l.b16 %v3006
    %v3015 = vpack.c.b16 %v3012, %v3011
    %v3016 = vpack.c.b16 %v3014, %v3013
    %v3020 = vsel %vm1415, %v2995, 0
    %v3023 = vsel %vm1415, %v2996, 0
    %v3026 = vsel %vm1415, %v2997, 0
    %v3029 = vsel %vm1415, %v2998, 0
    %v3032 = vsel %vm1415, %v2999, 0
    %v3035 = vsel %vm1415, %v3000, 0
    %v3038 = vsel %vm1415, %v3001, 0
    %v3041 = vsel %vm1415, %v3002, 0
    %3043 = vmatpush.bf16.msra.mxu0 0
    %3044 = vmatpush.bf16.msra.mxu0 0
    %3045 = vmatpush.bf16.msra.mxu0 0
    %3046 = vmatpush.bf16.msra.mxu0 0
    %3047 = vmatpush.bf16.msra.mxu0 0
    %3048 = vmatpush.bf16.msra.mxu0 0
    %3049 = vmatpush.bf16.msra.mxu0 %v3016
    %3050 = vmatpush.bf16.msra.mxu0 %v3015
    %3051 = vmatmul.bf16.gmra.mxu0 %v3020
    %v3052 = vpop.f32.mrf.mxu0
    %v3053 = vadd.f32 0.0, %v3052
    %v3054 = vpop.f32.mrf.mxu0
    %v3055 = vadd.f32 0.0, %v3054
    %3056 = vmatmul.bf16.gmra.mxu0 %v3023
    %v3057 = vpop.f32.mrf.mxu0
    %v3058 = vadd.f32 0.0, %v3057
    %v3059 = vpop.f32.mrf.mxu0
    %v3060 = vadd.f32 0.0, %v3059
    %3061 = vmatmul.bf16.gmra.mxu0 %v3026
    %v3062 = vpop.f32.mrf.mxu0
    %v3063 = vadd.f32 0.0, %v3062
    %v3064 = vpop.f32.mrf.mxu0
    %v3065 = vadd.f32 0.0, %v3064
    %3066 = vmatmul.bf16.gmra.mxu0 %v3029
    %v3067 = vpop.f32.mrf.mxu0
    %v3068 = vadd.f32 0.0, %v3067
    %v3069 = vpop.f32.mrf.mxu0
    %v3070 = vadd.f32 0.0, %v3069
    %3071 = vmatmul.bf16.gmra.mxu0 %v3032
    %v3072 = vpop.f32.mrf.mxu0
    %v3073 = vadd.f32 0.0, %v3072
    %v3074 = vpop.f32.mrf.mxu0
    %v3075 = vadd.f32 0.0, %v3074
    %3076 = vmatmul.bf16.gmra.mxu0 %v3035
    %v3077 = vpop.f32.mrf.mxu0
    %v3078 = vadd.f32 0.0, %v3077
    %v3079 = vpop.f32.mrf.mxu0
    %v3080 = vadd.f32 0.0, %v3079
    %3081 = vmatmul.bf16.gmra.mxu0 %v3038
    %v3082 = vpop.f32.mrf.mxu0
    %v3083 = vadd.f32 0.0, %v3082
    %v3084 = vpop.f32.mrf.mxu0
    %v3085 = vadd.f32 0.0, %v3084
    %3086 = vmatmul.bf16.gmra.mxu0 %v3041
    %v3087 = vpop.f32.mrf.mxu0
    %v3088 = vadd.f32 0.0, %v3087
    %v3089 = vpop.f32.mrf.mxu0
    %v3090 = vadd.f32 0.0, %v3089
    %3091 = vdwg.mxu0
    %v3092 = vadd.f32 %v2940, %v3053
    %v3093 = vadd.f32 %v2942, %v3055
    %v3094 = vadd.f32 %v2945, %v3058
    %v3095 = vadd.f32 %v2947, %v3060
    %v3096 = vadd.f32 %v2950, %v3063
    %v3097 = vadd.f32 %v2952, %v3065
    %v3098 = vadd.f32 %v2955, %v3068
    %v3099 = vadd.f32 %v2957, %v3070
    %v3100 = vadd.f32 %v2960, %v3073
    %v3101 = vadd.f32 %v2962, %v3075
    %v3102 = vadd.f32 %v2965, %v3078
    %v3103 = vadd.f32 %v2967, %v3080
    %v3104 = vadd.f32 %v2970, %v3083
    %v3105 = vadd.f32 %v2972, %v3085
    %v3106 = vadd.f32 %v2975, %v3088
    %v3107 = vadd.f32 %v2977, %v3090
    %v3108 = vmul.f32 %v3092, %v1913
    %v3109 = vmul.f32 %v3093, %v1913
    %v3110 = vmul.f32 %v3094, %v1913
    %v3111 = vmul.f32 %v3095, %v1913
    %v3112 = vmul.f32 %v3096, %v1913
    %v3113 = vmul.f32 %v3097, %v1913
    %v3114 = vmul.f32 %v3098, %v1913
    %v3115 = vmul.f32 %v3099, %v1913
    %v3116 = vmul.f32 %v3100, %v1913
    %v3117 = vmul.f32 %v3101, %v1913
    %v3118 = vmul.f32 %v3102, %v1913
    %v3119 = vmul.f32 %v3103, %v1913
    %v3120 = vmul.f32 %v3104, %v1913
    %v3121 = vmul.f32 %v3105, %v1913
    %v3122 = vmul.f32 %v3106, %v1913
    %v3123 = vmul.f32 %v3107, %v1913
    %v3124 = vadd.f32 %v3108, %v1917
    %v3125 = vadd.f32 %v3109, %v1917
    %v3126 = vadd.f32 %v3110, %v1917
    %v3127 = vadd.f32 %v3111, %v1917
    %v3128 = vadd.f32 %v3112, %v1917
    %v3129 = vadd.f32 %v3113, %v1917
    %v3130 = vadd.f32 %v3114, %v1917
    %v3131 = vadd.f32 %v3115, %v1917
    %v3132 = vadd.f32 %v3116, %v1917
    %v3133 = vadd.f32 %v3117, %v1917
    %v3134 = vadd.f32 %v3118, %v1917
    %v3135 = vadd.f32 %v3119, %v1917
    %v3136 = vadd.f32 %v3120, %v1917
    %v3137 = vadd.f32 %v3121, %v1917
    %v3138 = vadd.f32 %v3122, %v1917
    %v3139 = vadd.f32 %v3123, %v1917
    %v3140 = vmax.f32 %v3124, 0.0
    %v3141 = vmax.f32 %v3125, 0.0
    %v3142 = vmax.f32 %v3126, 0.0
    %v3143 = vmax.f32 %v3127, 0.0
    %v3144 = vmax.f32 %v3128, 0.0
    %v3145 = vmax.f32 %v3129, 0.0
    %v3146 = vmax.f32 %v3130, 0.0
    %v3147 = vmax.f32 %v3131, 0.0
    %v3148 = vmax.f32 %v3132, 0.0
    %v3149 = vmax.f32 %v3133, 0.0
    %v3150 = vmax.f32 %v3134, 0.0
    %v3151 = vmax.f32 %v3135, 0.0
    %v3152 = vmax.f32 %v3136, 0.0
    %v3153 = vmax.f32 %v3137, 0.0
    %v3154 = vmax.f32 %v3138, 0.0
    %v3155 = vmax.f32 %v3139, 0.0
    %3156 = vst.msk [vmem:[#allocation4] sm:$0xff] %vm1415, %v3140
    %3157 = vst.msk [vmem:[#allocation4 + $0x8] sm:$0xff] %vm1415, %v3141
    %3158 = vst.msk [vmem:[#allocation4 + $0x10] sm:$0xff] %vm1415, %v3142
    %3159 = vst.msk [vmem:[#allocation4 + $0x18] sm:$0xff] %vm1415, %v3143
    %3160 = vst.msk [vmem:[#allocation4 + $0x20] sm:$0xff] %vm1415, %v3144
    %3161 = vst.msk [vmem:[#allocation4 + $0x28] sm:$0xff] %vm1415, %v3145
    %3162 = vst.msk [vmem:[#allocation4 + $0x30] sm:$0xff] %vm1415, %v3146
    %3163 = vst.msk [vmem:[#allocation4 + $0x38] sm:$0xff] %vm1415, %v3147
    %3164 = vst.msk [vmem:[#allocation4 + $0x40] sm:$0xff] %vm1415, %v3148
    %3165 = vst.msk [vmem:[#allocation4 + $0x48] sm:$0xff] %vm1415, %v3149
    %3166 = vst.msk [vmem:[#allocation4 + $0x50] sm:$0xff] %vm1415, %v3150
    %3167 = vst.msk [vmem:[#allocation4 + $0x58] sm:$0xff] %vm1415, %v3151
    %3168 = vst.msk [vmem:[#allocation4 + $0x60] sm:$0xff] %vm1415, %v3152
    %3169 = vst.msk [vmem:[#allocation4 + $0x68] sm:$0xff] %vm1415, %v3153
    %3170 = vst.msk [vmem:[#allocation4 + $0x70] sm:$0xff] %vm1415, %v3154
    %3171 = vst.msk [vmem:[#allocation4 + $0x78] sm:$0x3] %vm2355, %v3155
    %v3172 = vld [vmem:[#allocation4] ss:$4 sm:$0xff]
    %v3173 = vld [vmem:[%s2358] ss:$4 sm:$0xff]
    %v3174 = vld [vmem:[%s2360] ss:$4 sm:$0xff]
    %v3175 = vld [vmem:[%s2362] ss:$4 sm:$0x3f]
    %v3176 = vld [vmem:[%s2364] ss:$4 sm:$0xff]
    %v3177 = vld [vmem:[%s2366] ss:$4 sm:$0xff]
    %v3178 = vld [vmem:[%s2368] ss:$4 sm:$0xff]
    %v3179 = vld [vmem:[%s2370] ss:$4 sm:$0x3f]
    %v3180 = vmax.f32 %v3172, %v3176
    %v3181 = vmax.f32 %v3173, %v3177
    %v3182 = vmax.f32 %v3174, %v3178
    %v3183 = vmax.f32 %v3175, %v3179
    %v3184 = vld [vmem:[%s2376] ss:$4 sm:$0xff]
    %v3185 = vld [vmem:[%s2378] ss:$4 sm:$0xff]
    %v3186 = vld [vmem:[%s2380] ss:$4 sm:$0xff]
    %v3187 = vld [vmem:[%s2382] ss:$4 sm:$0x3f]
    %v3188 = vmax.f32 %v3180, %v3184
    %v3189 = vmax.f32 %v3181, %v3185
    %v3190 = vmax.f32 %v3182, %v3186
    %v3191 = vmax.f32 %v3183, %v3187
    %v3192 = vld [vmem:[%s2388] ss:$4 sm:$0xff]
    %v3193 = vld [vmem:[%s2390] ss:$4 sm:$0xff]
    %v3194 = vld [vmem:[%s2392] ss:$4 sm:$0xff]
    %v3195 = vld [vmem:[%s2394] ss:$4 sm:$0x3f]
    %v3196 = vmax.f32 %v3188, %v3192
    %v3197 = vmax.f32 %v3189, %v3193
    %v3198 = vmax.f32 %v3190, %v3194
    %v3199 = vmax.f32 %v3191, %v3195
    %3200 = vst.msk [vmem:[#allocation5] sm:$0xff] %vm1415, %v3196
    %3201 = vst.msk [vmem:[#allocation5 + $0x8] sm:$0xff] %vm1415, %v3197
    %3202 = vst.msk [vmem:[#allocation5 + $0x10] sm:$0xff] %vm1415, %v3198
    %3203 = vst.msk [vmem:[#allocation5 + $0x18] sm:$0x3f] %vm2403, %v3199
    %v3204 = vld [vmem:[#allocation5] sm:$0xff]
    %v3205 = vld [vmem:[#allocation5 + $0x8] sm:$0xff]
    %v3206 = vld [vmem:[#allocation5 + $0x10] sm:$0xff]
    %v3207 = vld [vmem:[#allocation5 + $0x18] sm:$0xf]
    %v3208 = vpack.c.bf16 %v3205, %v3204
    %v3209 = vpack.c.bf16 %v3207, %v3206
    %v3210 = vld [vmem:[%s8] sm:$0xf]
    %v3211 = vld [vmem:[%s8 + $0x4] sm:$0xf]
    %v3212 = vld [vmem:[%s8 + $0x8] sm:$0xf]
    %v3213 = vld [vmem:[%s8 + $0xc] sm:$0xf]
    %v3214 = vld [vmem:[#allocation5 + $0x1] sm:$0xff]
    %v3215 = vld [vmem:[#allocation5 + $0x9] sm:$0xff]
    %v3216 = vld [vmem:[#allocation5 + $0x11] sm:$0xff]
    %v3217 = vld [vmem:[#allocation5 + $0x19] sm:$0xf]
    %v3218 = vpack.c.bf16 %v3215, %v3214
    %v3219 = vpack.c.bf16 %v3217, %v3216
    %v3220 = vld [vmem:[%s2421] sm:$0xf]
    %v3221 = vld [vmem:[%s2421 + $0x4] sm:$0xf]
    %v3222 = vld [vmem:[%s2421 + $0x8] sm:$0xf]
    %v3223 = vld [vmem:[%s2421 + $0xc] sm:$0xf]
    %v3228 = vunpack.c.l.b16 %v3220
    %v3229 = vunpack.c.l.b16 %v3221
    %v3230 = vunpack.c.l.b16 %v3222
    %v3231 = vunpack.c.l.b16 %v3223
    %v3232 = vpack.c.b16 %v3229, %v3228
    %v3233 = vpack.c.b16 %v3231, %v3230
    %v3237 = vsel %vm1415, %v3218, 0
    %v3240 = vsel %vm1415, %v3219, 0
    %3242 = vmatpush.bf16.msra.mxu0 0
    %3243 = vmatpush.bf16.msra.mxu0 0
    %3244 = vmatpush.bf16.msra.mxu0 0
    %3245 = vmatpush.bf16.msra.mxu0 0
    %3246 = vmatpush.bf16.msra.mxu0 0
    %3247 = vmatpush.bf16.msra.mxu0 0
    %3248 = vmatpush.bf16.msra.mxu0 %v3233
    %3249 = vmatpush.bf16.msra.mxu0 %v3232
    %3250 = vmatmul.bf16.gmra.mxu0 %v3237
    %v3251 = vpop.f32.mrf.mxu0
    %v3252 = vadd.f32 0.0, %v3251
    %v3253 = vpop.f32.mrf.mxu0
    %v3254 = vadd.f32 0.0, %v3253
    %3255 = vmatmul.bf16.gmra.mxu0 %v3240
    %v3256 = vpop.f32.mrf.mxu0
    %v3257 = vadd.f32 0.0, %v3256
    %v3258 = vpop.f32.mrf.mxu0
    %v3259 = vadd.f32 0.0, %v3258
    %3260 = vdwg.mxu0
    %v3265 = vunpack.c.l.b16 %v3210
    %v3266 = vunpack.c.l.b16 %v3211
    %v3267 = vunpack.c.l.b16 %v3212
    %v3268 = vunpack.c.l.b16 %v3213
    %v3269 = vpack.c.b16 %v3266, %v3265
    %v3270 = vpack.c.b16 %v3268, %v3267
    %v3274 = vsel %vm1415, %v3208, 0
    %v3277 = vsel %vm1415, %v3209, 0
    %3279 = vmatpush.bf16.msra.mxu0 0
    %3280 = vmatpush.bf16.msra.mxu0 0
    %3281 = vmatpush.bf16.msra.mxu0 0
    %3282 = vmatpush.bf16.msra.mxu0 0
    %3283 = vmatpush.bf16.msra.mxu0 0
    %3284 = vmatpush.bf16.msra.mxu0 0
    %3285 = vmatpush.bf16.msra.mxu0 %v3270
    %3286 = vmatpush.bf16.msra.mxu0 %v3269
    %3287 = vmatmul.bf16.gmra.mxu0 %v3274
    %v3288 = vpop.f32.mrf.mxu0
    %v3289 = vadd.f32 %v3252, %v3288
    %v3290 = vpop.f32.mrf.mxu0
    %v3291 = vadd.f32 %v3254, %v3290
    %3292 = vmatmul.bf16.gmra.mxu0 %v3277
    %v3293 = vpop.f32.mrf.mxu0
    %v3294 = vadd.f32 %v3257, %v3293
    %v3295 = vpop.f32.mrf.mxu0
    %v3296 = vadd.f32 %v3259, %v3295
    %3297 = vdwg.mxu0
    %v3298 = vld [vmem:[#allocation5 + $0x2] sm:$0xff]
    %v3299 = vld [vmem:[#allocation5 + $0xa] sm:$0xff]
    %v3300 = vld [vmem:[#allocation5 + $0x12] sm:$0xff]
    %v3301 = vld [vmem:[#allocation5 + $0x1a] sm:$0xf]
    %v3302 = vpack.c.bf16 %v3299, %v3298
    %v3303 = vpack.c.bf16 %v3301, %v3300
    %v3304 = vld [vmem:[%s2506] sm:$0xf]
    %v3305 = vld [vmem:[%s2506 + $0x4] sm:$0xf]
    %v3306 = vld [vmem:[%s2506 + $0x8] sm:$0xf]
    %v3307 = vld [vmem:[%s2506 + $0xc] sm:$0xf]
    %v3312 = vunpack.c.l.b16 %v3304
    %v3313 = vunpack.c.l.b16 %v3305
    %v3314 = vunpack.c.l.b16 %v3306
    %v3315 = vunpack.c.l.b16 %v3307
    %v3316 = vpack.c.b16 %v3313, %v3312
    %v3317 = vpack.c.b16 %v3315, %v3314
    %v3321 = vsel %vm1415, %v3302, 0
    %v3324 = vsel %vm1415, %v3303, 0
    %3326 = vmatpush.bf16.msra.mxu0 0
    %3327 = vmatpush.bf16.msra.mxu0 0
    %3328 = vmatpush.bf16.msra.mxu0 0
    %3329 = vmatpush.bf16.msra.mxu0 0
    %3330 = vmatpush.bf16.msra.mxu0 0
    %3331 = vmatpush.bf16.msra.mxu0 0
    %3332 = vmatpush.bf16.msra.mxu0 %v3317
    %3333 = vmatpush.bf16.msra.mxu0 %v3316
    %3334 = vmatmul.bf16.gmra.mxu0 %v3321
    %v3335 = vpop.f32.mrf.mxu0
    %v3336 = vadd.f32 0.0, %v3335
    %v3337 = vpop.f32.mrf.mxu0
    %v3338 = vadd.f32 0.0, %v3337
    %3339 = vmatmul.bf16.gmra.mxu0 %v3324
    %v3340 = vpop.f32.mrf.mxu0
    %v3341 = vadd.f32 0.0, %v3340
    %v3342 = vpop.f32.mrf.mxu0
    %v3343 = vadd.f32 0.0, %v3342
    %3344 = vdwg.mxu0
    %v3345 = vadd.f32 %v3289, %v3336
    %v3346 = vadd.f32 %v3291, %v3338
    %v3347 = vadd.f32 %v3294, %v3341
    %v3348 = vadd.f32 %v3296, %v3343
    %v3349 = vmul.f32 %v3345, %v1921
    %v3350 = vmul.f32 %v3346, %v1921
    %v3351 = vmul.f32 %v3347, %v1921
    %v3352 = vmul.f32 %v3348, %v1921
    %v3353 = vadd.f32 %v3349, %v1925
    %v3354 = vadd.f32 %v3350, %v1925
    %v3355 = vadd.f32 %v3351, %v1925
    %v3356 = vadd.f32 %v3352, %v1925
    %v3357 = vmax.f32 %v3353, 0.0
    %v3358 = vmax.f32 %v3354, 0.0
    %v3359 = vmax.f32 %v3355, 0.0
    %v3360 = vmax.f32 %v3356, 0.0
    %3361 = vst.msk [vmem:[#allocation6] sm:$0xff] %vm2564, %v3357
    %3362 = vst.msk [vmem:[#allocation6 + $0x8] sm:$0xff] %vm2564, %v3358
    %3363 = vst.msk [vmem:[#allocation6 + $0x10] sm:$0xff] %vm2564, %v3359
    %3364 = vst.msk [vmem:[#allocation6 + $0x18] sm:$0xf] %vm2568, %v3360
    %v3365 = vld [vmem:[#allocation6] ss:$4 sm:$0x7f]
    %v3366 = vld [vmem:[%s2571] ss:$4 sm:$0x7f]
    %v3367 = vmax.f32 %v3365, %v3366
    %v3368 = vld [vmem:[%s2574] ss:$4 sm:$0x7f]
    %v3369 = vmax.f32 %v3367, %v3368
    %v3370 = vld [vmem:[%s2577] ss:$4 sm:$0x7f]
    %v3371 = vmax.f32 %v3369, %v3370
    %3372 = vst.msk [vmem:[#allocation7] sm:$0x7f] %vm2580, %v3371
    %v3373 = vld [vmem:[#allocation7] sm:$0x1f]
    %v3374 = vpack.c.bf16 %v3373, %v3373
    %v3375 = vld [vmem:[%s11] sm:$0xf]
    %v3376 = vld [vmem:[%s11 + $0x4] sm:$0xf]
    %v3377 = vld [vmem:[%s11 + $0x8] sm:$0xf]
    %v3378 = vld [vmem:[%s11 + $0xc] sm:$0xf]
    %v3379 = vld [vmem:[%s11 + $0x10] sm:$0xf]
    %v3380 = vld [vmem:[%s11 + $0x14] sm:$0xf]
    %v3381 = vld [vmem:[%s11 + $0x18] sm:$0xf]
    %v3382 = vld [vmem:[%s11 + $0x1c] sm:$0xf]
    %v3383 = vld [vmem:[#allocation7 + $0x1] sm:$0x1f]
    %v3384 = vpack.c.bf16 %v3383, %v3383
    %v3385 = vld [vmem:[%s2594] sm:$0xf]
    %v3386 = vld [vmem:[%s2594 + $0x4] sm:$0xf]
    %v3387 = vld [vmem:[%s2594 + $0x8] sm:$0xf]
    %v3388 = vld [vmem:[%s2594 + $0xc] sm:$0xf]
    %v3389 = vld [vmem:[%s2594 + $0x10] sm:$0xf]
    %v3390 = vld [vmem:[%s2594 + $0x14] sm:$0xf]
    %v3391 = vld [vmem:[%s2594 + $0x18] sm:$0xf]
    %v3392 = vld [vmem:[%s2594 + $0x1c] sm:$0xf]
    %v3401 = vunpack.c.l.b16 %v3385
    %v3402 = vunpack.c.l.b16 %v3386
    %v3403 = vunpack.c.l.b16 %v3387
    %v3404 = vunpack.c.l.b16 %v3388
    %v3405 = vunpack.c.l.b16 %v3389
    %v3406 = vunpack.c.l.b16 %v3390
    %v3407 = vunpack.c.l.b16 %v3391
    %v3408 = vunpack.c.l.b16 %v3392
    %v3409 = vpack.c.b16 %v3402, %v3401
    %v3410 = vpack.c.b16 %v3404, %v3403
    %v3411 = vpack.c.b16 %v3406, %v3405
    %v3412 = vpack.c.b16 %v3408, %v3407
    %v3418 = vsel %vm2564, %v3384, 0
    %3420 = vmatpush.bf16.msra.mxu0 0
    %3421 = vmatpush.bf16.msra.mxu0 0
    %3422 = vmatpush.bf16.msra.mxu0 0
    %3423 = vmatpush.bf16.msra.mxu0 0
    %3424 = vmatpush.bf16.msra.mxu0 %v3412
    %3425 = vmatpush.bf16.msra.mxu0 %v3411
    %3426 = vmatpush.bf16.msra.mxu0 %v3410
    %3427 = vmatpush.bf16.msra.mxu0 %v3409
    %3428 = vmatmul.bf16.gmra.mxu0 %v3418
    %v3429 = vpop.f32.mrf.mxu0
    %v3430 = vadd.f32 0.0, %v3429
    %v3431 = vpop.f32.mrf.mxu0
    %3432 = vdwg.mxu0
    %v3441 = vunpack.c.l.b16 %v3375
    %v3442 = vunpack.c.l.b16 %v3376
    %v3443 = vunpack.c.l.b16 %v3377
    %v3444 = vunpack.c.l.b16 %v3378
    %v3445 = vunpack.c.l.b16 %v3379
    %v3446 = vunpack.c.l.b16 %v3380
    %v3447 = vunpack.c.l.b16 %v3381
    %v3448 = vunpack.c.l.b16 %v3382
    %v3449 = vpack.c.b16 %v3442, %v3441
    %v3450 = vpack.c.b16 %v3444, %v3443
    %v3451 = vpack.c.b16 %v3446, %v3445
    %v3452 = vpack.c.b16 %v3448, %v3447
    %v3458 = vsel %vm2564, %v3374, 0
    %3460 = vmatpush.bf16.msra.mxu0 0
    %3461 = vmatpush.bf16.msra.mxu0 0
    %3462 = vmatpush.bf16.msra.mxu0 0
    %3463 = vmatpush.bf16.msra.mxu0 0
    %3464 = vmatpush.bf16.msra.mxu0 %v3452
    %3465 = vmatpush.bf16.msra.mxu0 %v3451
    %3466 = vmatpush.bf16.msra.mxu0 %v3450
    %3467 = vmatpush.bf16.msra.mxu0 %v3449
    %3468 = vmatmul.bf16.gmra.mxu0 %v3458
    %v3469 = vpop.f32.mrf.mxu0
    %v3470 = vadd.f32 %v3430, %v3469
    %v3471 = vpop.f32.mrf.mxu0
    %3472 = vdwg.mxu0
    %v3473 = vld [vmem:[#allocation7 + $0x2] sm:$0x1f]
    %v3474 = vpack.c.bf16 %v3473, %v3473
    %v3475 = vld [vmem:[%s2685] sm:$0xf]
    %v3476 = vld [vmem:[%s2685 + $0x4] sm:$0xf]
    %v3477 = vld [vmem:[%s2685 + $0x8] sm:$0xf]
    %v3478 = vld [vmem:[%s2685 + $0xc] sm:$0xf]
    %v3479 = vld [vmem:[%s2685 + $0x10] sm:$0xf]
    %v3480 = vld [vmem:[%s2685 + $0x14] sm:$0xf]
    %v3481 = vld [vmem:[%s2685 + $0x18] sm:$0xf]
    %v3482 = vld [vmem:[%s2685 + $0x1c] sm:$0xf]
    %v3491 = vunpack.c.l.b16 %v3475
    %v3492 = vunpack.c.l.b16 %v3476
    %v3493 = vunpack.c.l.b16 %v3477
    %v3494 = vunpack.c.l.b16 %v3478
    %v3495 = vunpack.c.l.b16 %v3479
    %v3496 = vunpack.c.l.b16 %v3480
    %v3497 = vunpack.c.l.b16 %v3481
    %v3498 = vunpack.c.l.b16 %v3482
    %v3499 = vpack.c.b16 %v3492, %v3491
    %v3500 = vpack.c.b16 %v3494, %v3493
    %v3501 = vpack.c.b16 %v3496, %v3495
    %v3502 = vpack.c.b16 %v3498, %v3497
    %v3508 = vsel %vm2564, %v3474, 0
    %3510 = vmatpush.bf16.msra.mxu0 0
    %3511 = vmatpush.bf16.msra.mxu0 0
    %3512 = vmatpush.bf16.msra.mxu0 0
    %3513 = vmatpush.bf16.msra.mxu0 0
    %3514 = vmatpush.bf16.msra.mxu0 %v3502
    %3515 = vmatpush.bf16.msra.mxu0 %v3501
    %3516 = vmatpush.bf16.msra.mxu0 %v3500
    %3517 = vmatpush.bf16.msra.mxu0 %v3499
    %3518 = vmatmul.bf16.gmra.mxu0 %v3508
    %v3519 = vpop.f32.mrf.mxu0
    %v3520 = vadd.f32 0.0, %v3519
    %v3521 = vpop.f32.mrf.mxu0
    %3522 = vdwg.mxu0
    %v3523 = vadd.f32 %v3470, %v3520
    %v3524 = vmul.f32 %v3523, %v1929
    %v3525 = vadd.f32 %v3524, %v1933
    %v3526 = vmax.f32 %v3525, 0.0
    %3527 = vst.msk [vmem:[#allocation8] sm:$0x1f] %vm2738, %v3526
    %v3528 = vld [vmem:[#allocation8] ss:$4 sm:$0x1]
    %v3529 = vld [vmem:[%s2741] ss:$4 sm:$0x1]
    %v3530 = vmax.f32 %v3528, %v3529
    %v3531 = vld [vmem:[%s2744] ss:$4 sm:$0x1]
    %v3532 = vmax.f32 %v3530, %v3531
    %v3533 = vld [vmem:[%s2747] ss:$4 sm:$0x1]
    %v3534 = vmax.f32 %v3532, %v3533
    %v3535 = vadd.f32 %v3534, 0.0
    %3536 = vst.msk [vmem:[#allocation9 + $0x1] sm:$0x1] %vm2751, %v3535
    %v3537 = vld [vmem:[#allocation9] sm:$0x3]
    %v3538 = vpack.c.bf16 %v3537, %v3537
    %v3539 = vld [vmem:[%s14] sm:$0xf]
    %v3540 = vld [vmem:[%s14 + $0x4] sm:$0xf]
    %v3541 = vld [vmem:[%s14 + $0x8] sm:$0xf]
    %v3542 = vld [vmem:[%s14 + $0xc] sm:$0xf]
    %v3543 = vld [vmem:[%s14 + $0x10] sm:$0xf]
    %v3544 = vld [vmem:[%s14 + $0x14] sm:$0xf]
    %v3545 = vld [vmem:[%s14 + $0x18] sm:$0xf]
    %v3546 = vld [vmem:[%s14 + $0x1c] sm:$0xf]
    %v3547 = vld [vmem:[%s15] sm:$0x1]
    %v3549 = vperm.slane %v3547, 0
    %v3559 = vunpack.c.l.b16 %v3539
    %v3560 = vunpack.c.l.b16 %v3540
    %v3561 = vunpack.c.l.b16 %v3541
    %v3562 = vunpack.c.l.b16 %v3542
    %v3563 = vunpack.c.l.b16 %v3543
    %v3564 = vunpack.c.l.b16 %v3544
    %v3565 = vunpack.c.l.b16 %v3545
    %v3566 = vunpack.c.l.b16 %v3546
    %v3567 = vpack.c.b16 %v3560, %v3559
    %v3568 = vpack.c.b16 %v3562, %v3561
    %v3569 = vpack.c.b16 %v3564, %v3563
    %v3570 = vpack.c.b16 %v3566, %v3565
    %v3576 = vsel %vm2564, %v3538, 0
    %3578 = vmatpush.bf16.msra.mxu0 0
    %3579 = vmatpush.bf16.msra.mxu0 0
    %3580 = vmatpush.bf16.msra.mxu0 0
    %3581 = vmatpush.bf16.msra.mxu0 0
    %3582 = vmatpush.bf16.msra.mxu0 %v3570
    %3583 = vmatpush.bf16.msra.mxu0 %v3569
    %3584 = vmatpush.bf16.msra.mxu0 %v3568
    %3585 = vmatpush.bf16.msra.mxu0 %v3567
    %3586 = vmatmul.bf16.gmra.mxu0 %v3576
    %v3587 = vpop.f32.mrf.mxu0
    %v3588 = vadd.f32 %v3549, %v3587
    %v3589 = vpop.f32.mrf.mxu0
    %3590 = vdwg.mxu0
    %vm3591 = vcmask 279552
    %v3592 = vsel %vm3591, %v3588, -inf
    %3593 = vmax.xlane.f32.xlu0 %v3592
    %v3594 = vpop.xlane.xlu0 %3593
    %v3595 = vsub.f32 %v3588, %v3594
    %v3596 = vmul.f32 %v3595, 1.442695
    %v3597 = vpow.pop %v3596
    %v3598 = vsel %vm3591, %v3597, 0.0
    %3599 = vadd.xlane.f32.xlu0 %v3598
    %v3600 = vpop.xlane.xlu0 %3599
    %v3601 = vlog2.pop %v3600
    %v3602 = vmul.f32 %v3601, 0.6931472
    %v3603 = vadd.f32 %v3602, %v3594
    %v3604 = vsub.f32 %v3588, %v3603
    %v3605 = vld [vmem:[%s1] sm:$0x3]
    %v3606 = vsub.f32 %v3604, %v3605
    %v3607 = vmul.f32 %v3606, %v3606
    %v3608 = vsel %vm3591, %v3607, 0.0
    %3609 = vadd.xlane.f32.xlu0 %v3608
    %v3610 = vpop.xlane.xlu0 %3609
    %v3611 = vrot.slane %v3610, 4
    %v3612 = vadd.f32 %v3610, %v3611
    %v3613 = vrot.slane %v3612, 2
    %v3614 = vadd.f32 %v3612, %v3613
    %v3615 = vrot.slane %v3614, 1
    %v3616 = vadd.f32 %v3614, %v3615
    %s3617 = vtos %v3616
    %s3618 = smul.f32 %s3617, 0.014285714
    %s3619 = scalar_lea.smem [#allocation10], 0
    %3620 = sst [smem:[%s3619]] %s3618
    // Predicated region
    $region66: #{full_model_index_forward.1} parent=1 // pred_check
      _
    $region67: #{full_model_index_forward.1} parent=1 // pred_check_branch
      %3622 = sbr.rel (0) target = $region69
    $region68: #{full_model_index_forward.1} parent=1 // pred_region
      %3624 = vsyncadd [#allocation11], 0
      %s3626 = sshll.u32 %s16, 4
      %s3627 = int_to_ptr.hbm [resolvable:$true] %s3626
      %3629 = dma.smem_to_hbm [#allocation10], 16, %s3627, [#allocation11]
    $region69: #{full_model_index_forward.1} parent=1 // pred_fallthru
      _
    // Predicated region
    $region70: #{full_model_index_forward.1} parent=1 // pred_check
      _
    $region71: #{full_model_index_forward.1} parent=1 // pred_check_branch
      %3631 = sbr.rel (0) target = $region73
    $region72: #{full_model_index_forward.1} parent=1 // pred_region
      %3633 = dma.done [#allocation11], 16
    $region73: #{full_model_index_forward.1} parent=1 // pred_fallthru
      _
    %3634 = sfence
    %3635 = vsyncpa [#allocation11], 1

</llo_original>
